<compile_context>
chip_gen: v6e
topology: v6e:2x2x1
jax: 0.10.0
libtpu: 0.0.40
codegen_flags: <defaults>
</compile_context>

<pallas_src>
import functools
import math

import jax
import jax.numpy as jnp
from jax.experimental import pallas as pl
from jax.experimental.pallas import tpu as pltpu


# MXU operand dtype: bf16 operands, f32 accumulation (several x the f32 MXU
# rate on every TPU generation and half the operand traffic).
_MATMUL_DTYPE = jnp.bfloat16
_LN_EPS = 1e-6


def _vmem_limit_bytes():
    # Derive the scoped-VMEM limit from the chip (v5e/v6e: 128 MiB physical,
    # v7x: 64 MiB) with 25% headroom, instead of a fixed constant.
    try:
        return int(pltpu.get_tpu_info().vmem_capacity_bytes * 3 // 4)
    except Exception:
        return 48 * 1024 * 1024


_VMEM_LIMIT_BYTES = _vmem_limit_bytes()


def _compiler_params():
    return pltpu.CompilerParams(
        dimension_semantics=("parallel",),
        vmem_limit_bytes=_VMEM_LIMIT_BYTES,
    )


# ----------------------------------------------------------------------------
# LayerNorm math (torch semantics: unbiased std, eps added to the std)
# ----------------------------------------------------------------------------
def _layer_norm_f32(x, gamma, beta, eps):
    """x: (rows, features) f32; gamma/beta: (1, features) f32.

    NOTE: features == 1 would divide by zero (ddof=1); not a supported config.
    """
    f = x.shape[-1]
    mean = jnp.mean(x, axis=-1, keepdims=True)
    diff = x - mean
    var = jnp.sum(diff * diff, axis=-1, keepdims=True) * (1.0 / (f - 1))
    # Narrow (rows, 1) reciprocal followed by one wide multiply.
    inv = pl.reciprocal(jnp.sqrt(var) + eps, approx=False)
    return diff * (gamma * inv) + beta


# ----------------------------------------------------------------------------
# Fused (add) + (LayerNorm) + matmul (+ activation) kernel, split outputs
# ----------------------------------------------------------------------------
def _make_ln_matmul_kernel(*, has_residual, apply_ln, write_sum, activation,
                           out_splits, eps):
    def kernel(*refs):
        i = 0
        x = refs[i][0].astype(jnp.float32); i += 1
        if has_residual:
            x = x + refs[i][0].astype(jnp.float32); i += 1
        if apply_ln:
            gamma = refs[i][...].astype(jnp.float32); i += 1
            beta = refs[i][...].astype(jnp.float32); i += 1
        w_ref = refs[i]; i += 1
        bias = refs[i][...].astype(jnp.float32); i += 1
        outs = refs[i:]
        o = 0
        if write_sum:
            outs[o][0] = x.astype(outs[o].dtype); o += 1
        y = _layer_norm_f32(x, gamma, beta, eps) if apply_ln else x
        z = jnp.dot(y.astype(_MATMUL_DTYPE), w_ref[...].astype(_MATMUL_DTYPE),
                    preferred_element_type=jnp.float32) + bias
        if activation == "leaky_relu":
            z = jnp.where(z >= 0.0, z, 0.2 * z)
        col = 0
        for width in out_splits:
            outs[o][0] = z[:, col:col + width].astype(outs[o].dtype)
            o += 1
            col += width
    return kernel


def fused_ln_matmul(x, residual, ln, weight, bias, *, out_splits=None,
                    activation=None, apply_ln=True, eps=_LN_EPS):
    """(x [+ residual]) -> [LayerNorm] -> @ weight + bias [-> leaky_relu].

    x/residual: (B, S, D_in); weight: (D_in, out_f) (pre-transposed matmul
    layout); bias: (out_f,).  Returns
        (x + residual, *column_splits)   when residual is not None
        (*column_splits,)                otherwise
    Columns are split in-kernel (e.g. Q and packed KV) so no extra HBM pass.
    """
    B, S, d_in = x.shape
    out_f = weight.shape[1]
    if out_splits is None:
        out_splits = (out_f,)
    assert sum(out_splits) == out_f
    has_residual = residual is not None
    write_sum = has_residual

    row_spec = pl.BlockSpec((1, S, d_in), lambda b: (b, 0, 0))
    const2 = lambda shape: pl.BlockSpec(shape, lambda b: (0, 0))

    inputs = [x]
    in_specs = [row_spec]
    if has_residual:
        inputs.append(residual)
        in_specs.append(row_spec)
    if apply_ln:
        inputs += [ln["a"].reshape(1, d_in), ln["b"].reshape(1, d_in)]
        in_specs += [const2((1, d_in)), const2((1, d_in))]
    inputs += [weight, bias.reshape(1, out_f)]
    in_specs += [const2((d_in, out_f)), const2((1, out_f))]

    out_shapes, out_specs = [], []
    if write_sum:
        out_shapes.append(jax.ShapeDtypeStruct((B, S, d_in), x.dtype))
        out_specs.append(pl.BlockSpec((1, S, d_in), lambda b: (b, 0, 0)))
    for width in out_splits:
        out_shapes.append(jax.ShapeDtypeStruct((B, S, width), x.dtype))
        out_specs.append(pl.BlockSpec((1, S, width), lambda b: (b, 0, 0)))

    itemsize = jnp.dtype(x.dtype).itemsize
    n_row_io = (1 + int(has_residual) + int(write_sum)) * d_in + out_f
    cost = pl.CostEstimate(
        flops=2 * B * S * d_in * out_f + 8 * B * S * d_in,
        transcendentals=0,
        bytes_accessed=(B * S * n_row_io + d_in * out_f + out_f) * itemsize)

    kernel = _make_ln_matmul_kernel(
        has_residual=has_residual, apply_ln=apply_ln, write_sum=write_sum,
        activation=activation, out_splits=tuple(out_splits), eps=float(eps))

    return pl.pallas_call(
        kernel,
        out_shape=tuple(out_shapes),
        grid_spec=pltpu.PrefetchScalarGridSpec(
            num_scalar_prefetch=0, grid=(B,),
            in_specs=in_specs, out_specs=tuple(out_specs)),
        compiler_params=_compiler_params(),
        cost_estimate=cost,
    )(*inputs)


# ----------------------------------------------------------------------------
# Fused position-wise feed-forward: add + LN + W1 + leaky_relu + W2
# ----------------------------------------------------------------------------
def _ffn_kernel(x_ref, r_ref, g_ref, bl_ref, w1_ref, b1_ref, w2_ref, b2_ref,
                s_ref, o_ref, *, eps):
    s = x_ref[0].astype(jnp.float32) + r_ref[0].astype(jnp.float32)
    s_ref[0] = s.astype(s_ref.dtype)
    y = _layer_norm_f32(s, g_ref[...].astype(jnp.float32),
                        bl_ref[...].astype(jnp.float32), eps)
    h = jnp.dot(y.astype(_MATMUL_DTYPE), w1_ref[...].astype(_MATMUL_DTYPE),
                preferred_element_type=jnp.float32) + b1_ref[...].astype(jnp.float32)
    h = jnp.where(h >= 0.0, h, 0.2 * h)            # leaky_relu(0.2)
    z = jnp.dot(h.astype(_MATMUL_DTYPE), w2_ref[...].astype(_MATMUL_DTYPE),
                preferred_element_type=jnp.float32) + b2_ref[...].astype(jnp.float32)
    o_ref[0] = z.astype(o_ref.dtype)


def fused_ffn(x, residual, ln, ff, eps=_LN_EPS):
    """s = x + residual; returns (s, W2 @ leaky_relu(W1 @ LN(s)))."""
    B, S, D = x.shape
    d_ff = ff["w1"].shape[1]
    row = pl.BlockSpec((1, S, D), lambda b: (b, 0, 0))
    const2 = lambda shape: pl.BlockSpec(shape, lambda b: (0, 0))
    itemsize = jnp.dtype(x.dtype).itemsize
    cost = pl.CostEstimate(
        flops=4 * B * S * D * d_ff + 12 * B * S * D,
        transcendentals=0,
        bytes_accessed=(4 * B * S * D + 2 * D * d_ff + D + d_ff) * itemsize)
    s_out, z_out = pl.pallas_call(
        functools.partial(_ffn_kernel, eps=float(eps)),
        out_shape=(jax.ShapeDtypeStruct((B, S, D), x.dtype),
                   jax.ShapeDtypeStruct((B, S, D), x.dtype)),
        grid_spec=pltpu.PrefetchScalarGridSpec(
            num_scalar_prefetch=0, grid=(B,),
            in_specs=[row, row, const2((1, D)), const2((1, D)),
                      const2((D, d_ff)), const2((1, d_ff)),
                      const2((d_ff, D)), const2((1, D))],
            out_specs=(row, row)),
        compiler_params=_compiler_params(),
        cost_estimate=cost,
    )(x, residual, ln["a"].reshape(1, D), ln["b"].reshape(1, D),
      ff["w1"], ff["b1"].reshape(1, d_ff), ff["w2"], ff["b2"].reshape(1, D))
    return s_out, z_out


# ----------------------------------------------------------------------------
# Attention: all heads per grid step, fused output projection
# ----------------------------------------------------------------------------
def _attention_kernel(q_ref, kv_ref, wo_ref, bo_ref, o_ref, *, n_heads, sm_scale):
    d = q_ref.shape[-1]
    dk = d // n_heads
    q = q_ref[0].astype(jnp.float32)              # (Sq, D)
    kv = kv_ref[0].astype(jnp.float32)            # (Sk, 2D): K | V
    k = kv[:, :d]
    v = kv[:, d:]
    wo = wo_ref[...].astype(jnp.float32)          # (D, D)
    z = bo_ref[...].astype(jnp.float32)           # (1, D), broadcasts below
    # Static (unrolled) per-head loop; heads never touch HBM individually and
    # the output projection accumulates per-head partial matmuls:
    #   concat_h(o_h) @ Wo == sum_h o_h @ Wo[h*dk:(h+1)*dk, :]
    for h in range(n_heads):
        qh = q[:, h * dk:(h + 1) * dk].astype(_MATMUL_DTYPE)
        kh = k[:, h * dk:(h + 1) * dk].astype(_MATMUL_DTYPE)
        vh = v[:, h * dk:(h + 1) * dk].astype(_MATMUL_DTYPE)
        s = jax.lax.dot_general(qh, kh, (((1,), (1,)), ((), ())),
                                preferred_element_type=jnp.float32) * sm_scale
        m = jnp.max(s, axis=-1, keepdims=True)
        p = jnp.exp(s - m)
        p = p * pl.reciprocal(jnp.sum(p, axis=-1, keepdims=True), approx=False)
        oh = jnp.dot(p.astype(_MATMUL_DTYPE), vh,
                     preferred_element_type=jnp.float32)
        woh = wo[h * dk:(h + 1) * dk, :].astype(_MATMUL_DTYPE)
        z = z + jnp.dot(oh.astype(_MATMUL_DTYPE), woh,
                        preferred_element_type=jnp.float32)
    o_ref[0] = z.astype(o_ref.dtype)


def attention_block(q, kv, wo, bo, n_heads):
    """softmax(QK^T/sqrt(dk)) V with fused output projection.

    q: (B, Sq, D); kv: (B, Sk, 2D) with K in the first D columns, V in the
    last D.  Per-head split happens inside the kernel (no HBM transposes).
    """
    B, Sq, D = q.shape
    Sk = kv.shape[1]
    dk = D // n_heads
    itemsize = jnp.dtype(q.dtype).itemsize
    cost = pl.CostEstimate(
        flops=4 * B * Sq * Sk * D + 2 * B * Sq * D * D,
        transcendentals=B * n_heads * Sq * Sk,
        bytes_accessed=(2 * B * Sq * D + 2 * B * Sk * D + D * D + D) * itemsize)
    kernel = functools.partial(_attention_kernel, n_heads=n_heads,
                               sm_scale=1.0 / math.sqrt(dk))
    return pl.pallas_call(
        kernel,
        out_shape=jax.ShapeDtypeStruct((B, Sq, D), q.dtype),
        grid_spec=pltpu.PrefetchScalarGridSpec(
            num_scalar_prefetch=0, grid=(B,),
            in_specs=[pl.BlockSpec((1, Sq, D), lambda b: (b, 0, 0)),
                      pl.BlockSpec((1, Sk, 2 * D), lambda b: (b, 0, 0)),
                      pl.BlockSpec((D, D), lambda b: (0, 0)),
                      pl.BlockSpec((1, D), lambda b: (0, 0))],
            out_specs=pl.BlockSpec((1, Sq, D), lambda b: (b, 0, 0))),
        compiler_params=_compiler_params(),
        cost_estimate=cost,
    )(q, kv, wo, bo.reshape(1, D))


# ----------------------------------------------------------------------------
# Final residual add + LayerNorm (stack epilogue)
# ----------------------------------------------------------------------------
def _add_ln_kernel(x_ref, r_ref, g_ref, b_ref, o_ref, *, eps):
    s = x_ref[0].astype(jnp.float32) + r_ref[0].astype(jnp.float32)
    o_ref[0] = _layer_norm_f32(s, g_ref[...].astype(jnp.float32),
                               b_ref[...].astype(jnp.float32), eps).astype(o_ref.dtype)


def add_layer_norm(x, residual, ln, eps=_LN_EPS):
    B, S, D = x.shape
    row = pl.BlockSpec((1, S, D), lambda b: (b, 0, 0))
    const2 = lambda shape: pl.BlockSpec(shape, lambda b: (0, 0))
    return pl.pallas_call(
        functools.partial(_add_ln_kernel, eps=float(eps)),
        out_shape=jax.ShapeDtypeStruct((B, S, D), x.dtype),
        grid_spec=pltpu.PrefetchScalarGridSpec(
            num_scalar_prefetch=0, grid=(B,),
            in_specs=[row, row, const2((1, D)), const2((1, D))],
            out_specs=row),
        compiler_params=_compiler_params(),
    )(x, residual, ln["a"].reshape(1, D), ln["b"].reshape(1, D))


# ----------------------------------------------------------------------------
# Model composition (pure functions over a params pytree)
# ----------------------------------------------------------------------------
def _self_attn_sublayer(x, delta, norm, attn_p):
    """Pre-norm self-attention sub-layer: returns (new residual stream, delta)."""
    D = x.shape[-1]
    if delta is None:
        q, kv = fused_ln_matmul(x, None, norm, attn_p["wqkv"], attn_p["bqkv"],
                                out_splits=(D, 2 * D))
        x_new = x
    else:
        x_new, q, kv = fused_ln_matmul(x, delta, norm, attn_p["wqkv"],
                                       attn_p["bqkv"], out_splits=(D, 2 * D))
    delta_attn = attention_block(q, kv, attn_p["wo"], attn_p["bo"], attn_p["h"])
    return x_new, delta_attn


def encoder_stack(params, x):
    delta = None
    for lp in params["layers"]:
        x, delta_attn = _self_attn_sublayer(x, delta, lp["norm1"], lp["self_attn"])
        x, delta = fused_ffn(x, delta_attn, lp["norm2"], lp["ff"])
    return add_layer_norm(x, delta, params["norm"])


def decoder_stack(params, x, memory):
    D = x.shape[-1]
    delta = None
    for lp in params["layers"]:
        x, delta_self = _self_attn_sublayer(x, delta, lp["norm1"], lp["self_attn"])
        ca = lp["src_attn"]
        # Cross-attention: Q from LN2(x + delta_self) (fused); K/V from the
        # encoder memory with a plain (un-normed) packed projection.
        x, q = fused_ln_matmul(x, delta_self, lp["norm2"], ca["wq"], ca["bq"],
                               out_splits=(D,))
        (kv,) = fused_ln_matmul(memory, None, None, ca["wkv"], ca["bkv"],
                                out_splits=(2 * D,), apply_ln=False)
        delta_src = attention_block(q, kv, ca["wo"], ca["bo"], ca["h"])
        x, delta = fused_ffn(x, delta_src, lp["norm3"], lp["ff"])
    return add_layer_norm(x, delta, params["norm"])


def encoder_decoder(params, src, tgt):
    # src_embed / tgt_embed / generator are nn.Sequential() == identity.
    memory = encoder_stack(params["encoder"], src)
    return decoder_stack(params["decoder"], tgt, memory)


def transformer_forward(params, src, tgt):
    """src, tgt: (B, n_emb_dims, seq) — same layout as the PyTorch module."""
    src_t = jnp.transpose(src, (0, 2, 1))
    tgt_t = jnp.transpose(tgt, (0, 2, 1))
    tgt_embedding = jnp.transpose(encoder_decoder(params, src_t, tgt_t), (0, 2, 1))
    src_embedding = jnp.transpose(encoder_decoder(params, tgt_t, src_t), (0, 2, 1))
    return src_embedding, tgt_embedding


# ----------------------------------------------------------------------------
# Parameter initialization (deterministic; weights pre-transposed / pre-fused)
# ----------------------------------------------------------------------------
def _init_linear_t(key, in_f, out_f):
    """nn.Linear(in_f, out_f) default init, stored pre-transposed (in_f, out_f)."""
    kw, kb = jax.random.split(key)
    bound = 1.0 / math.sqrt(in_f)
    w = jax.random.uniform(kw, (in_f, out_f), jnp.float32, -bound, bound)
    b = jax.random.uniform(kb, (out_f,), jnp.float32, -bound, bound)
    return w, b


def _init_self_attn(key, d_model, h):
    kq, kk, kv, ko = jax.random.split(key, 4)
    wq, bq = _init_linear_t(kq, d_model, d_model)
    wk, bk = _init_linear_t(kk, d_model, d_model)
    wv, bv = _init_linear_t(kv, d_model, d_model)
    wo, bo = _init_linear_t(ko, d_model, d_model)
    return {"h": h,
            "wqkv": jnp.concatenate([wq, wk, wv], axis=1),
            "bqkv": jnp.concatenate([bq, bk, bv], axis=0),
            "wo": wo, "bo": bo}


def _init_src_attn(key, d_model, h):
    kq, kk, kv, ko = jax.random.split(key, 4)
    wq, bq = _init_linear_t(kq, d_model, d_model)
    wk, bk = _init_linear_t(kk, d_model, d_model)
    wv, bv = _init_linear_t(kv, d_model, d_model)
    wo, bo = _init_linear_t(ko, d_model, d_model)
    return {"h": h, "wq": wq, "bq": bq,
            "wkv": jnp.concatenate([wk, wv], axis=1),
            "bkv": jnp.concatenate([bk, bv], axis=0),
            "wo": wo, "bo": bo}


def _init_ffn(key, d_model, d_ff):
    k1, k2 = jax.random.split(key)
    w1, b1 = _init_linear_t(k1, d_model, d_ff)
    w2, b2 = _init_linear_t(k2, d_ff, d_model)
    return {"w1": w1, "b1": b1, "w2": w2, "b2": b2}


def _init_ln(d):
    return {"a": jnp.ones((d,), jnp.float32), "b": jnp.zeros((d,), jnp.float32)}


def _init_encoder_layer(key, d_model, h, d_ff):
    k1, k2 = jax.random.split(key)
    return {"self_attn": _init_self_attn(k1, d_model, h),
            "ff": _init_ffn(k2, d_model, d_ff),
            "norm1": _init_ln(d_model), "norm2": _init_ln(d_model)}


def _init_decoder_layer(key, d_model, h, d_ff):
    k1, k2, k3 = jax.random.split(key, 3)
    return {"self_attn": _init_self_attn(k1, d_model, h),
            "src_attn": _init_src_attn(k2, d_model, h),
            "ff": _init_ffn(k3, d_model, d_ff),
            "norm1": _init_ln(d_model), "norm2": _init_ln(d_model),
            "norm3": _init_ln(d_model)}


def init_transformer_params(key, d_model, h, d_ff, n_blocks):
    ke, kd = jax.random.split(key)
    enc = [_init_encoder_layer(k, d_model, h, d_ff) for k in jax.random.split(ke, n_blocks)]
    dec = [_init_decoder_layer(k, d_model, h, d_ff) for k in jax.random.split(kd, n_blocks)]
    return {"encoder": {"layers": enc, "norm": _init_ln(d_model)},
            "decoder": {"layers": dec, "norm": _init_ln(d_model)}}


# ----------------------------------------------------------------------------
# Pure-JAX f32 reference (mirrors the PyTorch forward) for self-checking
# ----------------------------------------------------------------------------
def _ref_layer_norm(x, a, b, eps=_LN_EPS):
    mean = jnp.mean(x, axis=-1, keepdims=True)
    std = jnp.std(x, axis=-1, keepdims=True, ddof=1)
    return a * (x - mean) / (std + eps) + b


def _split_heads(x, h):
    b, s, d = x.shape
    return x.reshape(b, s, h, d // h).transpose(0, 2, 1, 3)


def _merge_heads(x):
    b, h, s, dk = x.shape
    return x.transpose(0, 2, 1, 3).reshape(b, s, h * dk)


def _ref_attention(q, k, v):
    d_k = q.shape[-1]
    scores = jnp.einsum("bhqd,bhkd->bhqk", q, k) / math.sqrt(d_k)
    p = jax.nn.softmax(scores, axis=-1)
    return jnp.einsum("bhqk,bhkd->bhqd", p, v)


def _ref_self_attn(p, x):
    d = x.shape[-1]
    qkv = x @ p["wqkv"] + p["bqkv"]
    q, k, v = qkv[..., :d], qkv[..., d:2 * d], qkv[..., 2 * d:]
    o = _merge_heads(_ref_attention(_split_heads(q, p["h"]),
                                    _split_heads(k, p["h"]),
                                    _split_heads(v, p["h"])))
    return o @ p["wo"] + p["bo"]


def _ref_src_attn(p, x, memory):
    d = x.shape[-1]
    q = x @ p["wq"] + p["bq"]
    kv = memory @ p["wkv"] + p["bkv"]
    k, v = kv[..., :d], kv[..., d:]
    o = _merge_heads(_ref_attention(_split_heads(q, p["h"]),
                                    _split_heads(k, p["h"]),
                                    _split_heads(v, p["h"])))
    return o @ p["wo"] + p["bo"]


def _ref_ffn(p, x):
    h = x @ p["w1"] + p["b1"]
    h = jnp.where(h >= 0.0, h, 0.2 * h)
    return h @ p["w2"] + p["b2"]


def _ref_encoder(params, x):
    for lp in params["layers"]:
        xn1 = _ref_layer_norm(x, lp["norm1"]["a"], lp["norm1"]["b"])
        x = x + _ref_self_attn(lp["self_attn"], xn1)
        xn2 = _ref_layer_norm(x, lp["norm2"]["a"], lp["norm2"]["b"])
        x = x + _ref_ffn(lp["ff"], xn2)
    return _ref_layer_norm(x, params["norm"]["a"], params["norm"]["b"])


def _ref_decoder(params, x, memory):
    for lp in params["layers"]:
        xn1 = _ref_layer_norm(x, lp["norm1"]["a"], lp["norm1"]["b"])
        x = x + _ref_self_attn(lp["self_attn"], xn1)
        xn2 = _ref_layer_norm(x, lp["norm2"]["a"], lp["norm2"]["b"])
        x = x + _ref_src_attn(lp["src_attn"], xn2, memory)
        xn3 = _ref_layer_norm(x, lp["norm3"]["a"], lp["norm3"]["b"])
        x = x + _ref_ffn(lp["ff"], xn3)
    return _ref_layer_norm(x, params["norm"]["a"], params["norm"]["b"])


def _ref_transformer_forward(params, src, tgt):
    src_t = jnp.transpose(src, (0, 2, 1))
    tgt_t = jnp.transpose(tgt, (0, 2, 1))

    def ed(s, t):
        return _ref_decoder(params["decoder"], t, _ref_encoder(params["encoder"], s))

    tgt_embedding = jnp.transpose(ed(src_t, tgt_t), (0, 2, 1))
    src_embedding = jnp.transpose(ed(tgt_t, src_t), (0, 2, 1))
    return src_embedding, tgt_embedding


# ----------------------------------------------------------------------------
# Demo / self-checks
# ----------------------------------------------------------------------------
if __name__ == "__main__":
    batch, seq, d_model, d_ff, n_heads, n_blocks = 2, 8, 32, 64, 4, 2

    key = jax.random.PRNGKey(0)
    k_src, k_tgt, k_par = jax.random.split(key, 3)
    src = jax.random.normal(k_src, (batch, d_model, seq), jnp.float32)
    tgt = jax.random.normal(k_tgt, (batch, d_model, seq), jnp.float32)
    params = init_transformer_params(k_par, d_model, n_heads, d_ff, n_blocks)

    fwd = jax.jit(lambda s, t: transformer_forward(params, s, t))
    src_emb, tgt_emb = fwd(src, tgt)
    src_emb = jax.block_until_ready(src_emb)
    tgt_emb = jax.block_until_ready(tgt_emb)
    assert src_emb.shape == (batch, d_model, seq)
    assert tgt_emb.shape == (batch, d_model, seq)

    # Check 1: the pure-f32 add + LayerNorm kernel against an exact reference.
    xs = jax.random.normal(jax.random.PRNGKey(1), (batch, seq, d_model), jnp.float32)
    rs = jax.random.normal(jax.random.PRNGKey(2), (batch, seq, d_model), jnp.float32)
    ln_chk = {"a": 1.0 + 0.1 * jax.random.normal(jax.random.PRNGKey(3), (d_model,), jnp.float32),
              "b": 0.1 * jax.random.normal(jax.random.PRNGKey(4), (d_model,), jnp.float32)}
    got_ln = add_layer_norm(xs, rs, ln_chk)
    want_ln = _ref_layer_norm(xs + rs, ln_chk["a"], ln_chk["b"])
    assert jnp.allclose(got_ln, want_ln, atol=1e-5, rtol=1e-5)

    # Check 2: full Transformer vs a plain-JAX f32 reference.  The kernels feed
    # the MXU bf16 operands (f32 accumulation), so compare with a bf16-level
    # elementwise tolerance plus a relative Frobenius-norm check.
    ref_src, ref_tgt = _ref_transformer_forward(params, src, tgt)
    for got, want in ((src_emb, ref_src), (tgt_emb, ref_tgt)):
        rel = jnp.linalg.norm(got - want) / jnp.linalg.norm(want)
        assert rel < 2e-2, float(rel)
        assert jnp.allclose(got, want, atol=1e-1, rtol=1e-1), \
            float(jnp.max(jnp.abs(got - want)))

    print("KERNEL_OK")
</pallas_src>

<mosaic_0001>
module attributes {stable_mosaic.version = 11 : i64} {
  func.func @kernel(%arg0: i32, %arg1: memref<1x8x32xf32, #tpu.memory_space<vmem>>, %arg2: memref<1x32xf32, #tpu.memory_space<vmem>>, %arg3: memref<1x32xf32, #tpu.memory_space<vmem>>, %arg4: memref<32x96xf32, #tpu.memory_space<vmem>>, %arg5: memref<1x96xf32, #tpu.memory_space<vmem>>, %arg6: memref<1x8x32xf32, #tpu.memory_space<vmem>>, %arg7: memref<1x8x64xf32, #tpu.memory_space<vmem>>) attributes {dimension_semantics = [#tpu.dimension_semantics<parallel>], iteration_bounds = array<i64: 2>, scalar_prefetch = 0 : i64, scratch_operands = 0 : i64, tpu.core_type = #tpu.core_type<tc>, window_params = [{transform_indices = @transform_0, window_bounds = array<i64: 1, 8, 32>}, {pipeline_mode = #tpu.pipeline_mode<synchronous>, transform_indices = @transform_1, window_bounds = array<i64: 1, 32>}, {pipeline_mode = #tpu.pipeline_mode<synchronous>, transform_indices = @transform_2, window_bounds = array<i64: 1, 32>}, {pipeline_mode = #tpu.pipeline_mode<synchronous>, transform_indices = @transform_3, window_bounds = array<i64: 32, 96>}, {pipeline_mode = #tpu.pipeline_mode<synchronous>, transform_indices = @transform_4, window_bounds = array<i64: 1, 96>}, {transform_indices = @transform_5, window_bounds = array<i64: 1, 8, 32>}, {transform_indices = @transform_6, window_bounds = array<i64: 1, 8, 64>}]} {
    %c0 = arith.constant 0 : index
    %c0_0 = arith.constant 0 : index
    %c0_1 = arith.constant 0 : index
    %0 = vector.load %arg1[%c0, %c0_0, %c0_1] : memref<1x8x32xf32, #tpu.memory_space<vmem>>, vector<1x8x32xf32>
    %1 = vector.shape_cast %0 : vector<1x8x32xf32> to vector<8x32xf32>
    %c0_2 = arith.constant 0 : index
    %c0_3 = arith.constant 0 : index
    %2 = vector.load %arg2[%c0_2, %c0_3] : memref<1x32xf32, #tpu.memory_space<vmem>>, vector<1x32xf32>
    %c0_4 = arith.constant 0 : index
    %c0_5 = arith.constant 0 : index
    %3 = vector.load %arg3[%c0_4, %c0_5] : memref<1x32xf32, #tpu.memory_space<vmem>>, vector<1x32xf32>
    %c0_6 = arith.constant 0 : index
    %c0_7 = arith.constant 0 : index
    %4 = vector.load %arg5[%c0_6, %c0_7] : memref<1x96xf32, #tpu.memory_space<vmem>>, vector<1x96xf32>
    %cst = arith.constant dense<0.000000e+00> : vector<8xf32>
    %5 = vector.multi_reduction <add>, %1, %cst [1] : vector<8x32xf32> to vector<8xf32>
    %6 = vector.shape_cast %5 : vector<8xf32> to vector<8x1xf32>
    %cst_8 = arith.constant 3.200000e+01 : f32
    %7 = vector.broadcast %cst_8 : f32 to vector<8x1xf32>
    %8 = arith.divf %6, %7 : vector<8x1xf32>
    %9 = vector.broadcast %8 : vector<8x1xf32> to vector<8x32xf32>
    %10 = arith.subf %1, %9 : vector<8x32xf32>
    %11 = arith.mulf %10, %10 : vector<8x32xf32>
    %cst_9 = arith.constant dense<0.000000e+00> : vector<8xf32>
    %12 = vector.multi_reduction <add>, %11, %cst_9 [1] : vector<8x32xf32> to vector<8xf32>
    %13 = vector.shape_cast %12 : vector<8xf32> to vector<8x1xf32>
    %cst_10 = arith.constant 0.0322580636 : f32
    %14 = vector.broadcast %cst_10 : f32 to vector<8x1xf32>
    %15 = arith.mulf %13, %14 : vector<8x1xf32>
    %16 = math.sqrt %15 : vector<8x1xf32>
    %cst_11 = arith.constant 9.99999997E-7 : f32
    %17 = vector.broadcast %cst_11 : f32 to vector<8x1xf32>
    %18 = arith.addf %16, %17 : vector<8x1xf32>
    %19 = tpu.reciprocal %18 : vector<8x1xf32> -> vector<8x1xf32>
    %20 = vector.broadcast %2 : vector<1x32xf32> to vector<8x32xf32>
    %21 = vector.broadcast %19 : vector<8x1xf32> to vector<8x32xf32>
    %22 = arith.mulf %20, %21 : vector<8x32xf32>
    %23 = arith.mulf %10, %22 : vector<8x32xf32>
    %24 = vector.broadcast %3 : vector<1x32xf32> to vector<8x32xf32>
    %25 = arith.addf %23, %24 : vector<8x32xf32>
    %26 = arith.truncf %25 : vector<8x32xf32> to vector<8x32xbf16>
    %c0_12 = arith.constant 0 : index
    %c0_13 = arith.constant 0 : index
    %27 = vector.load %arg4[%c0_12, %c0_13] : memref<32x96xf32, #tpu.memory_space<vmem>>, vector<32x96xf32>
    %28 = arith.truncf %27 : vector<32x96xf32> to vector<32x96xbf16>
    %cst_14 = arith.constant dense<0.000000e+00> : vector<8x96xf32>
    %29 = tpu.matmul %26, %28, %cst_14 {dimension_numbers = #tpu.dot_dimension_numbers<[1], [0], [0], [1], [0, 0, 1, 1], [], []>} : vector<8x32xbf16>, vector<32x96xbf16>, vector<8x96xf32> -> vector<8x96xf32>
    %30 = vector.broadcast %4 : vector<1x96xf32> to vector<8x96xf32>
    %31 = arith.addf %29, %30 : vector<8x96xf32>
    %32 = vector.extract_strided_slice %31 {offsets = [0, 0], sizes = [8, 32], strides = [1, 1]} : vector<8x96xf32> to vector<8x32xf32>
    %c0_15 = arith.constant 0 : index
    %c0_16 = arith.constant 0 : index
    %c0_17 = arith.constant 0 : index
    %33 = vector.load %arg6[%c0_15, %c0_16, %c0_17] : memref<1x8x32xf32, #tpu.memory_space<vmem>>, vector<1x8x32xf32>
    %34 = vector.shape_cast %33 : vector<1x8x32xf32> to vector<8x32xf32>
    %35 = vector.shape_cast %32 : vector<8x32xf32> to vector<1x8x32xf32>
    tpu.vector_store %arg6[%c0_15, %c0_16, %c0_17], %35 {strides = array<i32>} : memref<1x8x32xf32, #tpu.memory_space<vmem>>, vector<1x8x32xf32>,
    %36 = vector.extract_strided_slice %31 {offsets = [0, 32], sizes = [8, 64], strides = [1, 1]} : vector<8x96xf32> to vector<8x64xf32>
    %c0_18 = arith.constant 0 : index
    %c0_19 = arith.constant 0 : index
    %c0_20 = arith.constant 0 : index
    %37 = vector.load %arg7[%c0_18, %c0_19, %c0_20] : memref<1x8x64xf32, #tpu.memory_space<vmem>>, vector<1x8x64xf32>
    %38 = vector.shape_cast %37 : vector<1x8x64xf32> to vector<8x64xf32>
    %39 = vector.shape_cast %36 : vector<8x64xf32> to vector<1x8x64xf32>
    tpu.vector_store %arg7[%c0_18, %c0_19, %c0_20], %39 {strides = array<i32>} : memref<1x8x64xf32, #tpu.memory_space<vmem>>, vector<1x8x64xf32>,
    return
  }
  func.func @transform_0(%arg0: i32) -> (i32, i32, i32) {
    %c0_i32 = arith.constant 0 : i32
    %c0_i32_0 = arith.constant 0 : i32
    %c0_i32_1 = arith.constant 0 : i32
    return %arg0, %c0_i32, %c0_i32_0 : i32, i32, i32
  }
  func.func @transform_1(%arg0: i32) -> (i32, i32) {
    %c0_i32 = arith.constant 0 : i32
    %c0_i32_0 = arith.constant 0 : i32
    %c0_i32_1 = arith.constant 0 : i32
    return %c0_i32, %c0_i32_0 : i32, i32
  }
  func.func @transform_2(%arg0: i32) -> (i32, i32) {
    %c0_i32 = arith.constant 0 : i32
    %c0_i32_0 = arith.constant 0 : i32
    %c0_i32_1 = arith.constant 0 : i32
    return %c0_i32, %c0_i32_0 : i32, i32
  }
  func.func @transform_3(%arg0: i32) -> (i32, i32) {
    %c0_i32 = arith.constant 0 : i32
    %c0_i32_0 = arith.constant 0 : i32
    %c0_i32_1 = arith.constant 0 : i32
    return %c0_i32, %c0_i32_0 : i32, i32
  }
  func.func @transform_4(%arg0: i32) -> (i32, i32) {
    %c0_i32 = arith.constant 0 : i32
    %c0_i32_0 = arith.constant 0 : i32
    %c0_i32_1 = arith.constant 0 : i32
    return %c0_i32, %c0_i32_0 : i32, i32
  }
  func.func @transform_5(%arg0: i32) -> (i32, i32, i32) {
    %c0_i32 = arith.constant 0 : i32
    %c0_i32_0 = arith.constant 0 : i32
    %c0_i32_1 = arith.constant 0 : i32
    return %arg0, %c0_i32, %c0_i32_0 : i32, i32, i32
  }
  func.func @transform_6(%arg0: i32) -> (i32, i32, i32) {
    %c0_i32 = arith.constant 0 : i32
    %c0_i32_0 = arith.constant 0 : i32
    %c0_i32_1 = arith.constant 0 : i32
    return %arg0, %c0_i32, %c0_i32_0 : i32, i32, i32
  }
}

module attributes {stable_mosaic.version = 11 : i64} {
  func.func @_ffn_kernel(%arg0: i32, %arg1: memref<1x8x32xf32, #tpu.memory_space<vmem>>, %arg2: memref<1x8x32xf32, #tpu.memory_space<vmem>>, %arg3: memref<1x32xf32, #tpu.memory_space<vmem>>, %arg4: memref<1x32xf32, #tpu.memory_space<vmem>>, %arg5: memref<32x64xf32, #tpu.memory_space<vmem>>, %arg6: memref<1x64xf32, #tpu.memory_space<vmem>>, %arg7: memref<64x32xf32, #tpu.memory_space<vmem>>, %arg8: memref<1x32xf32, #tpu.memory_space<vmem>>, %arg9: memref<1x8x32xf32, #tpu.memory_space<vmem>>, %arg10: memref<1x8x32xf32, #tpu.memory_space<vmem>>) attributes {dimension_semantics = [#tpu.dimension_semantics<parallel>], iteration_bounds = array<i64: 2>, scalar_prefetch = 0 : i64, scratch_operands = 0 : i64, tpu.core_type = #tpu.core_type<tc>, window_params = [{transform_indices = @transform_0, window_bounds = array<i64: 1, 8, 32>}, {transform_indices = @transform_1, window_bounds = array<i64: 1, 8, 32>}, {pipeline_mode = #tpu.pipeline_mode<synchronous>, transform_indices = @transform_2, window_bounds = array<i64: 1, 32>}, {pipeline_mode = #tpu.pipeline_mode<synchronous>, transform_indices = @transform_3, window_bounds = array<i64: 1, 32>}, {pipeline_mode = #tpu.pipeline_mode<synchronous>, transform_indices = @transform_4, window_bounds = array<i64: 32, 64>}, {pipeline_mode = #tpu.pipeline_mode<synchronous>, transform_indices = @transform_5, window_bounds = array<i64: 1, 64>}, {pipeline_mode = #tpu.pipeline_mode<synchronous>, transform_indices = @transform_6, window_bounds = array<i64: 64, 32>}, {pipeline_mode = #tpu.pipeline_mode<synchronous>, transform_indices = @transform_7, window_bounds = array<i64: 1, 32>}, {transform_indices = @transform_8, window_bounds = array<i64: 1, 8, 32>}, {transform_indices = @transform_9, window_bounds = array<i64: 1, 8, 32>}]} {
    %c0 = arith.constant 0 : index
    %c0_0 = arith.constant 0 : index
    %c0_1 = arith.constant 0 : index
    %0 = vector.load %arg1[%c0, %c0_0, %c0_1] : memref<1x8x32xf32, #tpu.memory_space<vmem>>, vector<1x8x32xf32>
    %1 = vector.shape_cast %0 : vector<1x8x32xf32> to vector<8x32xf32>
    %c0_2 = arith.constant 0 : index
    %c0_3 = arith.constant 0 : index
    %c0_4 = arith.constant 0 : index
    %2 = vector.load %arg2[%c0_2, %c0_3, %c0_4] : memref<1x8x32xf32, #tpu.memory_space<vmem>>, vector<1x8x32xf32>
    %3 = vector.shape_cast %2 : vector<1x8x32xf32> to vector<8x32xf32>
    %4 = arith.addf %1, %3 : vector<8x32xf32>
    %c0_5 = arith.constant 0 : index
    %c0_6 = arith.constant 0 : index
    %c0_7 = arith.constant 0 : index
    %5 = vector.load %arg9[%c0_5, %c0_6, %c0_7] : memref<1x8x32xf32, #tpu.memory_space<vmem>>, vector<1x8x32xf32>
    %6 = vector.shape_cast %5 : vector<1x8x32xf32> to vector<8x32xf32>
    %7 = vector.shape_cast %4 : vector<8x32xf32> to vector<1x8x32xf32>
    tpu.vector_store %arg9[%c0_5, %c0_6, %c0_7], %7 {strides = array<i32>} : memref<1x8x32xf32, #tpu.memory_space<vmem>>, vector<1x8x32xf32>,
    %c0_8 = arith.constant 0 : index
    %c0_9 = arith.constant 0 : index
    %8 = vector.load %arg3[%c0_8, %c0_9] : memref<1x32xf32, #tpu.memory_space<vmem>>, vector<1x32xf32>
    %c0_10 = arith.constant 0 : index
    %c0_11 = arith.constant 0 : index
    %9 = vector.load %arg4[%c0_10, %c0_11] : memref<1x32xf32, #tpu.memory_space<vmem>>, vector<1x32xf32>
    %cst = arith.constant dense<0.000000e+00> : vector<8xf32>
    %10 = vector.multi_reduction <add>, %4, %cst [1] : vector<8x32xf32> to vector<8xf32>
    %11 = vector.shape_cast %10 : vector<8xf32> to vector<8x1xf32>
    %cst_12 = arith.constant 3.200000e+01 : f32
    %12 = vector.broadcast %cst_12 : f32 to vector<8x1xf32>
    %13 = arith.divf %11, %12 : vector<8x1xf32>
    %14 = vector.broadcast %13 : vector<8x1xf32> to vector<8x32xf32>
    %15 = arith.subf %4, %14 : vector<8x32xf32>
    %16 = arith.mulf %15, %15 : vector<8x32xf32>
    %cst_13 = arith.constant dense<0.000000e+00> : vector<8xf32>
    %17 = vector.multi_reduction <add>, %16, %cst_13 [1] : vector<8x32xf32> to vector<8xf32>
    %18 = vector.shape_cast %17 : vector<8xf32> to vector<8x1xf32>
    %cst_14 = arith.constant 0.0322580636 : f32
    %19 = vector.broadcast %cst_14 : f32 to vector<8x1xf32>
    %20 = arith.mulf %18, %19 : vector<8x1xf32>
    %21 = math.sqrt %20 : vector<8x1xf32>
    %cst_15 = arith.constant 9.99999997E-7 : f32
    %22 = vector.broadcast %cst_15 : f32 to vector<8x1xf32>
    %23 = arith.addf %21, %22 : vector<8x1xf32>
    %24 = tpu.reciprocal %23 : vector<8x1xf32> -> vector<8x1xf32>
    %25 = vector.broadcast %8 : vector<1x32xf32> to vector<8x32xf32>
    %26 = vector.broadcast %24 : vector<8x1xf32> to vector<8x32xf32>
    %27 = arith.mulf %25, %26 : vector<8x32xf32>
    %28 = arith.mulf %15, %27 : vector<8x32xf32>
    %29 = vector.broadcast %9 : vector<1x32xf32> to vector<8x32xf32>
    %30 = arith.addf %28, %29 : vector<8x32xf32>
    %31 = arith.truncf %30 : vector<8x32xf32> to vector<8x32xbf16>
    %c0_16 = arith.constant 0 : index
    %c0_17 = arith.constant 0 : index
    %32 = vector.load %arg5[%c0_16, %c0_17] : memref<32x64xf32, #tpu.memory_space<vmem>>, vector<32x64xf32>
    %33 = arith.truncf %32 : vector<32x64xf32> to vector<32x64xbf16>
    %cst_18 = arith.constant dense<0.000000e+00> : vector<8x64xf32>
    %34 = tpu.matmul %31, %33, %cst_18 {dimension_numbers = #tpu.dot_dimension_numbers<[1], [0], [0], [1], [0, 0, 1, 1], [], []>} : vector<8x32xbf16>, vector<32x64xbf16>, vector<8x64xf32> -> vector<8x64xf32>
    %c0_19 = arith.constant 0 : index
    %c0_20 = arith.constant 0 : index
    %35 = vector.load %arg6[%c0_19, %c0_20] : memref<1x64xf32, #tpu.memory_space<vmem>>, vector<1x64xf32>
    %36 = vector.broadcast %35 : vector<1x64xf32> to vector<8x64xf32>
    %37 = arith.addf %34, %36 : vector<8x64xf32>
    %cst_21 = arith.constant 0.000000e+00 : f32
    %38 = vector.broadcast %cst_21 : f32 to vector<8x64xf32>
    %39 = arith.cmpf oge, %37, %38 : vector<8x64xf32>
    %cst_22 = arith.constant 2.000000e-01 : f32
    %40 = vector.broadcast %cst_22 : f32 to vector<8x64xf32>
    %41 = arith.mulf %40, %37 : vector<8x64xf32>
    %42 = arith.select %39, %37, %41 : vector<8x64xi1>, vector<8x64xf32>
    %43 = arith.truncf %42 : vector<8x64xf32> to vector<8x64xbf16>
    %c0_23 = arith.constant 0 : index
    %c0_24 = arith.constant 0 : index
    %44 = vector.load %arg7[%c0_23, %c0_24] : memref<64x32xf32, #tpu.memory_space<vmem>>, vector<64x32xf32>
    %45 = arith.truncf %44 : vector<64x32xf32> to vector<64x32xbf16>
    %cst_25 = arith.constant dense<0.000000e+00> : vector<8x32xf32>
    %46 = tpu.matmul %43, %45, %cst_25 {dimension_numbers = #tpu.dot_dimension_numbers<[1], [0], [0], [1], [0, 0, 1, 1], [], []>} : vector<8x64xbf16>, vector<64x32xbf16>, vector<8x32xf32> -> vector<8x32xf32>
    %c0_26 = arith.constant 0 : index
    %c0_27 = arith.constant 0 : index
    %47 = vector.load %arg8[%c0_26, %c0_27] : memref<1x32xf32, #tpu.memory_space<vmem>>, vector<1x32xf32>
    %48 = vector.broadcast %47 : vector<1x32xf32> to vector<8x32xf32>
    %49 = arith.addf %46, %48 : vector<8x32xf32>
    %c0_28 = arith.constant 0 : index
    %c0_29 = arith.constant 0 : index
    %c0_30 = arith.constant 0 : index
    %50 = vector.load %arg10[%c0_28, %c0_29, %c0_30] : memref<1x8x32xf32, #tpu.memory_space<vmem>>, vector<1x8x32xf32>
    %51 = vector.shape_cast %50 : vector<1x8x32xf32> to vector<8x32xf32>
    %52 = vector.shape_cast %49 : vector<8x32xf32> to vector<1x8x32xf32>
    tpu.vector_store %arg10[%c0_28, %c0_29, %c0_30], %52 {strides = array<i32>} : memref<1x8x32xf32, #tpu.memory_space<vmem>>, vector<1x8x32xf32>,
    return
  }
  func.func @transform_0(%arg0: i32) -> (i32, i32, i32) {
    %c0_i32 = arith.constant 0 : i32
    %c0_i32_0 = arith.constant 0 : i32
    %c0_i32_1 = arith.constant 0 : i32
    return %arg0, %c0_i32, %c0_i32_0 : i32, i32, i32
  }
  func.func @transform_1(%arg0: i32) -> (i32, i32, i32) {
    %c0_i32 = arith.constant 0 : i32
    %c0_i32_0 = arith.constant 0 : i32
    %c0_i32_1 = arith.constant 0 : i32
    return %arg0, %c0_i32, %c0_i32_0 : i32, i32, i32
  }
  func.func @transform_2(%arg0: i32) -> (i32, i32) {
    %c0_i32 = arith.constant 0 : i32
    %c0_i32_0 = arith.constant 0 : i32
    %c0_i32_1 = arith.constant 0 : i32
    return %c0_i32, %c0_i32_0 : i32, i32
  }
  func.func @transform_3(%arg0: i32) -> (i32, i32) {
    %c0_i32 = arith.constant 0 : i32
    %c0_i32_0 = arith.constant 0 : i32
    %c0_i32_1 = arith.constant 0 : i32
    return %c0_i32, %c0_i32_0 : i32, i32
  }
  func.func @transform_4(%arg0: i32) -> (i32, i32) {
    %c0_i32 = arith.constant 0 : i32
    %c0_i32_0 = arith.constant 0 : i32
    %c0_i32_1 = arith.constant 0 : i32
    return %c0_i32, %c0_i32_0 : i32, i32
  }
  func.func @transform_5(%arg0: i32) -> (i32, i32) {
    %c0_i32 = arith.constant 0 : i32
    %c0_i32_0 = arith.constant 0 : i32
    %c0_i32_1 = arith.constant 0 : i32
    return %c0_i32, %c0_i32_0 : i32, i32
  }
  func.func @transform_6(%arg0: i32) -> (i32, i32) {
    %c0_i32 = arith.constant 0 : i32
    %c0_i32_0 = arith.constant 0 : i32
    %c0_i32_1 = arith.constant 0 : i32
    return %c0_i32, %c0_i32_0 : i32, i32
  }
  func.func @transform_7(%arg0: i32) -> (i32, i32) {
    %c0_i32 = arith.constant 0 : i32
    %c0_i32_0 = arith.constant 0 : i32
    %c0_i32_1 = arith.constant 0 : i32
    return %c0_i32, %c0_i32_0 : i32, i32
  }
  func.func @transform_8(%arg0: i32) -> (i32, i32, i32) {
    %c0_i32 = arith.constant 0 : i32
    %c0_i32_0 = arith.constant 0 : i32
    %c0_i32_1 = arith.constant 0 : i32
    return %arg0, %c0_i32, %c0_i32_0 : i32, i32, i32
  }
  func.func @transform_9(%arg0: i32) -> (i32, i32, i32) {
    %c0_i32 = arith.constant 0 : i32
    %c0_i32_0 = arith.constant 0 : i32
    %c0_i32_1 = arith.constant 0 : i32
    return %arg0, %c0_i32, %c0_i32_0 : i32, i32, i32
  }
}

module attributes {stable_mosaic.version = 11 : i64} {
  func.func @_attention_kernel(%arg0: i32, %arg1: memref<1x8x32xf32, #tpu.memory_space<vmem>>, %arg2: memref<1x8x64xf32, #tpu.memory_space<vmem>>, %arg3: memref<32x32xf32, #tpu.memory_space<vmem>>, %arg4: memref<1x32xf32, #tpu.memory_space<vmem>>, %arg5: memref<1x8x32xf32, #tpu.memory_space<vmem>>) attributes {dimension_semantics = [#tpu.dimension_semantics<parallel>], iteration_bounds = array<i64: 2>, scalar_prefetch = 0 : i64, scratch_operands = 0 : i64, tpu.core_type = #tpu.core_type<tc>, window_params = [{transform_indices = @transform_0, window_bounds = array<i64: 1, 8, 32>}, {transform_indices = @transform_1, window_bounds = array<i64: 1, 8, 64>}, {pipeline_mode = #tpu.pipeline_mode<synchronous>, transform_indices = @transform_2, window_bounds = array<i64: 32, 32>}, {pipeline_mode = #tpu.pipeline_mode<synchronous>, transform_indices = @transform_3, window_bounds = array<i64: 1, 32>}, {transform_indices = @transform_4, window_bounds = array<i64: 1, 8, 32>}]} {
    %c0 = arith.constant 0 : index
    %c0_0 = arith.constant 0 : index
    %c0_1 = arith.constant 0 : index
    %0 = vector.load %arg1[%c0, %c0_0, %c0_1] : memref<1x8x32xf32, #tpu.memory_space<vmem>>, vector<1x8x32xf32>
    %1 = vector.shape_cast %0 : vector<1x8x32xf32> to vector<8x32xf32>
    %c0_2 = arith.constant 0 : index
    %c0_3 = arith.constant 0 : index
    %c0_4 = arith.constant 0 : index
    %2 = vector.load %arg2[%c0_2, %c0_3, %c0_4] : memref<1x8x64xf32, #tpu.memory_space<vmem>>, vector<1x8x64xf32>
    %3 = vector.shape_cast %2 : vector<1x8x64xf32> to vector<8x64xf32>
    %4 = vector.extract_strided_slice %3 {offsets = [0, 0], sizes = [8, 32], strides = [1, 1]} : vector<8x64xf32> to vector<8x32xf32>
    %5 = vector.extract_strided_slice %3 {offsets = [0, 32], sizes = [8, 32], strides = [1, 1]} : vector<8x64xf32> to vector<8x32xf32>
    %c0_5 = arith.constant 0 : index
    %c0_6 = arith.constant 0 : index
    %6 = vector.load %arg3[%c0_5, %c0_6] : memref<32x32xf32, #tpu.memory_space<vmem>>, vector<32x32xf32>
    %c0_7 = arith.constant 0 : index
    %c0_8 = arith.constant 0 : index
    %7 = vector.load %arg4[%c0_7, %c0_8] : memref<1x32xf32, #tpu.memory_space<vmem>>, vector<1x32xf32>
    %8 = vector.extract_strided_slice %1 {offsets = [0, 0], sizes = [8, 8], strides = [1, 1]} : vector<8x32xf32> to vector<8x8xf32>
    %9 = arith.truncf %8 : vector<8x8xf32> to vector<8x8xbf16>
    %10 = vector.extract_strided_slice %4 {offsets = [0, 0], sizes = [8, 8], strides = [1, 1]} : vector<8x32xf32> to vector<8x8xf32>
    %11 = arith.truncf %10 : vector<8x8xf32> to vector<8x8xbf16>
    %12 = vector.extract_strided_slice %5 {offsets = [0, 0], sizes = [8, 8], strides = [1, 1]} : vector<8x32xf32> to vector<8x8xf32>
    %13 = arith.truncf %12 : vector<8x8xf32> to vector<8x8xbf16>
    %cst = arith.constant dense<0.000000e+00> : vector<8x8xf32>
    %14 = tpu.matmul %9, %11, %cst {dimension_numbers = #tpu.dot_dimension_numbers<[1], [1], [0], [0], [0, 0, 1, 0], [], []>} : vector<8x8xbf16>, vector<8x8xbf16>, vector<8x8xf32> -> vector<8x8xf32>
    %cst_9 = arith.constant 0.353553385 : f32
    %15 = vector.broadcast %cst_9 : f32 to vector<8x8xf32>
    %16 = arith.mulf %14, %15 : vector<8x8xf32>
    %cst_10 = arith.constant dense<0xFF800000> : vector<8xf32>
    %17 = vector.multi_reduction <maximumf>, %16, %cst_10 [1] : vector<8x8xf32> to vector<8xf32>
    %18 = vector.shape_cast %17 : vector<8xf32> to vector<8x1xf32>
    %19 = vector.broadcast %18 : vector<8x1xf32> to vector<8x8xf32>
    %20 = arith.subf %16, %19 : vector<8x8xf32>
    %21 = math.exp %20 : vector<8x8xf32>
    %cst_11 = arith.constant dense<0.000000e+00> : vector<8xf32>
    %22 = vector.multi_reduction <add>, %21, %cst_11 [1] : vector<8x8xf32> to vector<8xf32>
    %23 = vector.shape_cast %22 : vector<8xf32> to vector<8x1xf32>
    %24 = tpu.reciprocal %23 : vector<8x1xf32> -> vector<8x1xf32>
    %25 = vector.broadcast %24 : vector<8x1xf32> to vector<8x8xf32>
    %26 = arith.mulf %21, %25 : vector<8x8xf32>
    %27 = arith.truncf %26 : vector<8x8xf32> to vector<8x8xbf16>
    %cst_12 = arith.constant dense<0.000000e+00> : vector<8x8xf32>
    %28 = tpu.matmul %27, %13, %cst_12 {dimension_numbers = #tpu.dot_dimension_numbers<[1], [0], [0], [1], [0, 0, 1, 1], [], []>} : vector<8x8xbf16>, vector<8x8xbf16>, vector<8x8xf32> -> vector<8x8xf32>
    %29 = vector.extract_strided_slice %6 {offsets = [0, 0], sizes = [8, 32], strides = [1, 1]} : vector<32x32xf32> to vector<8x32xf32>
    %30 = arith.truncf %29 : vector<8x32xf32> to vector<8x32xbf16>
    %31 = arith.truncf %28 : vector<8x8xf32> to vector<8x8xbf16>
    %cst_13 = arith.constant dense<0.000000e+00> : vector<8x32xf32>
    %32 = tpu.matmul %31, %30, %cst_13 {dimension_numbers = #tpu.dot_dimension_numbers<[1], [0], [0], [1], [0, 0, 1, 1], [], []>} : vector<8x8xbf16>, vector<8x32xbf16>, vector<8x32xf32> -> vector<8x32xf32>
    %33 = vector.broadcast %7 : vector<1x32xf32> to vector<8x32xf32>
    %34 = arith.addf %33, %32 : vector<8x32xf32>
    %35 = vector.extract_strided_slice %1 {offsets = [0, 8], sizes = [8, 8], strides = [1, 1]} : vector<8x32xf32> to vector<8x8xf32>
    %36 = arith.truncf %35 : vector<8x8xf32> to vector<8x8xbf16>
    %37 = vector.extract_strided_slice %4 {offsets = [0, 8], sizes = [8, 8], strides = [1, 1]} : vector<8x32xf32> to vector<8x8xf32>
    %38 = arith.truncf %37 : vector<8x8xf32> to vector<8x8xbf16>
    %39 = vector.extract_strided_slice %5 {offsets = [0, 8], sizes = [8, 8], strides = [1, 1]} : vector<8x32xf32> to vector<8x8xf32>
    %40 = arith.truncf %39 : vector<8x8xf32> to vector<8x8xbf16>
    %cst_14 = arith.constant dense<0.000000e+00> : vector<8x8xf32>
    %41 = tpu.matmul %36, %38, %cst_14 {dimension_numbers = #tpu.dot_dimension_numbers<[1], [1], [0], [0], [0, 0, 1, 0], [], []>} : vector<8x8xbf16>, vector<8x8xbf16>, vector<8x8xf32> -> vector<8x8xf32>
    %cst_15 = arith.constant 0.353553385 : f32
    %42 = vector.broadcast %cst_15 : f32 to vector<8x8xf32>
    %43 = arith.mulf %41, %42 : vector<8x8xf32>
    %cst_16 = arith.constant dense<0xFF800000> : vector<8xf32>
    %44 = vector.multi_reduction <maximumf>, %43, %cst_16 [1] : vector<8x8xf32> to vector<8xf32>
    %45 = vector.shape_cast %44 : vector<8xf32> to vector<8x1xf32>
    %46 = vector.broadcast %45 : vector<8x1xf32> to vector<8x8xf32>
    %47 = arith.subf %43, %46 : vector<8x8xf32>
    %48 = math.exp %47 : vector<8x8xf32>
    %cst_17 = arith.constant dense<0.000000e+00> : vector<8xf32>
    %49 = vector.multi_reduction <add>, %48, %cst_17 [1] : vector<8x8xf32> to vector<8xf32>
    %50 = vector.shape_cast %49 : vector<8xf32> to vector<8x1xf32>
    %51 = tpu.reciprocal %50 : vector<8x1xf32> -> vector<8x1xf32>
    %52 = vector.broadcast %51 : vector<8x1xf32> to vector<8x8xf32>
    %53 = arith.mulf %48, %52 : vector<8x8xf32>
    %54 = arith.truncf %53 : vector<8x8xf32> to vector<8x8xbf16>
    %cst_18 = arith.constant dense<0.000000e+00> : vector<8x8xf32>
    %55 = tpu.matmul %54, %40, %cst_18 {dimension_numbers = #tpu.dot_dimension_numbers<[1], [0], [0], [1], [0, 0, 1, 1], [], []>} : vector<8x8xbf16>, vector<8x8xbf16>, vector<8x8xf32> -> vector<8x8xf32>
    %56 = vector.extract_strided_slice %6 {offsets = [8, 0], sizes = [8, 32], strides = [1, 1]} : vector<32x32xf32> to vector<8x32xf32>
    %57 = arith.truncf %56 : vector<8x32xf32> to vector<8x32xbf16>
    %58 = arith.truncf %55 : vector<8x8xf32> to vector<8x8xbf16>
    %cst_19 = arith.constant dense<0.000000e+00> : vector<8x32xf32>
    %59 = tpu.matmul %58, %57, %cst_19 {dimension_numbers = #tpu.dot_dimension_numbers<[1], [0], [0], [1], [0, 0, 1, 1], [], []>} : vector<8x8xbf16>, vector<8x32xbf16>, vector<8x32xf32> -> vector<8x32xf32>
    %60 = arith.addf %34, %59 : vector<8x32xf32>
    %61 = vector.extract_strided_slice %1 {offsets = [0, 16], sizes = [8, 8], strides = [1, 1]} : vector<8x32xf32> to vector<8x8xf32>
    %62 = arith.truncf %61 : vector<8x8xf32> to vector<8x8xbf16>
    %63 = vector.extract_strided_slice %4 {offsets = [0, 16], sizes = [8, 8], strides = [1, 1]} : vector<8x32xf32> to vector<8x8xf32>
    %64 = arith.truncf %63 : vector<8x8xf32> to vector<8x8xbf16>
    %65 = vector.extract_strided_slice %5 {offsets = [0, 16], sizes = [8, 8], strides = [1, 1]} : vector<8x32xf32> to vector<8x8xf32>
    %66 = arith.truncf %65 : vector<8x8xf32> to vector<8x8xbf16>
    %cst_20 = arith.constant dense<0.000000e+00> : vector<8x8xf32>
    %67 = tpu.matmul %62, %64, %cst_20 {dimension_numbers = #tpu.dot_dimension_numbers<[1], [1], [0], [0], [0, 0, 1, 0], [], []>} : vector<8x8xbf16>, vector<8x8xbf16>, vector<8x8xf32> -> vector<8x8xf32>
    %cst_21 = arith.constant 0.353553385 : f32
    %68 = vector.broadcast %cst_21 : f32 to vector<8x8xf32>
    %69 = arith.mulf %67, %68 : vector<8x8xf32>
    %cst_22 = arith.constant dense<0xFF800000> : vector<8xf32>
    %70 = vector.multi_reduction <maximumf>, %69, %cst_22 [1] : vector<8x8xf32> to vector<8xf32>
    %71 = vector.shape_cast %70 : vector<8xf32> to vector<8x1xf32>
    %72 = vector.broadcast %71 : vector<8x1xf32> to vector<8x8xf32>
    %73 = arith.subf %69, %72 : vector<8x8xf32>
    %74 = math.exp %73 : vector<8x8xf32>
    %cst_23 = arith.constant dense<0.000000e+00> : vector<8xf32>
    %75 = vector.multi_reduction <add>, %74, %cst_23 [1] : vector<8x8xf32> to vector<8xf32>
    %76 = vector.shape_cast %75 : vector<8xf32> to vector<8x1xf32>
    %77 = tpu.reciprocal %76 : vector<8x1xf32> -> vector<8x1xf32>
    %78 = vector.broadcast %77 : vector<8x1xf32> to vector<8x8xf32>
    %79 = arith.mulf %74, %78 : vector<8x8xf32>
    %80 = arith.truncf %79 : vector<8x8xf32> to vector<8x8xbf16>
    %cst_24 = arith.constant dense<0.000000e+00> : vector<8x8xf32>
    %81 = tpu.matmul %80, %66, %cst_24 {dimension_numbers = #tpu.dot_dimension_numbers<[1], [0], [0], [1], [0, 0, 1, 1], [], []>} : vector<8x8xbf16>, vector<8x8xbf16>, vector<8x8xf32> -> vector<8x8xf32>
    %82 = vector.extract_strided_slice %6 {offsets = [16, 0], sizes = [8, 32], strides = [1, 1]} : vector<32x32xf32> to vector<8x32xf32>
    %83 = arith.truncf %82 : vector<8x32xf32> to vector<8x32xbf16>
    %84 = arith.truncf %81 : vector<8x8xf32> to vector<8x8xbf16>
    %cst_25 = arith.constant dense<0.000000e+00> : vector<8x32xf32>
    %85 = tpu.matmul %84, %83, %cst_25 {dimension_numbers = #tpu.dot_dimension_numbers<[1], [0], [0], [1], [0, 0, 1, 1], [], []>} : vector<8x8xbf16>, vector<8x32xbf16>, vector<8x32xf32> -> vector<8x32xf32>
    %86 = arith.addf %60, %85 : vector<8x32xf32>
    %87 = vector.extract_strided_slice %1 {offsets = [0, 24], sizes = [8, 8], strides = [1, 1]} : vector<8x32xf32> to vector<8x8xf32>
    %88 = arith.truncf %87 : vector<8x8xf32> to vector<8x8xbf16>
    %89 = vector.extract_strided_slice %4 {offsets = [0, 24], sizes = [8, 8], strides = [1, 1]} : vector<8x32xf32> to vector<8x8xf32>
    %90 = arith.truncf %89 : vector<8x8xf32> to vector<8x8xbf16>
    %91 = vector.extract_strided_slice %5 {offsets = [0, 24], sizes = [8, 8], strides = [1, 1]} : vector<8x32xf32> to vector<8x8xf32>
    %92 = arith.truncf %91 : vector<8x8xf32> to vector<8x8xbf16>
    %cst_26 = arith.constant dense<0.000000e+00> : vector<8x8xf32>
    %93 = tpu.matmul %88, %90, %cst_26 {dimension_numbers = #tpu.dot_dimension_numbers<[1], [1], [0], [0], [0, 0, 1, 0], [], []>} : vector<8x8xbf16>, vector<8x8xbf16>, vector<8x8xf32> -> vector<8x8xf32>
    %cst_27 = arith.constant 0.353553385 : f32
    %94 = vector.broadcast %cst_27 : f32 to vector<8x8xf32>
    %95 = arith.mulf %93, %94 : vector<8x8xf32>
    %cst_28 = arith.constant dense<0xFF800000> : vector<8xf32>
    %96 = vector.multi_reduction <maximumf>, %95, %cst_28 [1] : vector<8x8xf32> to vector<8xf32>
    %97 = vector.shape_cast %96 : vector<8xf32> to vector<8x1xf32>
    %98 = vector.broadcast %97 : vector<8x1xf32> to vector<8x8xf32>
    %99 = arith.subf %95, %98 : vector<8x8xf32>
    %100 = math.exp %99 : vector<8x8xf32>
    %cst_29 = arith.constant dense<0.000000e+00> : vector<8xf32>
    %101 = vector.multi_reduction <add>, %100, %cst_29 [1] : vector<8x8xf32> to vector<8xf32>
    %102 = vector.shape_cast %101 : vector<8xf32> to vector<8x1xf32>
    %103 = tpu.reciprocal %102 : vector<8x1xf32> -> vector<8x1xf32>
    %104 = vector.broadcast %103 : vector<8x1xf32> to vector<8x8xf32>
    %105 = arith.mulf %100, %104 : vector<8x8xf32>
    %106 = arith.truncf %105 : vector<8x8xf32> to vector<8x8xbf16>
    %cst_30 = arith.constant dense<0.000000e+00> : vector<8x8xf32>
    %107 = tpu.matmul %106, %92, %cst_30 {dimension_numbers = #tpu.dot_dimension_numbers<[1], [0], [0], [1], [0, 0, 1, 1], [], []>} : vector<8x8xbf16>, vector<8x8xbf16>, vector<8x8xf32> -> vector<8x8xf32>
    %108 = vector.extract_strided_slice %6 {offsets = [24, 0], sizes = [8, 32], strides = [1, 1]} : vector<32x32xf32> to vector<8x32xf32>
    %109 = arith.truncf %108 : vector<8x32xf32> to vector<8x32xbf16>
    %110 = arith.truncf %107 : vector<8x8xf32> to vector<8x8xbf16>
    %cst_31 = arith.constant dense<0.000000e+00> : vector<8x32xf32>
    %111 = tpu.matmul %110, %109, %cst_31 {dimension_numbers = #tpu.dot_dimension_numbers<[1], [0], [0], [1], [0, 0, 1, 1], [], []>} : vector<8x8xbf16>, vector<8x32xbf16>, vector<8x32xf32> -> vector<8x32xf32>
    %112 = arith.addf %86, %111 : vector<8x32xf32>
    %c0_32 = arith.constant 0 : index
    %c0_33 = arith.constant 0 : index
    %c0_34 = arith.constant 0 : index
    %113 = vector.load %arg5[%c0_32, %c0_33, %c0_34] : memref<1x8x32xf32, #tpu.memory_space<vmem>>, vector<1x8x32xf32>
    %114 = vector.shape_cast %113 : vector<1x8x32xf32> to vector<8x32xf32>
    %115 = vector.shape_cast %112 : vector<8x32xf32> to vector<1x8x32xf32>
    tpu.vector_store %arg5[%c0_32, %c0_33, %c0_34], %115 {strides = array<i32>} : memref<1x8x32xf32, #tpu.memory_space<vmem>>, vector<1x8x32xf32>,
    return
  }
  func.func @transform_0(%arg0: i32) -> (i32, i32, i32) {
    %c0_i32 = arith.constant 0 : i32
    %c0_i32_0 = arith.constant 0 : i32
    %c0_i32_1 = arith.constant 0 : i32
    return %arg0, %c0_i32, %c0_i32_0 : i32, i32, i32
  }
  func.func @transform_1(%arg0: i32) -> (i32, i32, i32) {
    %c0_i32 = arith.constant 0 : i32
    %c0_i32_0 = arith.constant 0 : i32
    %c0_i32_1 = arith.constant 0 : i32
    return %arg0, %c0_i32, %c0_i32_0 : i32, i32, i32
  }
  func.func @transform_2(%arg0: i32) -> (i32, i32) {
    %c0_i32 = arith.constant 0 : i32
    %c0_i32_0 = arith.constant 0 : i32
    %c0_i32_1 = arith.constant 0 : i32
    return %c0_i32, %c0_i32_0 : i32, i32
  }
  func.func @transform_3(%arg0: i32) -> (i32, i32) {
    %c0_i32 = arith.constant 0 : i32
    %c0_i32_0 = arith.constant 0 : i32
    %c0_i32_1 = arith.constant 0 : i32
    return %c0_i32, %c0_i32_0 : i32, i32
  }
  func.func @transform_4(%arg0: i32) -> (i32, i32, i32) {
    %c0_i32 = arith.constant 0 : i32
    %c0_i32_0 = arith.constant 0 : i32
    %c0_i32_1 = arith.constant 0 : i32
    return %arg0, %c0_i32, %c0_i32_0 : i32, i32, i32
  }
}

module attributes {stable_mosaic.version = 11 : i64} {
  func.func @kernel(%arg0: i32, %arg1: memref<1x8x32xf32, #tpu.memory_space<vmem>>, %arg2: memref<1x8x32xf32, #tpu.memory_space<vmem>>, %arg3: memref<1x32xf32, #tpu.memory_space<vmem>>, %arg4: memref<1x32xf32, #tpu.memory_space<vmem>>, %arg5: memref<32x96xf32, #tpu.memory_space<vmem>>, %arg6: memref<1x96xf32, #tpu.memory_space<vmem>>, %arg7: memref<1x8x32xf32, #tpu.memory_space<vmem>>, %arg8: memref<1x8x32xf32, #tpu.memory_space<vmem>>, %arg9: memref<1x8x64xf32, #tpu.memory_space<vmem>>) attributes {dimension_semantics = [#tpu.dimension_semantics<parallel>], iteration_bounds = array<i64: 2>, scalar_prefetch = 0 : i64, scratch_operands = 0 : i64, tpu.core_type = #tpu.core_type<tc>, window_params = [{transform_indices = @transform_0, window_bounds = array<i64: 1, 8, 32>}, {transform_indices = @transform_1, window_bounds = array<i64: 1, 8, 32>}, {pipeline_mode = #tpu.pipeline_mode<synchronous>, transform_indices = @transform_2, window_bounds = array<i64: 1, 32>}, {pipeline_mode = #tpu.pipeline_mode<synchronous>, transform_indices = @transform_3, window_bounds = array<i64: 1, 32>}, {pipeline_mode = #tpu.pipeline_mode<synchronous>, transform_indices = @transform_4, window_bounds = array<i64: 32, 96>}, {pipeline_mode = #tpu.pipeline_mode<synchronous>, transform_indices = @transform_5, window_bounds = array<i64: 1, 96>}, {transform_indices = @transform_6, window_bounds = array<i64: 1, 8, 32>}, {transform_indices = @transform_7, window_bounds = array<i64: 1, 8, 32>}, {transform_indices = @transform_8, window_bounds = array<i64: 1, 8, 64>}]} {
    %c0 = arith.constant 0 : index
    %c0_0 = arith.constant 0 : index
    %c0_1 = arith.constant 0 : index
    %0 = vector.load %arg1[%c0, %c0_0, %c0_1] : memref<1x8x32xf32, #tpu.memory_space<vmem>>, vector<1x8x32xf32>
    %1 = vector.shape_cast %0 : vector<1x8x32xf32> to vector<8x32xf32>
    %c0_2 = arith.constant 0 : index
    %c0_3 = arith.constant 0 : index
    %c0_4 = arith.constant 0 : index
    %2 = vector.load %arg2[%c0_2, %c0_3, %c0_4] : memref<1x8x32xf32, #tpu.memory_space<vmem>>, vector<1x8x32xf32>
    %3 = vector.shape_cast %2 : vector<1x8x32xf32> to vector<8x32xf32>
    %4 = arith.addf %1, %3 : vector<8x32xf32>
    %c0_5 = arith.constant 0 : index
    %c0_6 = arith.constant 0 : index
    %5 = vector.load %arg3[%c0_5, %c0_6] : memref<1x32xf32, #tpu.memory_space<vmem>>, vector<1x32xf32>
    %c0_7 = arith.constant 0 : index
    %c0_8 = arith.constant 0 : index
    %6 = vector.load %arg4[%c0_7, %c0_8] : memref<1x32xf32, #tpu.memory_space<vmem>>, vector<1x32xf32>
    %c0_9 = arith.constant 0 : index
    %c0_10 = arith.constant 0 : index
    %7 = vector.load %arg6[%c0_9, %c0_10] : memref<1x96xf32, #tpu.memory_space<vmem>>, vector<1x96xf32>
    %c0_11 = arith.constant 0 : index
    %c0_12 = arith.constant 0 : index
    %c0_13 = arith.constant 0 : index
    %8 = vector.load %arg7[%c0_11, %c0_12, %c0_13] : memref<1x8x32xf32, #tpu.memory_space<vmem>>, vector<1x8x32xf32>
    %9 = vector.shape_cast %8 : vector<1x8x32xf32> to vector<8x32xf32>
    %10 = vector.shape_cast %4 : vector<8x32xf32> to vector<1x8x32xf32>
    tpu.vector_store %arg7[%c0_11, %c0_12, %c0_13], %10 {strides = array<i32>} : memref<1x8x32xf32, #tpu.memory_space<vmem>>, vector<1x8x32xf32>,
    %cst = arith.constant dense<0.000000e+00> : vector<8xf32>
    %11 = vector.multi_reduction <add>, %4, %cst [1] : vector<8x32xf32> to vector<8xf32>
    %12 = vector.shape_cast %11 : vector<8xf32> to vector<8x1xf32>
    %cst_14 = arith.constant 3.200000e+01 : f32
    %13 = vector.broadcast %cst_14 : f32 to vector<8x1xf32>
    %14 = arith.divf %12, %13 : vector<8x1xf32>
    %15 = vector.broadcast %14 : vector<8x1xf32> to vector<8x32xf32>
    %16 = arith.subf %4, %15 : vector<8x32xf32>
    %17 = arith.mulf %16, %16 : vector<8x32xf32>
    %cst_15 = arith.constant dense<0.000000e+00> : vector<8xf32>
    %18 = vector.multi_reduction <add>, %17, %cst_15 [1] : vector<8x32xf32> to vector<8xf32>
    %19 = vector.shape_cast %18 : vector<8xf32> to vector<8x1xf32>
    %cst_16 = arith.constant 0.0322580636 : f32
    %20 = vector.broadcast %cst_16 : f32 to vector<8x1xf32>
    %21 = arith.mulf %19, %20 : vector<8x1xf32>
    %22 = math.sqrt %21 : vector<8x1xf32>
    %cst_17 = arith.constant 9.99999997E-7 : f32
    %23 = vector.broadcast %cst_17 : f32 to vector<8x1xf32>
    %24 = arith.addf %22, %23 : vector<8x1xf32>
    %25 = tpu.reciprocal %24 : vector<8x1xf32> -> vector<8x1xf32>
    %26 = vector.broadcast %5 : vector<1x32xf32> to vector<8x32xf32>
    %27 = vector.broadcast %25 : vector<8x1xf32> to vector<8x32xf32>
    %28 = arith.mulf %26, %27 : vector<8x32xf32>
    %29 = arith.mulf %16, %28 : vector<8x32xf32>
    %30 = vector.broadcast %6 : vector<1x32xf32> to vector<8x32xf32>
    %31 = arith.addf %29, %30 : vector<8x32xf32>
    %32 = arith.truncf %31 : vector<8x32xf32> to vector<8x32xbf16>
    %c0_18 = arith.constant 0 : index
    %c0_19 = arith.constant 0 : index
    %33 = vector.load %arg5[%c0_18, %c0_19] : memref<32x96xf32, #tpu.memory_space<vmem>>, vector<32x96xf32>
    %34 = arith.truncf %33 : vector<32x96xf32> to vector<32x96xbf16>
    %cst_20 = arith.constant dense<0.000000e+00> : vector<8x96xf32>
    %35 = tpu.matmul %32, %34, %cst_20 {dimension_numbers = #tpu.dot_dimension_numbers<[1], [0], [0], [1], [0, 0, 1, 1], [], []>} : vector<8x32xbf16>, vector<32x96xbf16>, vector<8x96xf32> -> vector<8x96xf32>
    %36 = vector.broadcast %7 : vector<1x96xf32> to vector<8x96xf32>
    %37 = arith.addf %35, %36 : vector<8x96xf32>
    %38 = vector.extract_strided_slice %37 {offsets = [0, 0], sizes = [8, 32], strides = [1, 1]} : vector<8x96xf32> to vector<8x32xf32>
    %c0_21 = arith.constant 0 : index
    %c0_22 = arith.constant 0 : index
    %c0_23 = arith.constant 0 : index
    %39 = vector.load %arg8[%c0_21, %c0_22, %c0_23] : memref<1x8x32xf32, #tpu.memory_space<vmem>>, vector<1x8x32xf32>
    %40 = vector.shape_cast %39 : vector<1x8x32xf32> to vector<8x32xf32>
    %41 = vector.shape_cast %38 : vector<8x32xf32> to vector<1x8x32xf32>
    tpu.vector_store %arg8[%c0_21, %c0_22, %c0_23], %41 {strides = array<i32>} : memref<1x8x32xf32, #tpu.memory_space<vmem>>, vector<1x8x32xf32>,
    %42 = vector.extract_strided_slice %37 {offsets = [0, 32], sizes = [8, 64], strides = [1, 1]} : vector<8x96xf32> to vector<8x64xf32>
    %c0_24 = arith.constant 0 : index
    %c0_25 = arith.constant 0 : index
    %c0_26 = arith.constant 0 : index
    %43 = vector.load %arg9[%c0_24, %c0_25, %c0_26] : memref<1x8x64xf32, #tpu.memory_space<vmem>>, vector<1x8x64xf32>
    %44 = vector.shape_cast %43 : vector<1x8x64xf32> to vector<8x64xf32>
    %45 = vector.shape_cast %42 : vector<8x64xf32> to vector<1x8x64xf32>
    tpu.vector_store %arg9[%c0_24, %c0_25, %c0_26], %45 {strides = array<i32>} : memref<1x8x64xf32, #tpu.memory_space<vmem>>, vector<1x8x64xf32>,
    return
  }
  func.func @transform_0(%arg0: i32) -> (i32, i32, i32) {
    %c0_i32 = arith.constant 0 : i32
    %c0_i32_0 = arith.constant 0 : i32
    %c0_i32_1 = arith.constant 0 : i32
    return %arg0, %c0_i32, %c0_i32_0 : i32, i32, i32
  }
  func.func @transform_1(%arg0: i32) -> (i32, i32, i32) {
    %c0_i32 = arith.constant 0 : i32
    %c0_i32_0 = arith.constant 0 : i32
    %c0_i32_1 = arith.constant 0 : i32
    return %arg0, %c0_i32, %c0_i32_0 : i32, i32, i32
  }
  func.func @transform_2(%arg0: i32) -> (i32, i32) {
    %c0_i32 = arith.constant 0 : i32
    %c0_i32_0 = arith.constant 0 : i32
    %c0_i32_1 = arith.constant 0 : i32
    return %c0_i32, %c0_i32_0 : i32, i32
  }
  func.func @transform_3(%arg0: i32) -> (i32, i32) {
    %c0_i32 = arith.constant 0 : i32
    %c0_i32_0 = arith.constant 0 : i32
    %c0_i32_1 = arith.constant 0 : i32
    return %c0_i32, %c0_i32_0 : i32, i32
  }
  func.func @transform_4(%arg0: i32) -> (i32, i32) {
    %c0_i32 = arith.constant 0 : i32
    %c0_i32_0 = arith.constant 0 : i32
    %c0_i32_1 = arith.constant 0 : i32
    return %c0_i32, %c0_i32_0 : i32, i32
  }
  func.func @transform_5(%arg0: i32) -> (i32, i32) {
    %c0_i32 = arith.constant 0 : i32
    %c0_i32_0 = arith.constant 0 : i32
    %c0_i32_1 = arith.constant 0 : i32
    return %c0_i32, %c0_i32_0 : i32, i32
  }
  func.func @transform_6(%arg0: i32) -> (i32, i32, i32) {
    %c0_i32 = arith.constant 0 : i32
    %c0_i32_0 = arith.constant 0 : i32
    %c0_i32_1 = arith.constant 0 : i32
    return %arg0, %c0_i32, %c0_i32_0 : i32, i32, i32
  }
  func.func @transform_7(%arg0: i32) -> (i32, i32, i32) {
    %c0_i32 = arith.constant 0 : i32
    %c0_i32_0 = arith.constant 0 : i32
    %c0_i32_1 = arith.constant 0 : i32
    return %arg0, %c0_i32, %c0_i32_0 : i32, i32, i32
  }
  func.func @transform_8(%arg0: i32) -> (i32, i32, i32) {
    %c0_i32 = arith.constant 0 : i32
    %c0_i32_0 = arith.constant 0 : i32
    %c0_i32_1 = arith.constant 0 : i32
    return %arg0, %c0_i32, %c0_i32_0 : i32, i32, i32
  }
}

module attributes {stable_mosaic.version = 11 : i64} {
  func.func @kernel(%arg0: i32, %arg1: memref<1x8x32xf32, #tpu.memory_space<vmem>>, %arg2: memref<32x64xf32, #tpu.memory_space<vmem>>, %arg3: memref<1x64xf32, #tpu.memory_space<vmem>>, %arg4: memref<1x8x64xf32, #tpu.memory_space<vmem>>) attributes {dimension_semantics = [#tpu.dimension_semantics<parallel>], iteration_bounds = array<i64: 2>, scalar_prefetch = 0 : i64, scratch_operands = 0 : i64, tpu.core_type = #tpu.core_type<tc>, window_params = [{transform_indices = @transform_0, window_bounds = array<i64: 1, 8, 32>}, {pipeline_mode = #tpu.pipeline_mode<synchronous>, transform_indices = @transform_1, window_bounds = array<i64: 32, 64>}, {pipeline_mode = #tpu.pipeline_mode<synchronous>, transform_indices = @transform_2, window_bounds = array<i64: 1, 64>}, {transform_indices = @transform_3, window_bounds = array<i64: 1, 8, 64>}]} {
    %c0 = arith.constant 0 : index
    %c0_0 = arith.constant 0 : index
    %c0_1 = arith.constant 0 : index
    %0 = vector.load %arg1[%c0, %c0_0, %c0_1] : memref<1x8x32xf32, #tpu.memory_space<vmem>>, vector<1x8x32xf32>
    %1 = vector.shape_cast %0 : vector<1x8x32xf32> to vector<8x32xf32>
    %c0_2 = arith.constant 0 : index
    %c0_3 = arith.constant 0 : index
    %2 = vector.load %arg3[%c0_2, %c0_3] : memref<1x64xf32, #tpu.memory_space<vmem>>, vector<1x64xf32>
    %3 = arith.truncf %1 : vector<8x32xf32> to vector<8x32xbf16>
    %c0_4 = arith.constant 0 : index
    %c0_5 = arith.constant 0 : index
    %4 = vector.load %arg2[%c0_4, %c0_5] : memref<32x64xf32, #tpu.memory_space<vmem>>, vector<32x64xf32>
    %5 = arith.truncf %4 : vector<32x64xf32> to vector<32x64xbf16>
    %cst = arith.constant dense<0.000000e+00> : vector<8x64xf32>
    %6 = tpu.matmul %3, %5, %cst {dimension_numbers = #tpu.dot_dimension_numbers<[1], [0], [0], [1], [0, 0, 1, 1], [], []>} : vector<8x32xbf16>, vector<32x64xbf16>, vector<8x64xf32> -> vector<8x64xf32>
    %7 = vector.broadcast %2 : vector<1x64xf32> to vector<8x64xf32>
    %8 = arith.addf %6, %7 : vector<8x64xf32>
    %c0_6 = arith.constant 0 : index
    %c0_7 = arith.constant 0 : index
    %c0_8 = arith.constant 0 : index
    %9 = vector.load %arg4[%c0_6, %c0_7, %c0_8] : memref<1x8x64xf32, #tpu.memory_space<vmem>>, vector<1x8x64xf32>
    %10 = vector.shape_cast %9 : vector<1x8x64xf32> to vector<8x64xf32>
    %11 = vector.shape_cast %8 : vector<8x64xf32> to vector<1x8x64xf32>
    tpu.vector_store %arg4[%c0_6, %c0_7, %c0_8], %11 {strides = array<i32>} : memref<1x8x64xf32, #tpu.memory_space<vmem>>, vector<1x8x64xf32>,
    return
  }
  func.func @transform_0(%arg0: i32) -> (i32, i32, i32) {
    %c0_i32 = arith.constant 0 : i32
    %c0_i32_0 = arith.constant 0 : i32
    %c0_i32_1 = arith.constant 0 : i32
    return %arg0, %c0_i32, %c0_i32_0 : i32, i32, i32
  }
  func.func @transform_1(%arg0: i32) -> (i32, i32) {
    %c0_i32 = arith.constant 0 : i32
    %c0_i32_0 = arith.constant 0 : i32
    %c0_i32_1 = arith.constant 0 : i32
    return %c0_i32, %c0_i32_0 : i32, i32
  }
  func.func @transform_2(%arg0: i32) -> (i32, i32) {
    %c0_i32 = arith.constant 0 : i32
    %c0_i32_0 = arith.constant 0 : i32
    %c0_i32_1 = arith.constant 0 : i32
    return %c0_i32, %c0_i32_0 : i32, i32
  }
  func.func @transform_3(%arg0: i32) -> (i32, i32, i32) {
    %c0_i32 = arith.constant 0 : i32
    %c0_i32_0 = arith.constant 0 : i32
    %c0_i32_1 = arith.constant 0 : i32
    return %arg0, %c0_i32, %c0_i32_0 : i32, i32, i32
  }
}

module attributes {stable_mosaic.version = 11 : i64} {
  func.func @_add_ln_kernel(%arg0: i32, %arg1: memref<1x8x32xf32, #tpu.memory_space<vmem>>, %arg2: memref<1x8x32xf32, #tpu.memory_space<vmem>>, %arg3: memref<1x32xf32, #tpu.memory_space<vmem>>, %arg4: memref<1x32xf32, #tpu.memory_space<vmem>>, %arg5: memref<1x8x32xf32, #tpu.memory_space<vmem>>) attributes {dimension_semantics = [#tpu.dimension_semantics<parallel>], iteration_bounds = array<i64: 2>, scalar_prefetch = 0 : i64, scratch_operands = 0 : i64, tpu.core_type = #tpu.core_type<tc>, window_params = [{transform_indices = @transform_0, window_bounds = array<i64: 1, 8, 32>}, {transform_indices = @transform_1, window_bounds = array<i64: 1, 8, 32>}, {pipeline_mode = #tpu.pipeline_mode<synchronous>, transform_indices = @transform_2, window_bounds = array<i64: 1, 32>}, {pipeline_mode = #tpu.pipeline_mode<synchronous>, transform_indices = @transform_3, window_bounds = array<i64: 1, 32>}, {transform_indices = @transform_4, window_bounds = array<i64: 1, 8, 32>}]} {
    %c0 = arith.constant 0 : index
    %c0_0 = arith.constant 0 : index
    %c0_1 = arith.constant 0 : index
    %0 = vector.load %arg1[%c0, %c0_0, %c0_1] : memref<1x8x32xf32, #tpu.memory_space<vmem>>, vector<1x8x32xf32>
    %1 = vector.shape_cast %0 : vector<1x8x32xf32> to vector<8x32xf32>
    %c0_2 = arith.constant 0 : index
    %c0_3 = arith.constant 0 : index
    %c0_4 = arith.constant 0 : index
    %2 = vector.load %arg2[%c0_2, %c0_3, %c0_4] : memref<1x8x32xf32, #tpu.memory_space<vmem>>, vector<1x8x32xf32>
    %3 = vector.shape_cast %2 : vector<1x8x32xf32> to vector<8x32xf32>
    %4 = arith.addf %1, %3 : vector<8x32xf32>
    %c0_5 = arith.constant 0 : index
    %c0_6 = arith.constant 0 : index
    %5 = vector.load %arg3[%c0_5, %c0_6] : memref<1x32xf32, #tpu.memory_space<vmem>>, vector<1x32xf32>
    %c0_7 = arith.constant 0 : index
    %c0_8 = arith.constant 0 : index
    %6 = vector.load %arg4[%c0_7, %c0_8] : memref<1x32xf32, #tpu.memory_space<vmem>>, vector<1x32xf32>
    %cst = arith.constant dense<0.000000e+00> : vector<8xf32>
    %7 = vector.multi_reduction <add>, %4, %cst [1] : vector<8x32xf32> to vector<8xf32>
    %8 = vector.shape_cast %7 : vector<8xf32> to vector<8x1xf32>
    %cst_9 = arith.constant 3.200000e+01 : f32
    %9 = vector.broadcast %cst_9 : f32 to vector<8x1xf32>
    %10 = arith.divf %8, %9 : vector<8x1xf32>
    %11 = vector.broadcast %10 : vector<8x1xf32> to vector<8x32xf32>
    %12 = arith.subf %4, %11 : vector<8x32xf32>
    %13 = arith.mulf %12, %12 : vector<8x32xf32>
    %cst_10 = arith.constant dense<0.000000e+00> : vector<8xf32>
    %14 = vector.multi_reduction <add>, %13, %cst_10 [1] : vector<8x32xf32> to vector<8xf32>
    %15 = vector.shape_cast %14 : vector<8xf32> to vector<8x1xf32>
    %cst_11 = arith.constant 0.0322580636 : f32
    %16 = vector.broadcast %cst_11 : f32 to vector<8x1xf32>
    %17 = arith.mulf %15, %16 : vector<8x1xf32>
    %18 = math.sqrt %17 : vector<8x1xf32>
    %cst_12 = arith.constant 9.99999997E-7 : f32
    %19 = vector.broadcast %cst_12 : f32 to vector<8x1xf32>
    %20 = arith.addf %18, %19 : vector<8x1xf32>
    %21 = tpu.reciprocal %20 : vector<8x1xf32> -> vector<8x1xf32>
    %22 = vector.broadcast %5 : vector<1x32xf32> to vector<8x32xf32>
    %23 = vector.broadcast %21 : vector<8x1xf32> to vector<8x32xf32>
    %24 = arith.mulf %22, %23 : vector<8x32xf32>
    %25 = arith.mulf %12, %24 : vector<8x32xf32>
    %26 = vector.broadcast %6 : vector<1x32xf32> to vector<8x32xf32>
    %27 = arith.addf %25, %26 : vector<8x32xf32>
    %c0_13 = arith.constant 0 : index
    %c0_14 = arith.constant 0 : index
    %c0_15 = arith.constant 0 : index
    %28 = vector.load %arg5[%c0_13, %c0_14, %c0_15] : memref<1x8x32xf32, #tpu.memory_space<vmem>>, vector<1x8x32xf32>
    %29 = vector.shape_cast %28 : vector<1x8x32xf32> to vector<8x32xf32>
    %30 = vector.shape_cast %27 : vector<8x32xf32> to vector<1x8x32xf32>
    tpu.vector_store %arg5[%c0_13, %c0_14, %c0_15], %30 {strides = array<i32>} : memref<1x8x32xf32, #tpu.memory_space<vmem>>, vector<1x8x32xf32>,
    return
  }
  func.func @transform_0(%arg0: i32) -> (i32, i32, i32) {
    %c0_i32 = arith.constant 0 : i32
    %c0_i32_0 = arith.constant 0 : i32
    %c0_i32_1 = arith.constant 0 : i32
    return %arg0, %c0_i32, %c0_i32_0 : i32, i32, i32
  }
  func.func @transform_1(%arg0: i32) -> (i32, i32, i32) {
    %c0_i32 = arith.constant 0 : i32
    %c0_i32_0 = arith.constant 0 : i32
    %c0_i32_1 = arith.constant 0 : i32
    return %arg0, %c0_i32, %c0_i32_0 : i32, i32, i32
  }
  func.func @transform_2(%arg0: i32) -> (i32, i32) {
    %c0_i32 = arith.constant 0 : i32
    %c0_i32_0 = arith.constant 0 : i32
    %c0_i32_1 = arith.constant 0 : i32
    return %c0_i32, %c0_i32_0 : i32, i32
  }
  func.func @transform_3(%arg0: i32) -> (i32, i32) {
    %c0_i32 = arith.constant 0 : i32
    %c0_i32_0 = arith.constant 0 : i32
    %c0_i32_1 = arith.constant 0 : i32
    return %c0_i32, %c0_i32_0 : i32, i32
  }
  func.func @transform_4(%arg0: i32) -> (i32, i32, i32) {
    %c0_i32 = arith.constant 0 : i32
    %c0_i32_0 = arith.constant 0 : i32
    %c0_i32_1 = arith.constant 0 : i32
    return %arg0, %c0_i32, %c0_i32_0 : i32, i32, i32
  }
}

module attributes {stable_mosaic.version = 11 : i64} {
  func.func @kernel(%arg0: i32, %arg1: memref<1x8x32xf32, #tpu.memory_space<vmem>>, %arg2: memref<1x32xf32, #tpu.memory_space<vmem>>, %arg3: memref<1x32xf32, #tpu.memory_space<vmem>>, %arg4: memref<32x96xf32, #tpu.memory_space<vmem>>, %arg5: memref<1x96xf32, #tpu.memory_space<vmem>>, %arg6: memref<1x8x32xf32, #tpu.memory_space<vmem>>, %arg7: memref<1x8x64xf32, #tpu.memory_space<vmem>>) attributes {dimension_semantics = [#tpu.dimension_semantics<parallel>], iteration_bounds = array<i64: 2>, scalar_prefetch = 0 : i64, scratch_operands = 0 : i64, tpu.core_type = #tpu.core_type<tc>, window_params = [{transform_indices = @transform_0, window_bounds = array<i64: 1, 8, 32>}, {pipeline_mode = #tpu.pipeline_mode<synchronous>, transform_indices = @transform_1, window_bounds = array<i64: 1, 32>}, {pipeline_mode = #tpu.pipeline_mode<synchronous>, transform_indices = @transform_2, window_bounds = array<i64: 1, 32>}, {pipeline_mode = #tpu.pipeline_mode<synchronous>, transform_indices = @transform_3, window_bounds = array<i64: 32, 96>}, {pipeline_mode = #tpu.pipeline_mode<synchronous>, transform_indices = @transform_4, window_bounds = array<i64: 1, 96>}, {transform_indices = @transform_5, window_bounds = array<i64: 1, 8, 32>}, {transform_indices = @transform_6, window_bounds = array<i64: 1, 8, 64>}]} {
    %c0 = arith.constant 0 : index
    %c0_0 = arith.constant 0 : index
    %c0_1 = arith.constant 0 : index
    %0 = vector.load %arg1[%c0, %c0_0, %c0_1] : memref<1x8x32xf32, #tpu.memory_space<vmem>>, vector<1x8x32xf32>
    %1 = vector.shape_cast %0 : vector<1x8x32xf32> to vector<8x32xf32>
    %c0_2 = arith.constant 0 : index
    %c0_3 = arith.constant 0 : index
    %2 = vector.load %arg2[%c0_2, %c0_3] : memref<1x32xf32, #tpu.memory_space<vmem>>, vector<1x32xf32>
    %c0_4 = arith.constant 0 : index
    %c0_5 = arith.constant 0 : index
    %3 = vector.load %arg3[%c0_4, %c0_5] : memref<1x32xf32, #tpu.memory_space<vmem>>, vector<1x32xf32>
    %c0_6 = arith.constant 0 : index
    %c0_7 = arith.constant 0 : index
    %4 = vector.load %arg5[%c0_6, %c0_7] : memref<1x96xf32, #tpu.memory_space<vmem>>, vector<1x96xf32>
    %cst = arith.constant dense<0.000000e+00> : vector<8xf32>
    %5 = vector.multi_reduction <add>, %1, %cst [1] : vector<8x32xf32> to vector<8xf32>
    %6 = vector.shape_cast %5 : vector<8xf32> to vector<8x1xf32>
    %cst_8 = arith.constant 3.200000e+01 : f32
    %7 = vector.broadcast %cst_8 : f32 to vector<8x1xf32>
    %8 = arith.divf %6, %7 : vector<8x1xf32>
    %9 = vector.broadcast %8 : vector<8x1xf32> to vector<8x32xf32>
    %10 = arith.subf %1, %9 : vector<8x32xf32>
    %11 = arith.mulf %10, %10 : vector<8x32xf32>
    %cst_9 = arith.constant dense<0.000000e+00> : vector<8xf32>
    %12 = vector.multi_reduction <add>, %11, %cst_9 [1] : vector<8x32xf32> to vector<8xf32>
    %13 = vector.shape_cast %12 : vector<8xf32> to vector<8x1xf32>
    %cst_10 = arith.constant 0.0322580636 : f32
    %14 = vector.broadcast %cst_10 : f32 to vector<8x1xf32>
    %15 = arith.mulf %13, %14 : vector<8x1xf32>
    %16 = math.sqrt %15 : vector<8x1xf32>
    %cst_11 = arith.constant 9.99999997E-7 : f32
    %17 = vector.broadcast %cst_11 : f32 to vector<8x1xf32>
    %18 = arith.addf %16, %17 : vector<8x1xf32>
    %19 = tpu.reciprocal %18 : vector<8x1xf32> -> vector<8x1xf32>
    %20 = vector.broadcast %2 : vector<1x32xf32> to vector<8x32xf32>
    %21 = vector.broadcast %19 : vector<8x1xf32> to vector<8x32xf32>
    %22 = arith.mulf %20, %21 : vector<8x32xf32>
    %23 = arith.mulf %10, %22 : vector<8x32xf32>
    %24 = vector.broadcast %3 : vector<1x32xf32> to vector<8x32xf32>
    %25 = arith.addf %23, %24 : vector<8x32xf32>
    %26 = arith.truncf %25 : vector<8x32xf32> to vector<8x32xbf16>
    %c0_12 = arith.constant 0 : index
    %c0_13 = arith.constant 0 : index
    %27 = vector.load %arg4[%c0_12, %c0_13] : memref<32x96xf32, #tpu.memory_space<vmem>>, vector<32x96xf32>
    %28 = arith.truncf %27 : vector<32x96xf32> to vector<32x96xbf16>
    %cst_14 = arith.constant dense<0.000000e+00> : vector<8x96xf32>
    %29 = tpu.matmul %26, %28, %cst_14 {dimension_numbers = #tpu.dot_dimension_numbers<[1], [0], [0], [1], [0, 0, 1, 1], [], []>} : vector<8x32xbf16>, vector<32x96xbf16>, vector<8x96xf32> -> vector<8x96xf32>
    %30 = vector.broadcast %4 : vector<1x96xf32> to vector<8x96xf32>
    %31 = arith.addf %29, %30 : vector<8x96xf32>
    %32 = vector.extract_strided_slice %31 {offsets = [0, 0], sizes = [8, 32], strides = [1, 1]} : vector<8x96xf32> to vector<8x32xf32>
    %c0_15 = arith.constant 0 : index
    %c0_16 = arith.constant 0 : index
    %c0_17 = arith.constant 0 : index
    %33 = vector.load %arg6[%c0_15, %c0_16, %c0_17] : memref<1x8x32xf32, #tpu.memory_space<vmem>>, vector<1x8x32xf32>
    %34 = vector.shape_cast %33 : vector<1x8x32xf32> to vector<8x32xf32>
    %35 = vector.shape_cast %32 : vector<8x32xf32> to vector<1x8x32xf32>
    tpu.vector_store %arg6[%c0_15, %c0_16, %c0_17], %35 {strides = array<i32>} : memref<1x8x32xf32, #tpu.memory_space<vmem>>, vector<1x8x32xf32>,
    %36 = vector.extract_strided_slice %31 {offsets = [0, 32], sizes = [8, 64], strides = [1, 1]} : vector<8x96xf32> to vector<8x64xf32>
    %c0_18 = arith.constant 0 : index
    %c0_19 = arith.constant 0 : index
    %c0_20 = arith.constant 0 : index
    %37 = vector.load %arg7[%c0_18, %c0_19, %c0_20] : memref<1x8x64xf32, #tpu.memory_space<vmem>>, vector<1x8x64xf32>
    %38 = vector.shape_cast %37 : vector<1x8x64xf32> to vector<8x64xf32>
    %39 = vector.shape_cast %36 : vector<8x64xf32> to vector<1x8x64xf32>
    tpu.vector_store %arg7[%c0_18, %c0_19, %c0_20], %39 {strides = array<i32>} : memref<1x8x64xf32, #tpu.memory_space<vmem>>, vector<1x8x64xf32>,
    return
  }
  func.func @transform_0(%arg0: i32) -> (i32, i32, i32) {
    %c0_i32 = arith.constant 0 : i32
    %c0_i32_0 = arith.constant 0 : i32
    %c0_i32_1 = arith.constant 0 : i32
    return %arg0, %c0_i32, %c0_i32_0 : i32, i32, i32
  }
  func.func @transform_1(%arg0: i32) -> (i32, i32) {
    %c0_i32 = arith.constant 0 : i32
    %c0_i32_0 = arith.constant 0 : i32
    %c0_i32_1 = arith.constant 0 : i32
    return %c0_i32, %c0_i32_0 : i32, i32
  }
  func.func @transform_2(%arg0: i32) -> (i32, i32) {
    %c0_i32 = arith.constant 0 : i32
    %c0_i32_0 = arith.constant 0 : i32
    %c0_i32_1 = arith.constant 0 : i32
    return %c0_i32, %c0_i32_0 : i32, i32
  }
  func.func @transform_3(%arg0: i32) -> (i32, i32) {
    %c0_i32 = arith.constant 0 : i32
    %c0_i32_0 = arith.constant 0 : i32
    %c0_i32_1 = arith.constant 0 : i32
    return %c0_i32, %c0_i32_0 : i32, i32
  }
  func.func @transform_4(%arg0: i32) -> (i32, i32) {
    %c0_i32 = arith.constant 0 : i32
    %c0_i32_0 = arith.constant 0 : i32
    %c0_i32_1 = arith.constant 0 : i32
    return %c0_i32, %c0_i32_0 : i32, i32
  }
  func.func @transform_5(%arg0: i32) -> (i32, i32, i32) {
    %c0_i32 = arith.constant 0 : i32
    %c0_i32_0 = arith.constant 0 : i32
    %c0_i32_1 = arith.constant 0 : i32
    return %arg0, %c0_i32, %c0_i32_0 : i32, i32, i32
  }
  func.func @transform_6(%arg0: i32) -> (i32, i32, i32) {
    %c0_i32 = arith.constant 0 : i32
    %c0_i32_0 = arith.constant 0 : i32
    %c0_i32_1 = arith.constant 0 : i32
    return %arg0, %c0_i32, %c0_i32_0 : i32, i32, i32
  }
}

module attributes {stable_mosaic.version = 11 : i64} {
  func.func @kernel(%arg0: i32, %arg1: memref<1x8x32xf32, #tpu.memory_space<vmem>>, %arg2: memref<1x8x32xf32, #tpu.memory_space<vmem>>, %arg3: memref<1x32xf32, #tpu.memory_space<vmem>>, %arg4: memref<1x32xf32, #tpu.memory_space<vmem>>, %arg5: memref<32x32xf32, #tpu.memory_space<vmem>>, %arg6: memref<1x32xf32, #tpu.memory_space<vmem>>, %arg7: memref<1x8x32xf32, #tpu.memory_space<vmem>>, %arg8: memref<1x8x32xf32, #tpu.memory_space<vmem>>) attributes {dimension_semantics = [#tpu.dimension_semantics<parallel>], iteration_bounds = array<i64: 2>, scalar_prefetch = 0 : i64, scratch_operands = 0 : i64, tpu.core_type = #tpu.core_type<tc>, window_params = [{transform_indices = @transform_0, window_bounds = array<i64: 1, 8, 32>}, {transform_indices = @transform_1, window_bounds = array<i64: 1, 8, 32>}, {pipeline_mode = #tpu.pipeline_mode<synchronous>, transform_indices = @transform_2, window_bounds = array<i64: 1, 32>}, {pipeline_mode = #tpu.pipeline_mode<synchronous>, transform_indices = @transform_3, window_bounds = array<i64: 1, 32>}, {pipeline_mode = #tpu.pipeline_mode<synchronous>, transform_indices = @transform_4, window_bounds = array<i64: 32, 32>}, {pipeline_mode = #tpu.pipeline_mode<synchronous>, transform_indices = @transform_5, window_bounds = array<i64: 1, 32>}, {transform_indices = @transform_6, window_bounds = array<i64: 1, 8, 32>}, {transform_indices = @transform_7, window_bounds = array<i64: 1, 8, 32>}]} {
    %c0 = arith.constant 0 : index
    %c0_0 = arith.constant 0 : index
    %c0_1 = arith.constant 0 : index
    %0 = vector.load %arg1[%c0, %c0_0, %c0_1] : memref<1x8x32xf32, #tpu.memory_space<vmem>>, vector<1x8x32xf32>
    %1 = vector.shape_cast %0 : vector<1x8x32xf32> to vector<8x32xf32>
    %c0_2 = arith.constant 0 : index
    %c0_3 = arith.constant 0 : index
    %c0_4 = arith.constant 0 : index
    %2 = vector.load %arg2[%c0_2, %c0_3, %c0_4] : memref<1x8x32xf32, #tpu.memory_space<vmem>>, vector<1x8x32xf32>
    %3 = vector.shape_cast %2 : vector<1x8x32xf32> to vector<8x32xf32>
    %4 = arith.addf %1, %3 : vector<8x32xf32>
    %c0_5 = arith.constant 0 : index
    %c0_6 = arith.constant 0 : index
    %5 = vector.load %arg3[%c0_5, %c0_6] : memref<1x32xf32, #tpu.memory_space<vmem>>, vector<1x32xf32>
    %c0_7 = arith.constant 0 : index
    %c0_8 = arith.constant 0 : index
    %6 = vector.load %arg4[%c0_7, %c0_8] : memref<1x32xf32, #tpu.memory_space<vmem>>, vector<1x32xf32>
    %c0_9 = arith.constant 0 : index
    %c0_10 = arith.constant 0 : index
    %7 = vector.load %arg6[%c0_9, %c0_10] : memref<1x32xf32, #tpu.memory_space<vmem>>, vector<1x32xf32>
    %c0_11 = arith.constant 0 : index
    %c0_12 = arith.constant 0 : index
    %c0_13 = arith.constant 0 : index
    %8 = vector.load %arg7[%c0_11, %c0_12, %c0_13] : memref<1x8x32xf32, #tpu.memory_space<vmem>>, vector<1x8x32xf32>
    %9 = vector.shape_cast %8 : vector<1x8x32xf32> to vector<8x32xf32>
    %10 = vector.shape_cast %4 : vector<8x32xf32> to vector<1x8x32xf32>
    tpu.vector_store %arg7[%c0_11, %c0_12, %c0_13], %10 {strides = array<i32>} : memref<1x8x32xf32, #tpu.memory_space<vmem>>, vector<1x8x32xf32>,
    %cst = arith.constant dense<0.000000e+00> : vector<8xf32>
    %11 = vector.multi_reduction <add>, %4, %cst [1] : vector<8x32xf32> to vector<8xf32>
    %12 = vector.shape_cast %11 : vector<8xf32> to vector<8x1xf32>
    %cst_14 = arith.constant 3.200000e+01 : f32
    %13 = vector.broadcast %cst_14 : f32 to vector<8x1xf32>
    %14 = arith.divf %12, %13 : vector<8x1xf32>
    %15 = vector.broadcast %14 : vector<8x1xf32> to vector<8x32xf32>
    %16 = arith.subf %4, %15 : vector<8x32xf32>
    %17 = arith.mulf %16, %16 : vector<8x32xf32>
    %cst_15 = arith.constant dense<0.000000e+00> : vector<8xf32>
    %18 = vector.multi_reduction <add>, %17, %cst_15 [1] : vector<8x32xf32> to vector<8xf32>
    %19 = vector.shape_cast %18 : vector<8xf32> to vector<8x1xf32>
    %cst_16 = arith.constant 0.0322580636 : f32
    %20 = vector.broadcast %cst_16 : f32 to vector<8x1xf32>
    %21 = arith.mulf %19, %20 : vector<8x1xf32>
    %22 = math.sqrt %21 : vector<8x1xf32>
    %cst_17 = arith.constant 9.99999997E-7 : f32
    %23 = vector.broadcast %cst_17 : f32 to vector<8x1xf32>
    %24 = arith.addf %22, %23 : vector<8x1xf32>
    %25 = tpu.reciprocal %24 : vector<8x1xf32> -> vector<8x1xf32>
    %26 = vector.broadcast %5 : vector<1x32xf32> to vector<8x32xf32>
    %27 = vector.broadcast %25 : vector<8x1xf32> to vector<8x32xf32>
    %28 = arith.mulf %26, %27 : vector<8x32xf32>
    %29 = arith.mulf %16, %28 : vector<8x32xf32>
    %30 = vector.broadcast %6 : vector<1x32xf32> to vector<8x32xf32>
    %31 = arith.addf %29, %30 : vector<8x32xf32>
    %32 = arith.truncf %31 : vector<8x32xf32> to vector<8x32xbf16>
    %c0_18 = arith.constant 0 : index
    %c0_19 = arith.constant 0 : index
    %33 = vector.load %arg5[%c0_18, %c0_19] : memref<32x32xf32, #tpu.memory_space<vmem>>, vector<32x32xf32>
    %34 = arith.truncf %33 : vector<32x32xf32> to vector<32x32xbf16>
    %cst_20 = arith.constant dense<0.000000e+00> : vector<8x32xf32>
    %35 = tpu.matmul %32, %34, %cst_20 {dimension_numbers = #tpu.dot_dimension_numbers<[1], [0], [0], [1], [0, 0, 1, 1], [], []>} : vector<8x32xbf16>, vector<32x32xbf16>, vector<8x32xf32> -> vector<8x32xf32>
    %36 = vector.broadcast %7 : vector<1x32xf32> to vector<8x32xf32>
    %37 = arith.addf %35, %36 : vector<8x32xf32>
    %c0_21 = arith.constant 0 : index
    %c0_22 = arith.constant 0 : index
    %c0_23 = arith.constant 0 : index
    %38 = vector.load %arg8[%c0_21, %c0_22, %c0_23] : memref<1x8x32xf32, #tpu.memory_space<vmem>>, vector<1x8x32xf32>
    %39 = vector.shape_cast %38 : vector<1x8x32xf32> to vector<8x32xf32>
    %40 = vector.shape_cast %37 : vector<8x32xf32> to vector<1x8x32xf32>
    tpu.vector_store %arg8[%c0_21, %c0_22, %c0_23], %40 {strides = array<i32>} : memref<1x8x32xf32, #tpu.memory_space<vmem>>, vector<1x8x32xf32>,
    return
  }
  func.func @transform_0(%arg0: i32) -> (i32, i32, i32) {
    %c0_i32 = arith.constant 0 : i32
    %c0_i32_0 = arith.constant 0 : i32
    %c0_i32_1 = arith.constant 0 : i32
    return %arg0, %c0_i32, %c0_i32_0 : i32, i32, i32
  }
  func.func @transform_1(%arg0: i32) -> (i32, i32, i32) {
    %c0_i32 = arith.constant 0 : i32
    %c0_i32_0 = arith.constant 0 : i32
    %c0_i32_1 = arith.constant 0 : i32
    return %arg0, %c0_i32, %c0_i32_0 : i32, i32, i32
  }
  func.func @transform_2(%arg0: i32) -> (i32, i32) {
    %c0_i32 = arith.constant 0 : i32
    %c0_i32_0 = arith.constant 0 : i32
    %c0_i32_1 = arith.constant 0 : i32
    return %c0_i32, %c0_i32_0 : i32, i32
  }
  func.func @transform_3(%arg0: i32) -> (i32, i32) {
    %c0_i32 = arith.constant 0 : i32
    %c0_i32_0 = arith.constant 0 : i32
    %c0_i32_1 = arith.constant 0 : i32
    return %c0_i32, %c0_i32_0 : i32, i32
  }
  func.func @transform_4(%arg0: i32) -> (i32, i32) {
    %c0_i32 = arith.constant 0 : i32
    %c0_i32_0 = arith.constant 0 : i32
    %c0_i32_1 = arith.constant 0 : i32
    return %c0_i32, %c0_i32_0 : i32, i32
  }
  func.func @transform_5(%arg0: i32) -> (i32, i32) {
    %c0_i32 = arith.constant 0 : i32
    %c0_i32_0 = arith.constant 0 : i32
    %c0_i32_1 = arith.constant 0 : i32
    return %c0_i32, %c0_i32_0 : i32, i32
  }
  func.func @transform_6(%arg0: i32) -> (i32, i32, i32) {
    %c0_i32 = arith.constant 0 : i32
    %c0_i32_0 = arith.constant 0 : i32
    %c0_i32_1 = arith.constant 0 : i32
    return %arg0, %c0_i32, %c0_i32_0 : i32, i32, i32
  }
  func.func @transform_7(%arg0: i32) -> (i32, i32, i32) {
    %c0_i32 = arith.constant 0 : i32
    %c0_i32_0 = arith.constant 0 : i32
    %c0_i32_1 = arith.constant 0 : i32
    return %arg0, %c0_i32, %c0_i32_0 : i32, i32, i32
  }
}

module attributes {stable_mosaic.version = 11 : i64} {
  func.func @_add_ln_kernel(%arg0: i32, %arg1: memref<1x8x32xf32, #tpu.memory_space<vmem>>, %arg2: memref<1x8x32xf32, #tpu.memory_space<vmem>>, %arg3: memref<1x32xf32, #tpu.memory_space<vmem>>, %arg4: memref<1x32xf32, #tpu.memory_space<vmem>>, %arg5: memref<1x8x32xf32, #tpu.memory_space<vmem>>) attributes {dimension_semantics = [#tpu.dimension_semantics<parallel>], iteration_bounds = array<i64: 2>, scalar_prefetch = 0 : i64, scratch_operands = 0 : i64, tpu.core_type = #tpu.core_type<tc>, window_params = [{transform_indices = @transform_0, window_bounds = array<i64: 1, 8, 32>}, {transform_indices = @transform_1, window_bounds = array<i64: 1, 8, 32>}, {pipeline_mode = #tpu.pipeline_mode<synchronous>, transform_indices = @transform_2, window_bounds = array<i64: 1, 32>}, {pipeline_mode = #tpu.pipeline_mode<synchronous>, transform_indices = @transform_3, window_bounds = array<i64: 1, 32>}, {transform_indices = @transform_4, window_bounds = array<i64: 1, 8, 32>}]} {
    %c0 = arith.constant 0 : index
    %c0_0 = arith.constant 0 : index
    %c0_1 = arith.constant 0 : index
    %0 = vector.load %arg1[%c0, %c0_0, %c0_1] : memref<1x8x32xf32, #tpu.memory_space<vmem>>, vector<1x8x32xf32>
    %1 = vector.shape_cast %0 : vector<1x8x32xf32> to vector<8x32xf32>
    %c0_2 = arith.constant 0 : index
    %c0_3 = arith.constant 0 : index
    %c0_4 = arith.constant 0 : index
    %2 = vector.load %arg2[%c0_2, %c0_3, %c0_4] : memref<1x8x32xf32, #tpu.memory_space<vmem>>, vector<1x8x32xf32>
    %3 = vector.shape_cast %2 : vector<1x8x32xf32> to vector<8x32xf32>
    %4 = arith.addf %1, %3 : vector<8x32xf32>
    %c0_5 = arith.constant 0 : index
    %c0_6 = arith.constant 0 : index
    %5 = vector.load %arg3[%c0_5, %c0_6] : memref<1x32xf32, #tpu.memory_space<vmem>>, vector<1x32xf32>
    %c0_7 = arith.constant 0 : index
    %c0_8 = arith.constant 0 : index
    %6 = vector.load %arg4[%c0_7, %c0_8] : memref<1x32xf32, #tpu.memory_space<vmem>>, vector<1x32xf32>
    %cst = arith.constant dense<0.000000e+00> : vector<8xf32>
    %7 = vector.multi_reduction <add>, %4, %cst [1] : vector<8x32xf32> to vector<8xf32>
    %8 = vector.shape_cast %7 : vector<8xf32> to vector<8x1xf32>
    %cst_9 = arith.constant 3.200000e+01 : f32
    %9 = vector.broadcast %cst_9 : f32 to vector<8x1xf32>
    %10 = arith.divf %8, %9 : vector<8x1xf32>
    %11 = vector.broadcast %10 : vector<8x1xf32> to vector<8x32xf32>
    %12 = arith.subf %4, %11 : vector<8x32xf32>
    %13 = arith.mulf %12, %12 : vector<8x32xf32>
    %cst_10 = arith.constant dense<0.000000e+00> : vector<8xf32>
    %14 = vector.multi_reduction <add>, %13, %cst_10 [1] : vector<8x32xf32> to vector<8xf32>
    %15 = vector.shape_cast %14 : vector<8xf32> to vector<8x1xf32>
    %cst_11 = arith.constant 0.0322580636 : f32
    %16 = vector.broadcast %cst_11 : f32 to vector<8x1xf32>
    %17 = arith.mulf %15, %16 : vector<8x1xf32>
    %18 = math.sqrt %17 : vector<8x1xf32>
    %cst_12 = arith.constant 9.99999997E-7 : f32
    %19 = vector.broadcast %cst_12 : f32 to vector<8x1xf32>
    %20 = arith.addf %18, %19 : vector<8x1xf32>
    %21 = tpu.reciprocal %20 : vector<8x1xf32> -> vector<8x1xf32>
    %22 = vector.broadcast %5 : vector<1x32xf32> to vector<8x32xf32>
    %23 = vector.broadcast %21 : vector<8x1xf32> to vector<8x32xf32>
    %24 = arith.mulf %22, %23 : vector<8x32xf32>
    %25 = arith.mulf %12, %24 : vector<8x32xf32>
    %26 = vector.broadcast %6 : vector<1x32xf32> to vector<8x32xf32>
    %27 = arith.addf %25, %26 : vector<8x32xf32>
    %c0_13 = arith.constant 0 : index
    %c0_14 = arith.constant 0 : index
    %c0_15 = arith.constant 0 : index
    %28 = vector.load %arg5[%c0_13, %c0_14, %c0_15] : memref<1x8x32xf32, #tpu.memory_space<vmem>>, vector<1x8x32xf32>
    %29 = vector.shape_cast %28 : vector<1x8x32xf32> to vector<8x32xf32>
    %30 = vector.shape_cast %27 : vector<8x32xf32> to vector<1x8x32xf32>
    tpu.vector_store %arg5[%c0_13, %c0_14, %c0_15], %30 {strides = array<i32>} : memref<1x8x32xf32, #tpu.memory_space<vmem>>, vector<1x8x32xf32>,
    return
  }
  func.func @transform_0(%arg0: i32) -> (i32, i32, i32) {
    %c0_i32 = arith.constant 0 : i32
    %c0_i32_0 = arith.constant 0 : i32
    %c0_i32_1 = arith.constant 0 : i32
    return %arg0, %c0_i32, %c0_i32_0 : i32, i32, i32
  }
  func.func @transform_1(%arg0: i32) -> (i32, i32, i32) {
    %c0_i32 = arith.constant 0 : i32
    %c0_i32_0 = arith.constant 0 : i32
    %c0_i32_1 = arith.constant 0 : i32
    return %arg0, %c0_i32, %c0_i32_0 : i32, i32, i32
  }
  func.func @transform_2(%arg0: i32) -> (i32, i32) {
    %c0_i32 = arith.constant 0 : i32
    %c0_i32_0 = arith.constant 0 : i32
    %c0_i32_1 = arith.constant 0 : i32
    return %c0_i32, %c0_i32_0 : i32, i32
  }
  func.func @transform_3(%arg0: i32) -> (i32, i32) {
    %c0_i32 = arith.constant 0 : i32
    %c0_i32_0 = arith.constant 0 : i32
    %c0_i32_1 = arith.constant 0 : i32
    return %c0_i32, %c0_i32_0 : i32, i32
  }
  func.func @transform_4(%arg0: i32) -> (i32, i32, i32) {
    %c0_i32 = arith.constant 0 : i32
    %c0_i32_0 = arith.constant 0 : i32
    %c0_i32_1 = arith.constant 0 : i32
    return %arg0, %c0_i32, %c0_i32_0 : i32, i32, i32
  }
}

</mosaic_0001>

<llo_original>
// kernel: _lambda_.42
$region0: #{_lambda_.42}
  #allocation0 [shape = 'u32[]', space=smem, size = 0x4, offset = 0x4, fixed_abs, tag = 'smem constant byte address 0x4 - core index']
  #allocation1 [shape = 'u32[144,128]{1,0:T(1,128)}', space=vmem, size = 0x12000, scoped, tag = 'internal scratch']
  %s0 = inlined_call_operand.vmem [shape: f32[2,8,32], index: 0, kind: input, shape index: {}]
  %s1 = inlined_call_operand.vmem [shape: f32[2,8,32], index: 1, kind: input, shape index: {}]
  %s2 = inlined_call_operand.vmem [shape: f32[1,32], index: 2, kind: input, shape index: {}]
  %s3 = inlined_call_operand.vmem [shape: f32[1,32], index: 3, kind: input, shape index: {}]
  %s4 = inlined_call_operand.vmem [shape: f32[32,64], index: 4, kind: input, shape index: {}]
  %s5 = inlined_call_operand.vmem [shape: f32[1,64], index: 5, kind: input, shape index: {}]
  %s6 = inlined_call_operand.vmem [shape: f32[64,32], index: 6, kind: input, shape index: {}]
  %s7 = inlined_call_operand.vmem [shape: f32[1,32], index: 7, kind: input, shape index: {}]
  %s8 = inlined_call_operand.vmem [shape: f32[2,8,32], index: 8, kind: output, shape index: {0}]
  %s9 = inlined_call_operand.vmem [shape: f32[2,8,32], index: 9, kind: output, shape index: {1}]
  %10 = xla_tuple %s8, %s9
  %s11 = sld [smem:[#allocation0]]
  $region73: #{_lambda_.42} parent=0
    _
  %s13 = ssub.s32 1, %s11
  %s14 = scalar_select 0, %s13, %s11
  loop: start=0, step=1, limit=4
  $region2: #{_lambda_.42} parent=0 // loop_pre_header
    _
  $region3: #{_lambda_.42} parent=0 // loop_header
    %s16 = sphi 0, %s20
    %p17 = scmp.ge.s32.totalorder %s16, 4
    %s26 = sphi 0, %s28
    %s29 = sphi 0, %s26
    %s30 = sphi 0, %s29
    %s46 = sphi 0, %s30
    %s52 = sphi 0, %s54
    %s55 = sphi 0, %s52
    %s56 = sphi 0, %s55
    %s72 = sphi 0, %s56
    %s76 = sphi 0, %s76
    %s78 = sphi 0, %s76
    %s79 = sphi 0, %s78
    %s93 = sphi 0, %s79
    %s97 = sphi 0, %s97
    %s99 = sphi 0, %s97
    %s100 = sphi 0, %s99
    %s114 = sphi 0, %s100
    %s118 = sphi 0, %s118
    %s120 = sphi 0, %s118
    %s121 = sphi 0, %s120
    %s135 = sphi 0, %s121
    %s139 = sphi 0, %s139
    %s141 = sphi 0, %s139
    %s142 = sphi 0, %s141
    %s156 = sphi 0, %s142
    %s160 = sphi 0, %s160
    %s162 = sphi 0, %s160
    %s163 = sphi 0, %s162
    %s177 = sphi 0, %s163
    %s181 = sphi 0, %s181
    %s183 = sphi 0, %s181
    %s184 = sphi 0, %s183
    %s198 = sphi 0, %s184
    %s204 = sphi 0, %s206
    %s207 = sphi 0, %s204
    %s208 = sphi 0, %s207
    %s224 = sphi 0, %s208
    %s230 = sphi 0, %s232
    %s233 = sphi 0, %s230
    %s234 = sphi 0, %s233
    %s250 = sphi 0, %s234
  $region4: #{_lambda_.42} parent=0 // loop_header_branch
    %19 = sbr.rel (%p17) target = $region8
  $region5: #{_lambda_.42} parent=0 // loop_body
    %s21 = ssub.s32 %s16, 1
    %s22 = ssub.s32 %s16, 2
    %s23 = sadd.s32 %s16, 1
    %s24 = ssub.s32 %s16, %s23
    %p25 = scmp.eq.s32.totalorder %s24, 0
    %s27 = sadd.s32 %s26, 1
    %s28 = scalar_select %p25, %s26, %s27
    %p31 = pneg %p25
    %p32 = scmp.eq.s32.totalorder %s16, 1
    %p33 = por %p31, %p32
    %p34 = scmp.ne.s32.totalorder %s26, %s29
    %p35 = scmp.eq.s32.totalorder %s16, 0
    %p36 = por %p34, %p35
    %p37 = scmp.ne.s32.totalorder %s26, %s29
    %p38 = scmp.eq.s32.totalorder %s21, 1
    %p39 = por %p37, %p38
    %p40 = scmp.ne.s32.totalorder %s29, %s30
    %p41 = scmp.eq.s32.totalorder %s21, 0
    %p42 = por %p40, %p41
    %p43 = scmp.ne.s32.totalorder %s29, %s30
    %p44 = scmp.eq.s32.totalorder %s22, 1
    %p45 = por %p43, %p44
    %p47 = scmp.ne.s32.totalorder %s30, %s46
    %p48 = scmp.eq.s32.totalorder %s22, 0
    %p49 = por %p47, %p48
    %s50 = ssub.s32 %s16, %s23
    %p51 = scmp.eq.s32.totalorder %s50, 0
    %s53 = sadd.s32 %s52, 1
    %s54 = scalar_select %p51, %s52, %s53
    %p57 = pneg %p51
    %p58 = scmp.eq.s32.totalorder %s16, 1
    %p59 = por %p57, %p58
    %p60 = scmp.ne.s32.totalorder %s52, %s55
    %p61 = scmp.eq.s32.totalorder %s16, 0
    %p62 = por %p60, %p61
    %p63 = scmp.ne.s32.totalorder %s52, %s55
    %p64 = scmp.eq.s32.totalorder %s21, 1
    %p65 = por %p63, %p64
    %p66 = scmp.ne.s32.totalorder %s55, %s56
    %p67 = scmp.eq.s32.totalorder %s21, 0
    %p68 = por %p66, %p67
    %p69 = scmp.ne.s32.totalorder %s55, %s56
    %p70 = scmp.eq.s32.totalorder %s22, 1
    %p71 = por %p69, %p70
    %p73 = scmp.ne.s32.totalorder %s56, %s72
    %p74 = scmp.eq.s32.totalorder %s22, 0
    %p75 = por %p73, %p74
    %s77 = sadd.s32 %s76, 1
    %p80 = scmp.eq.s32.totalorder %s16, 1
    %p81 = scmp.ne.s32.totalorder %s76, %s78
    %p82 = scmp.eq.s32.totalorder %s16, 0
    %p83 = por %p81, %p82
    %p84 = scmp.ne.s32.totalorder %s76, %s78
    %p85 = scmp.eq.s32.totalorder %s21, 1
    %p86 = por %p84, %p85
    %p87 = scmp.ne.s32.totalorder %s78, %s79
    %p88 = scmp.eq.s32.totalorder %s21, 0
    %p89 = por %p87, %p88
    %p90 = scmp.ne.s32.totalorder %s78, %s79
    %p91 = scmp.eq.s32.totalorder %s22, 1
    %p92 = por %p90, %p91
    %p94 = scmp.ne.s32.totalorder %s79, %s93
    %p95 = scmp.eq.s32.totalorder %s22, 0
    %p96 = por %p94, %p95
    %s98 = sadd.s32 %s97, 1
    %p101 = scmp.eq.s32.totalorder %s16, 1
    %p102 = scmp.ne.s32.totalorder %s97, %s99
    %p103 = scmp.eq.s32.totalorder %s16, 0
    %p104 = por %p102, %p103
    %p105 = scmp.ne.s32.totalorder %s97, %s99
    %p106 = scmp.eq.s32.totalorder %s21, 1
    %p107 = por %p105, %p106
    %p108 = scmp.ne.s32.totalorder %s99, %s100
    %p109 = scmp.eq.s32.totalorder %s21, 0
    %p110 = por %p108, %p109
    %p111 = scmp.ne.s32.totalorder %s99, %s100
    %p112 = scmp.eq.s32.totalorder %s22, 1
    %p113 = por %p111, %p112
    %p115 = scmp.ne.s32.totalorder %s100, %s114
    %p116 = scmp.eq.s32.totalorder %s22, 0
    %p117 = por %p115, %p116
    %s119 = sadd.s32 %s118, 1
    %p122 = scmp.eq.s32.totalorder %s16, 1
    %p123 = scmp.ne.s32.totalorder %s118, %s120
    %p124 = scmp.eq.s32.totalorder %s16, 0
    %p125 = por %p123, %p124
    %p126 = scmp.ne.s32.totalorder %s118, %s120
    %p127 = scmp.eq.s32.totalorder %s21, 1
    %p128 = por %p126, %p127
    %p129 = scmp.ne.s32.totalorder %s120, %s121
    %p130 = scmp.eq.s32.totalorder %s21, 0
    %p131 = por %p129, %p130
    %p132 = scmp.ne.s32.totalorder %s120, %s121
    %p133 = scmp.eq.s32.totalorder %s22, 1
    %p134 = por %p132, %p133
    %p136 = scmp.ne.s32.totalorder %s121, %s135
    %p137 = scmp.eq.s32.totalorder %s22, 0
    %p138 = por %p136, %p137
    %s140 = sadd.s32 %s139, 1
    %p143 = scmp.eq.s32.totalorder %s16, 1
    %p144 = scmp.ne.s32.totalorder %s139, %s141
    %p145 = scmp.eq.s32.totalorder %s16, 0
    %p146 = por %p144, %p145
    %p147 = scmp.ne.s32.totalorder %s139, %s141
    %p148 = scmp.eq.s32.totalorder %s21, 1
    %p149 = por %p147, %p148
    %p150 = scmp.ne.s32.totalorder %s141, %s142
    %p151 = scmp.eq.s32.totalorder %s21, 0
    %p152 = por %p150, %p151
    %p153 = scmp.ne.s32.totalorder %s141, %s142
    %p154 = scmp.eq.s32.totalorder %s22, 1
    %p155 = por %p153, %p154
    %p157 = scmp.ne.s32.totalorder %s142, %s156
    %p158 = scmp.eq.s32.totalorder %s22, 0
    %p159 = por %p157, %p158
    %s161 = sadd.s32 %s160, 1
    %p164 = scmp.eq.s32.totalorder %s16, 1
    %p165 = scmp.ne.s32.totalorder %s160, %s162
    %p166 = scmp.eq.s32.totalorder %s16, 0
    %p167 = por %p165, %p166
    %p168 = scmp.ne.s32.totalorder %s160, %s162
    %p169 = scmp.eq.s32.totalorder %s21, 1
    %p170 = por %p168, %p169
    %p171 = scmp.ne.s32.totalorder %s162, %s163
    %p172 = scmp.eq.s32.totalorder %s21, 0
    %p173 = por %p171, %p172
    %p174 = scmp.ne.s32.totalorder %s162, %s163
    %p175 = scmp.eq.s32.totalorder %s22, 1
    %p176 = por %p174, %p175
    %p178 = scmp.ne.s32.totalorder %s163, %s177
    %p179 = scmp.eq.s32.totalorder %s22, 0
    %p180 = por %p178, %p179
    %s182 = sadd.s32 %s181, 1
    %p185 = scmp.eq.s32.totalorder %s16, 1
    %p186 = scmp.ne.s32.totalorder %s181, %s183
    %p187 = scmp.eq.s32.totalorder %s16, 0
    %p188 = por %p186, %p187
    %p189 = scmp.ne.s32.totalorder %s181, %s183
    %p190 = scmp.eq.s32.totalorder %s21, 1
    %p191 = por %p189, %p190
    %p192 = scmp.ne.s32.totalorder %s183, %s184
    %p193 = scmp.eq.s32.totalorder %s21, 0
    %p194 = por %p192, %p193
    %p195 = scmp.ne.s32.totalorder %s183, %s184
    %p196 = scmp.eq.s32.totalorder %s22, 1
    %p197 = por %p195, %p196
    %p199 = scmp.ne.s32.totalorder %s184, %s198
    %p200 = scmp.eq.s32.totalorder %s22, 0
    %p201 = por %p199, %p200
    %s202 = ssub.s32 %s16, %s23
    %p203 = scmp.eq.s32.totalorder %s202, 0
    %s205 = sadd.s32 %s204, 1
    %s206 = scalar_select %p203, %s204, %s205
    %p209 = pneg %p203
    %p210 = scmp.eq.s32.totalorder %s16, 1
    %p211 = por %p209, %p210
    %p212 = scmp.ne.s32.totalorder %s204, %s207
    %p213 = scmp.eq.s32.totalorder %s16, 0
    %p214 = por %p212, %p213
    %p215 = scmp.ne.s32.totalorder %s204, %s207
    %p216 = scmp.eq.s32.totalorder %s21, 1
    %p217 = por %p215, %p216
    %p218 = scmp.ne.s32.totalorder %s207, %s208
    %p219 = scmp.eq.s32.totalorder %s21, 0
    %p220 = por %p218, %p219
    %p221 = scmp.ne.s32.totalorder %s207, %s208
    %p222 = scmp.eq.s32.totalorder %s22, 1
    %p223 = por %p221, %p222
    %p225 = scmp.ne.s32.totalorder %s208, %s224
    %p226 = scmp.eq.s32.totalorder %s22, 0
    %p227 = por %p225, %p226
    %s228 = ssub.s32 %s16, %s23
    %p229 = scmp.eq.s32.totalorder %s228, 0
    %s231 = sadd.s32 %s230, 1
    %s232 = scalar_select %p229, %s230, %s231
    %p235 = pneg %p229
    %p236 = scmp.eq.s32.totalorder %s16, 1
    %p237 = por %p235, %p236
    %p238 = scmp.ne.s32.totalorder %s230, %s233
    %p239 = scmp.eq.s32.totalorder %s16, 0
    %p240 = por %p238, %p239
    %p241 = scmp.ne.s32.totalorder %s230, %s233
    %p242 = scmp.eq.s32.totalorder %s21, 1
    %p243 = por %p241, %p242
    %p244 = scmp.ne.s32.totalorder %s233, %s234
    %p245 = scmp.eq.s32.totalorder %s21, 0
    %p246 = por %p244, %p245
    %p247 = scmp.ne.s32.totalorder %s233, %s234
    %p248 = scmp.eq.s32.totalorder %s22, 1
    %p249 = por %p247, %p248
    %p251 = scmp.ne.s32.totalorder %s234, %s250
    %p252 = scmp.eq.s32.totalorder %s22, 0
    %p253 = por %p251, %p252
    %p254 = scmp.le.s32.totalorder 1, %s16
    %p255 = scmp.lt.s32.totalorder %s16, 3
    %p256 = pnand %p254, %p255
    %p257 = pneg %p256
    // Predicated region
    $region9: #{_lambda_.42} parent=5 // pred_check
      _
    $region10: #{_lambda_.42} parent=5 // pred_check_branch
      %259 = sbr.rel (%p256) target = $region12
    $region11: #{_lambda_.42} parent=5 // pred_region
      %s260 = ssub.s32 %s16, 1
      // Predicated region
      $region13: #{_lambda_.42} parent=11 // pred_check
        %p261 = pneg %p89
      $region14: #{_lambda_.42} parent=11 // pred_check_branch
        %263 = sbr.rel (%p261) target = $region16
      $region15: #{_lambda_.42} parent=11 // pred_region
        _
      $region16: #{_lambda_.42} parent=11 // pred_fallthru
        _
      // Predicated region
      $region17: #{_lambda_.42} parent=11 // pred_check
        %p264 = pneg %p110
      $region18: #{_lambda_.42} parent=11 // pred_check_branch
        %266 = sbr.rel (%p264) target = $region20
      $region19: #{_lambda_.42} parent=11 // pred_region
        _
      $region20: #{_lambda_.42} parent=11 // pred_fallthru
        _
      // Predicated region
      $region21: #{_lambda_.42} parent=11 // pred_check
        %p267 = pneg %p131
      $region22: #{_lambda_.42} parent=11 // pred_check_branch
        %269 = sbr.rel (%p267) target = $region24
      $region23: #{_lambda_.42} parent=11 // pred_region
        _
      $region24: #{_lambda_.42} parent=11 // pred_fallthru
        _
      // Predicated region
      $region25: #{_lambda_.42} parent=11 // pred_check
        %p270 = pneg %p152
      $region26: #{_lambda_.42} parent=11 // pred_check_branch
        %272 = sbr.rel (%p270) target = $region28
      $region27: #{_lambda_.42} parent=11 // pred_region
        _
      $region28: #{_lambda_.42} parent=11 // pred_fallthru
        _
      // Predicated region
      $region29: #{_lambda_.42} parent=11 // pred_check
        %p273 = pneg %p173
      $region30: #{_lambda_.42} parent=11 // pred_check_branch
        %275 = sbr.rel (%p273) target = $region32
      $region31: #{_lambda_.42} parent=11 // pred_region
        _
      $region32: #{_lambda_.42} parent=11 // pred_fallthru
        _
      // Predicated region
      $region33: #{_lambda_.42} parent=11 // pred_check
        %p276 = pneg %p194
      $region34: #{_lambda_.42} parent=11 // pred_check_branch
        %278 = sbr.rel (%p276) target = $region36
      $region35: #{_lambda_.42} parent=11 // pred_region
        _
      $region36: #{_lambda_.42} parent=11 // pred_fallthru
        _
    $region12: #{_lambda_.42} parent=5 // pred_fallthru
      _
    %p279 = scmp.lt.s32.totalorder %s16, 2
    // Predicated region
    $region37: #{_lambda_.42} parent=5 // pred_check
      %p280 = pneg %p279
    $region38: #{_lambda_.42} parent=5 // pred_check_branch
      %282 = sbr.rel (%p280) target = $region40
    $region39: #{_lambda_.42} parent=5 // pred_region
      // Predicated region
      $region41: #{_lambda_.42} parent=39 // pred_check
        %p283 = pneg %p36
      $region42: #{_lambda_.42} parent=39 // pred_check_branch
        %285 = sbr.rel (%p283) target = $region44
      $region43: #{_lambda_.42} parent=39 // pred_region
        %p286 = scmp.lt.s32.totalorder %s16, 1
        %s287 = scalar_select %p286, %s16, 1
        %s288 = smul.addr %s287, 8
        %s289 = scalar_lea.vmem %s0, %s288
      $region44: #{_lambda_.42} parent=39 // pred_fallthru
        _
      // Predicated region
      $region45: #{_lambda_.42} parent=39 // pred_check
        %p290 = pneg %p62
      $region46: #{_lambda_.42} parent=39 // pred_check_branch
        %292 = sbr.rel (%p290) target = $region48
      $region47: #{_lambda_.42} parent=39 // pred_region
        %p293 = scmp.lt.s32.totalorder %s16, 1
        %s294 = scalar_select %p293, %s16, 1
        %s295 = smul.addr %s294, 8
        %s296 = scalar_lea.vmem %s1, %s295
      $region48: #{_lambda_.42} parent=39 // pred_fallthru
        _
    $region40: #{_lambda_.42} parent=5 // pred_fallthru
      _
    %p297 = scmp.le.s32.totalorder 1, %s16
    %p298 = scmp.lt.s32.totalorder %s16, 3
    %p299 = pnand %p297, %p298
    %p300 = pneg %p299
    // Predicated region
    $region49: #{_lambda_.42} parent=5 // pred_check
      _
    $region50: #{_lambda_.42} parent=5 // pred_check_branch
      %302 = sbr.rel (%p299) target = $region52
    $region51: #{_lambda_.42} parent=5 // pred_region
      %s303 = ssub.s32 %s16, 1
      %p304 = scmp.lt.s32.totalorder %s21, 1
      %s305 = scalar_select %p304, %s21, 1
      %s306 = smul.addr %s305, 8
      %s307 = scalar_lea.vmem %s0, %s306
      %p308 = pneg %p42
      %p309 = pneg %p39
      %p310 = scmp.lt.s32.totalorder %s21, 1
      %s311 = scalar_select %p310, %s21, 1
      %s312 = smul.addr %s311, 8
      %s313 = scalar_lea.vmem %s1, %s312
      %p314 = pneg %p68
      %p315 = pneg %p65
      %p316 = pneg %p89
      %p317 = pneg %p86
      %p318 = pneg %p110
      %p319 = pneg %p107
      %p320 = pneg %p131
      %p321 = pneg %p128
      %p322 = pneg %p152
      %p323 = pneg %p149
      %p324 = pneg %p173
      %p325 = pneg %p170
      %p326 = pneg %p194
      %p327 = pneg %p191
      %p328 = pneg %p220
      %p329 = pneg %p217
      %p330 = scmp.lt.s32.totalorder %s21, 1
      %s331 = scalar_select %p330, %s21, 1
      %s332 = smul.addr %s331, 8
      %s333 = scalar_lea.vmem %s8, %s332
      %p334 = pneg %p246
      %p335 = pneg %p243
      %p336 = scmp.lt.s32.totalorder %s21, 1
      %s337 = scalar_select %p336, %s21, 1
      %s338 = smul.addr %s337, 8
      %s339 = scalar_lea.vmem %s9, %s338
      %p340 = scmp.lt.s32.totalorder %s21, 1
      %s341 = scalar_select %p340, %s21, 1
      %s342 = smul.addr %s341, 8
      %s343 = scalar_lea.vmem %s0, %s342
      %p344 = scmp.lt.s32.totalorder %s21, 1
      %s345 = scalar_select %p344, %s21, 1
      %s346 = smul.addr %s345, 8
      %s347 = scalar_lea.vmem %s1, %s346
      %p348 = scmp.lt.s32.totalorder %s21, 1
      %s349 = scalar_select %p348, %s21, 1
      %s350 = smul.addr %s349, 8
      %s351 = scalar_lea.vmem %s8, %s350
      %p352 = scmp.lt.s32.totalorder %s21, 1
      %s353 = scalar_select %p352, %s21, 1
      %s354 = smul.addr %s353, 8
      %s355 = scalar_lea.vmem %s9, %s354
      %v357 = vld [vmem:[%s343] sm:$0xff]
      %v358 = vld [vmem:[%s347] sm:$0xff]
      %v359 = vadd.f32 %v357, %v358
      %vm360 = vcmask 261120
      %361 = vst.msk [vmem:[%s351] sm:$0xff] %vm360, %v359
      %v362 = vld [vmem:[%s2] sm:$0x1]
      %v363 = vld [vmem:[%s3] sm:$0x1]
      %v364 = vsel %vm360, %v359, 0.0
      %365 = vadd.xlane.f32.xlu0 %v364
      %v366 = vpop.xlane.xlu0 %365
      %v367 = vrcp.pop 32.0
      %v368 = vmul.f32 %v366, %v367
      %v369 = vsub.f32 %v359, %v368
      %v370 = vmul.f32 %v369, %v369
      %v371 = vsel %vm360, %v370, 0.0
      %372 = vadd.xlane.f32.xlu0 %v371
      %v373 = vpop.xlane.xlu0 %372
      %v374 = vmul.f32 %v373, 0.032258064
      %v375 = vrsqrt.pop %v374
      %v376 = vmul.f32 %v374, %v375
      %vm377 = vcmp.eq.f32.partialorder %v374, inf
      %v378 = vsel %vm377, %v374, %v376
      %vm379 = vcmp.eq.f32.partialorder %v374, 0.0
      %v380 = vand.u32 %v374, 2147483648
      %v381 = vsel %vm379, %v380, %v378
      %v382 = vadd.f32 %v381, 1e-06
      %v383 = vrcp.pop %v382
      %v385 = vlaneseq
      %v386 = vshrl.u32 %v385, 7
      %v387 = vsub.s32 0, %v386
      %v388 = vrot.slane %v362, %v387
      %v390 = vmul.f32 %v388, %v383
      %v391 = vmul.f32 %v369, %v390
      %v393 = vlaneseq
      %v394 = vshrl.u32 %v393, 7
      %v395 = vsub.s32 0, %v394
      %v396 = vrot.slane %v363, %v395
      %v398 = vadd.f32 %v391, %v396
      %v399 = vpack.c.bf16 %v398, %v398
      %v400 = vld [vmem:[%s4] sm:$0xff]
      %v401 = vld [vmem:[%s4 + $0x8] sm:$0xff]
      %v402 = vld [vmem:[%s4 + $0x10] sm:$0xff]
      %v403 = vld [vmem:[%s4 + $0x18] sm:$0xff]
      %v404 = vpack.c.bf16 %v401, %v400
      %v405 = vpack.c.bf16 %v403, %v402
      %v406 = vld [vmem:[%s5] sm:$0x1]
      %v408 = vlaneseq
      %v409 = vshrl.u32 %v408, 7
      %v410 = vsub.s32 0, %v409
      %v411 = vrot.slane %v406, %v410
      %v414 = vsel %vm360, %v399, 0
      %416 = vmatprep.subr.bf16.mxu0 0
      %417 = vmatpush1.bf16.msra.mxu0 0
      %418 = vmatprep.subr.bf16.mxu0 0
      %419 = vmatpush1.bf16.msra.mxu0 0
      %420 = vmatprep.subr.bf16.mxu0 0
      %421 = vmatpush1.bf16.msra.mxu0 0
      %422 = vmatprep.subr.bf16.mxu0 0
      %423 = vmatpush1.bf16.msra.mxu0 0
      %424 = vmatprep.subr.bf16.mxu0 0
      %425 = vmatpush1.bf16.msra.mxu0 0
      %426 = vmatprep.subr.bf16.mxu0 0
      %427 = vmatpush1.bf16.msra.mxu0 0
      %428 = vmatprep.subr.bf16.mxu0 0
      %429 = vmatpush1.bf16.msra.mxu0 %v405
      %430 = vmatprep.subr.bf16.mxu0 0
      %431 = vmatpush1.bf16.msra.mxu0 %v404
      %432 = vmatprep.subr.bf16.mxu0 0
      %433 = vmatpush2.bf16.msra.mxu0 0
      %434 = vmatprep.subr.bf16.mxu0 0
      %435 = vmatpush2.bf16.msra.mxu0 0
      %436 = vmatprep.subr.bf16.mxu0 0
      %437 = vmatpush2.bf16.msra.mxu0 0
      %438 = vmatprep.subr.bf16.mxu0 0
      %439 = vmatpush2.bf16.msra.mxu0 0
      %440 = vmatprep.subr.bf16.mxu0 0
      %441 = vmatpush2.bf16.msra.mxu0 0
      %442 = vmatprep.subr.bf16.mxu0 0
      %443 = vmatpush2.bf16.msra.mxu0 0
      %444 = vmatprep.subr.bf16.mxu0 0
      %445 = vmatpush2.bf16.msra.mxu0 0
      %446 = vmatprep.subr.bf16.mxu0 0
      %447 = vmatpush2.bf16.msra.mxu0 0
      %448 = vmatprep.mubr.bf16.mxu0 0
      %449 = vmatmul.mubr.bf16.gmra.mxu0 %v414
      %v450 = vpop.f32.mrf.mxu0
      %v451 = vadd.f32 %v411, %v450
      %v452 = vpop.f32.mrf.mxu0
      %v453 = vpop.f32.mrf.mxu0
      %v454 = vpop.f32.mrf.mxu0
      %455 = vdwg.mxu0
      %vm456 = vcmp.ge.f32.partialorder %v451, 0.0
      %v457 = vmul.f32 %v451, 0.2
      %v458 = vsel %vm456, %v451, %v457
      %v459 = vpack.c.bf16 %v458, %v458
      %v460 = vld [vmem:[%s6] sm:$0xff]
      %v461 = vld [vmem:[%s6 + $0x8] sm:$0xff]
      %v462 = vld [vmem:[%s6 + $0x10] sm:$0xff]
      %v463 = vld [vmem:[%s6 + $0x18] sm:$0xff]
      %v464 = vld [vmem:[%s6 + $0x20] sm:$0xff]
      %v465 = vld [vmem:[%s6 + $0x28] sm:$0xff]
      %v466 = vld [vmem:[%s6 + $0x30] sm:$0xff]
      %v467 = vld [vmem:[%s6 + $0x38] sm:$0xff]
      %v468 = vpack.c.bf16 %v461, %v460
      %v469 = vpack.c.bf16 %v463, %v462
      %v470 = vpack.c.bf16 %v465, %v464
      %v471 = vpack.c.bf16 %v467, %v466
      %v472 = vld [vmem:[%s7] sm:$0x1]
      %v474 = vlaneseq
      %v475 = vshrl.u32 %v474, 7
      %v476 = vsub.s32 0, %v475
      %v477 = vrot.slane %v472, %v476
      %vm479 = vcmask 523264
      %v481 = vsel %vm479, %v459, 0
      %483 = vmatprep.subr.bf16.mxu0 0
      %484 = vmatpush1.bf16.msra.mxu0 0
      %485 = vmatprep.subr.bf16.mxu0 0
      %486 = vmatpush1.bf16.msra.mxu0 0
      %487 = vmatprep.subr.bf16.mxu0 0
      %488 = vmatpush1.bf16.msra.mxu0 0
      %489 = vmatprep.subr.bf16.mxu0 0
      %490 = vmatpush1.bf16.msra.mxu0 0
      %491 = vmatprep.subr.bf16.mxu0 0
      %492 = vmatpush1.bf16.msra.mxu0 %v471
      %493 = vmatprep.subr.bf16.mxu0 0
      %494 = vmatpush1.bf16.msra.mxu0 %v470
      %495 = vmatprep.subr.bf16.mxu0 0
      %496 = vmatpush1.bf16.msra.mxu0 %v469
      %497 = vmatprep.subr.bf16.mxu0 0
      %498 = vmatpush1.bf16.msra.mxu0 %v468
      %499 = vmatprep.subr.bf16.mxu0 0
      %500 = vmatpush2.bf16.msra.mxu0 0
      %501 = vmatprep.subr.bf16.mxu0 0
      %502 = vmatpush2.bf16.msra.mxu0 0
      %503 = vmatprep.subr.bf16.mxu0 0
      %504 = vmatpush2.bf16.msra.mxu0 0
      %505 = vmatprep.subr.bf16.mxu0 0
      %506 = vmatpush2.bf16.msra.mxu0 0
      %507 = vmatprep.subr.bf16.mxu0 0
      %508 = vmatpush2.bf16.msra.mxu0 0
      %509 = vmatprep.subr.bf16.mxu0 0
      %510 = vmatpush2.bf16.msra.mxu0 0
      %511 = vmatprep.subr.bf16.mxu0 0
      %512 = vmatpush2.bf16.msra.mxu0 0
      %513 = vmatprep.subr.bf16.mxu0 0
      %514 = vmatpush2.bf16.msra.mxu0 0
      %515 = vmatprep.mubr.bf16.mxu0 0
      %516 = vmatmul.mubr.bf16.gmra.mxu0 %v481
      %v517 = vpop.f32.mrf.mxu0
      %v518 = vadd.f32 %v477, %v517
      %v519 = vpop.f32.mrf.mxu0
      %v520 = vpop.f32.mrf.mxu0
      %v521 = vpop.f32.mrf.mxu0
      %522 = vdwg.mxu0
      %523 = vst.msk [vmem:[%s355] sm:$0xff] %vm360, %v518
      %p524 = scmp.lt.s32.totalorder %s21, 1
      %s525 = scalar_select %p524, %s21, 1
      %s526 = smul.addr %s525, 8
      %s527 = scalar_lea.vmem %s8, %s526
      %p528 = scmp.lt.s32.totalorder %s21, 1
      %s529 = scalar_select %p528, %s21, 1
      %s530 = smul.addr %s529, 8
      %s531 = scalar_lea.vmem %s9, %s530
      // Predicated region
      $region53: #{_lambda_.42} parent=51 // pred_check
        %p532 = pneg %p217
      $region54: #{_lambda_.42} parent=51 // pred_check_branch
        %534 = sbr.rel (%p532) target = $region56
      $region55: #{_lambda_.42} parent=51 // pred_region
        _
      $region56: #{_lambda_.42} parent=51 // pred_fallthru
        _
      // Predicated region
      $region57: #{_lambda_.42} parent=51 // pred_check
        %p535 = pneg %p243
      $region58: #{_lambda_.42} parent=51 // pred_check_branch
        %537 = sbr.rel (%p535) target = $region60
      $region59: #{_lambda_.42} parent=51 // pred_region
        _
      $region60: #{_lambda_.42} parent=51 // pred_fallthru
        _
    $region52: #{_lambda_.42} parent=5 // pred_fallthru
      _
    %p538 = scmp.le.s32.totalorder 2, %s16
    // Predicated region
    $region61: #{_lambda_.42} parent=5 // pred_check
      %p539 = pneg %p538
    $region62: #{_lambda_.42} parent=5 // pred_check_branch
      %541 = sbr.rel (%p539) target = $region64
    $region63: #{_lambda_.42} parent=5 // pred_region
      %s542 = ssub.s32 %s16, 2
      // Predicated region
      $region65: #{_lambda_.42} parent=63 // pred_check
        %p543 = pneg %p223
      $region66: #{_lambda_.42} parent=63 // pred_check_branch
        %545 = sbr.rel (%p543) target = $region68
      $region67: #{_lambda_.42} parent=63 // pred_region
        %p546 = scmp.lt.s32.totalorder %s22, 1
        %s547 = scalar_select %p546, %s22, 1
        %s548 = smul.addr %s547, 8
        %s549 = scalar_lea.vmem %s8, %s548
      $region68: #{_lambda_.42} parent=63 // pred_fallthru
        _
      // Predicated region
      $region69: #{_lambda_.42} parent=63 // pred_check
        %p550 = pneg %p249
      $region70: #{_lambda_.42} parent=63 // pred_check_branch
        %552 = sbr.rel (%p550) target = $region72
      $region71: #{_lambda_.42} parent=63 // pred_region
        %p553 = scmp.lt.s32.totalorder %s22, 1
        %s554 = scalar_select %p553, %s22, 1
        %s555 = smul.addr %s554, 8
        %s556 = scalar_lea.vmem %s9, %s555
      $region72: #{_lambda_.42} parent=63 // pred_fallthru
        _
    $region64: #{_lambda_.42} parent=5 // pred_fallthru
      _
  $region6: #{_lambda_.42} parent=0 // loop_footer
    %s20 = sadd.s32 1, %s16
  $region7: #{_lambda_.42} parent=0 // loop_footer_branch
    %15 = sbr.rel target = $region3
  $region8: #{_lambda_.42} parent=0 // loop_exit
    _

// kernel: _lambda_.40
$region0: #{_lambda_.40}
  #allocation0 [shape = 'u32[]', space=smem, size = 0x4, offset = 0x4, fixed_abs, tag = 'smem constant byte address 0x4 - core index']
  #allocation1 [shape = 'u32[144,128]{1,0:T(1,128)}', space=vmem, size = 0x12000, scoped, tag = 'internal scratch']
  %s0 = inlined_call_operand.hbm [shape: f32[2,8,32], index: 0, kind: input, shape index: {}]
  %s1 = inlined_call_operand.vmem [shape: f32[1,32], index: 1, kind: input, shape index: {}]
  %s2 = inlined_call_operand.vmem [shape: f32[1,32], index: 2, kind: input, shape index: {}]
  %s3 = inlined_call_operand.vmem [shape: f32[32,96], index: 3, kind: input, shape index: {}]
  %s4 = inlined_call_operand.vmem [shape: f32[1,96], index: 4, kind: input, shape index: {}]
  %s5 = inlined_call_operand.vmem [shape: f32[2,8,32], index: 5, kind: output, shape index: {0}]
  %s6 = inlined_call_operand.vmem [shape: f32[2,8,64], index: 6, kind: output, shape index: {1}]
  %7 = xla_tuple %s5, %s6
  %s8 = sld [smem:[#allocation0]]
  $region65: #{_lambda_.40} parent=0
    _
  %s10 = ssub.s32 1, %s8
  %s11 = scalar_select 0, %s10, %s8
  $region1: #{_lambda_.40} parent=0
    #allocation2 [shape = 'u8[8192]{0}', space=vmem, size = 0x2000, scoped, tag = 'input window, operand 0']
    #allocation3 [shape = 's32[2]{0}', space=sflag, size = 0x8, scoped, tag = 'scoped memory for _lambda_.40']
    %12 = vsyncpa [#allocation3], 0
    %s13 = scalar_lea.sflag [#allocation3], 1
    %14 = vsyncpa %s13, 0
    loop: start=0, step=1, limit=4
    $region2: #{_lambda_.40} parent=1 // loop_pre_header
      _
    $region3: #{_lambda_.40} parent=1 // loop_header
      %s16 = sphi 0, %s20
      %p17 = scmp.ge.s32.totalorder %s16, 4
      %s26 = sphi 0, %s28
      %s29 = sphi 0, %s26
      %s30 = sphi 0, %s29
      %s46 = sphi 0, %s30
      %s50 = sphi 0, %s50
      %s52 = sphi 0, %s50
      %s53 = sphi 0, %s52
      %s67 = sphi 0, %s53
      %s71 = sphi 0, %s71
      %s73 = sphi 0, %s71
      %s74 = sphi 0, %s73
      %s88 = sphi 0, %s74
      %s92 = sphi 0, %s92
      %s94 = sphi 0, %s92
      %s95 = sphi 0, %s94
      %s109 = sphi 0, %s95
      %s113 = sphi 0, %s113
      %s115 = sphi 0, %s113
      %s116 = sphi 0, %s115
      %s130 = sphi 0, %s116
      %s136 = sphi 0, %s138
      %s139 = sphi 0, %s136
      %s140 = sphi 0, %s139
      %s156 = sphi 0, %s140
      %s162 = sphi 0, %s164
      %s165 = sphi 0, %s162
      %s166 = sphi 0, %s165
      %s182 = sphi 0, %s166
    $region4: #{_lambda_.40} parent=1 // loop_header_branch
      %19 = sbr.rel (%p17) target = $region8
    $region5: #{_lambda_.40} parent=1 // loop_body
      %s21 = ssub.s32 %s16, 1
      %s22 = ssub.s32 %s16, 2
      %s23 = sadd.s32 %s16, 1
      %s24 = ssub.s32 %s16, %s23
      %p25 = scmp.eq.s32.totalorder %s24, 0
      %s27 = sadd.s32 %s26, 1
      %s28 = scalar_select %p25, %s26, %s27
      %p31 = pneg %p25
      %p32 = scmp.eq.s32.totalorder %s16, 1
      %p33 = por %p31, %p32
      %p34 = scmp.ne.s32.totalorder %s26, %s29
      %p35 = scmp.eq.s32.totalorder %s16, 0
      %p36 = por %p34, %p35
      %p37 = scmp.ne.s32.totalorder %s26, %s29
      %p38 = scmp.eq.s32.totalorder %s21, 1
      %p39 = por %p37, %p38
      %p40 = scmp.ne.s32.totalorder %s29, %s30
      %p41 = scmp.eq.s32.totalorder %s21, 0
      %p42 = por %p40, %p41
      %p43 = scmp.ne.s32.totalorder %s29, %s30
      %p44 = scmp.eq.s32.totalorder %s22, 1
      %p45 = por %p43, %p44
      %p47 = scmp.ne.s32.totalorder %s30, %s46
      %p48 = scmp.eq.s32.totalorder %s22, 0
      %p49 = por %p47, %p48
      %s51 = sadd.s32 %s50, 1
      %p54 = scmp.eq.s32.totalorder %s16, 1
      %p55 = scmp.ne.s32.totalorder %s50, %s52
      %p56 = scmp.eq.s32.totalorder %s16, 0
      %p57 = por %p55, %p56
      %p58 = scmp.ne.s32.totalorder %s50, %s52
      %p59 = scmp.eq.s32.totalorder %s21, 1
      %p60 = por %p58, %p59
      %p61 = scmp.ne.s32.totalorder %s52, %s53
      %p62 = scmp.eq.s32.totalorder %s21, 0
      %p63 = por %p61, %p62
      %p64 = scmp.ne.s32.totalorder %s52, %s53
      %p65 = scmp.eq.s32.totalorder %s22, 1
      %p66 = por %p64, %p65
      %p68 = scmp.ne.s32.totalorder %s53, %s67
      %p69 = scmp.eq.s32.totalorder %s22, 0
      %p70 = por %p68, %p69
      %s72 = sadd.s32 %s71, 1
      %p75 = scmp.eq.s32.totalorder %s16, 1
      %p76 = scmp.ne.s32.totalorder %s71, %s73
      %p77 = scmp.eq.s32.totalorder %s16, 0
      %p78 = por %p76, %p77
      %p79 = scmp.ne.s32.totalorder %s71, %s73
      %p80 = scmp.eq.s32.totalorder %s21, 1
      %p81 = por %p79, %p80
      %p82 = scmp.ne.s32.totalorder %s73, %s74
      %p83 = scmp.eq.s32.totalorder %s21, 0
      %p84 = por %p82, %p83
      %p85 = scmp.ne.s32.totalorder %s73, %s74
      %p86 = scmp.eq.s32.totalorder %s22, 1
      %p87 = por %p85, %p86
      %p89 = scmp.ne.s32.totalorder %s74, %s88
      %p90 = scmp.eq.s32.totalorder %s22, 0
      %p91 = por %p89, %p90
      %s93 = sadd.s32 %s92, 1
      %p96 = scmp.eq.s32.totalorder %s16, 1
      %p97 = scmp.ne.s32.totalorder %s92, %s94
      %p98 = scmp.eq.s32.totalorder %s16, 0
      %p99 = por %p97, %p98
      %p100 = scmp.ne.s32.totalorder %s92, %s94
      %p101 = scmp.eq.s32.totalorder %s21, 1
      %p102 = por %p100, %p101
      %p103 = scmp.ne.s32.totalorder %s94, %s95
      %p104 = scmp.eq.s32.totalorder %s21, 0
      %p105 = por %p103, %p104
      %p106 = scmp.ne.s32.totalorder %s94, %s95
      %p107 = scmp.eq.s32.totalorder %s22, 1
      %p108 = por %p106, %p107
      %p110 = scmp.ne.s32.totalorder %s95, %s109
      %p111 = scmp.eq.s32.totalorder %s22, 0
      %p112 = por %p110, %p111
      %s114 = sadd.s32 %s113, 1
      %p117 = scmp.eq.s32.totalorder %s16, 1
      %p118 = scmp.ne.s32.totalorder %s113, %s115
      %p119 = scmp.eq.s32.totalorder %s16, 0
      %p120 = por %p118, %p119
      %p121 = scmp.ne.s32.totalorder %s113, %s115
      %p122 = scmp.eq.s32.totalorder %s21, 1
      %p123 = por %p121, %p122
      %p124 = scmp.ne.s32.totalorder %s115, %s116
      %p125 = scmp.eq.s32.totalorder %s21, 0
      %p126 = por %p124, %p125
      %p127 = scmp.ne.s32.totalorder %s115, %s116
      %p128 = scmp.eq.s32.totalorder %s22, 1
      %p129 = por %p127, %p128
      %p131 = scmp.ne.s32.totalorder %s116, %s130
      %p132 = scmp.eq.s32.totalorder %s22, 0
      %p133 = por %p131, %p132
      %s134 = ssub.s32 %s16, %s23
      %p135 = scmp.eq.s32.totalorder %s134, 0
      %s137 = sadd.s32 %s136, 1
      %s138 = scalar_select %p135, %s136, %s137
      %p141 = pneg %p135
      %p142 = scmp.eq.s32.totalorder %s16, 1
      %p143 = por %p141, %p142
      %p144 = scmp.ne.s32.totalorder %s136, %s139
      %p145 = scmp.eq.s32.totalorder %s16, 0
      %p146 = por %p144, %p145
      %p147 = scmp.ne.s32.totalorder %s136, %s139
      %p148 = scmp.eq.s32.totalorder %s21, 1
      %p149 = por %p147, %p148
      %p150 = scmp.ne.s32.totalorder %s139, %s140
      %p151 = scmp.eq.s32.totalorder %s21, 0
      %p152 = por %p150, %p151
      %p153 = scmp.ne.s32.totalorder %s139, %s140
      %p154 = scmp.eq.s32.totalorder %s22, 1
      %p155 = por %p153, %p154
      %p157 = scmp.ne.s32.totalorder %s140, %s156
      %p158 = scmp.eq.s32.totalorder %s22, 0
      %p159 = por %p157, %p158
      %s160 = ssub.s32 %s16, %s23
      %p161 = scmp.eq.s32.totalorder %s160, 0
      %s163 = sadd.s32 %s162, 1
      %s164 = scalar_select %p161, %s162, %s163
      %p167 = pneg %p161
      %p168 = scmp.eq.s32.totalorder %s16, 1
      %p169 = por %p167, %p168
      %p170 = scmp.ne.s32.totalorder %s162, %s165
      %p171 = scmp.eq.s32.totalorder %s16, 0
      %p172 = por %p170, %p171
      %p173 = scmp.ne.s32.totalorder %s162, %s165
      %p174 = scmp.eq.s32.totalorder %s21, 1
      %p175 = por %p173, %p174
      %p176 = scmp.ne.s32.totalorder %s165, %s166
      %p177 = scmp.eq.s32.totalorder %s21, 0
      %p178 = por %p176, %p177
      %p179 = scmp.ne.s32.totalorder %s165, %s166
      %p180 = scmp.eq.s32.totalorder %s22, 1
      %p181 = por %p179, %p180
      %p183 = scmp.ne.s32.totalorder %s166, %s182
      %p184 = scmp.eq.s32.totalorder %s22, 0
      %p185 = por %p183, %p184
      %p186 = scmp.le.s32.totalorder 1, %s16
      %p187 = scmp.lt.s32.totalorder %s16, 3
      %p188 = pnand %p186, %p187
      %p189 = pneg %p188
      // Predicated region
      $region9: #{_lambda_.40} parent=5 // pred_check
        _
      $region10: #{_lambda_.40} parent=5 // pred_check_branch
        %191 = sbr.rel (%p188) target = $region12
      $region11: #{_lambda_.40} parent=5 // pred_region
        %s192 = ssub.s32 %s16, 1
        // Predicated region
        $region13: #{_lambda_.40} parent=11 // pred_check
          %p193 = pneg %p63
        $region14: #{_lambda_.40} parent=11 // pred_check_branch
          %195 = sbr.rel (%p193) target = $region16
        $region15: #{_lambda_.40} parent=11 // pred_region
          _
        $region16: #{_lambda_.40} parent=11 // pred_fallthru
          _
        // Predicated region
        $region17: #{_lambda_.40} parent=11 // pred_check
          %p196 = pneg %p84
        $region18: #{_lambda_.40} parent=11 // pred_check_branch
          %198 = sbr.rel (%p196) target = $region20
        $region19: #{_lambda_.40} parent=11 // pred_region
          _
        $region20: #{_lambda_.40} parent=11 // pred_fallthru
          _
        // Predicated region
        $region21: #{_lambda_.40} parent=11 // pred_check
          %p199 = pneg %p105
        $region22: #{_lambda_.40} parent=11 // pred_check_branch
          %201 = sbr.rel (%p199) target = $region24
        $region23: #{_lambda_.40} parent=11 // pred_region
          _
        $region24: #{_lambda_.40} parent=11 // pred_fallthru
          _
        // Predicated region
        $region25: #{_lambda_.40} parent=11 // pred_check
          %p202 = pneg %p126
        $region26: #{_lambda_.40} parent=11 // pred_check_branch
          %204 = sbr.rel (%p202) target = $region28
        $region27: #{_lambda_.40} parent=11 // pred_region
          _
        $region28: #{_lambda_.40} parent=11 // pred_fallthru
          _
      $region12: #{_lambda_.40} parent=5 // pred_fallthru
        _
      %p205 = scmp.lt.s32.totalorder %s16, 2
      // Predicated region
      $region29: #{_lambda_.40} parent=5 // pred_check
        %p206 = pneg %p205
      $region30: #{_lambda_.40} parent=5 // pred_check_branch
        %208 = sbr.rel (%p206) target = $region32
      $region31: #{_lambda_.40} parent=5 // pred_region
        // Predicated region
        $region33: #{_lambda_.40} parent=31 // pred_check
          %p209 = pneg %p36
        $region34: #{_lambda_.40} parent=31 // pred_check_branch
          %211 = sbr.rel (%p209) target = $region36
        $region35: #{_lambda_.40} parent=31 // pred_region
          %s212 = sand.u32 %s26, 1
          %s213 = scalar_lea.sflag [#allocation3], %s212
          %s214 = sand.u32 %s26, 1
          %s215 = smul.addr %s214, 8
          %s216 = scalar_lea.vmem [#allocation2], %s215
          %s218 = ssub.s32 128, 128
          %219 = vsyncadd %s213, %s218
          %s220 = smul.addr %s16, 128
          %s221 = scalar_lea.hbm %s0, %s220
          %s223 = sshll.u32 %s216, 4
          %s224 = int_to_ptr.vmem [resolvable:$true] %s223
          %226 = dma.hbm_to_vmem [thread:$0]  %s221, 128, %s224, %s213
        $region36: #{_lambda_.40} parent=31 // pred_fallthru
          _
      $region32: #{_lambda_.40} parent=5 // pred_fallthru
        _
      %p227 = scmp.le.s32.totalorder 1, %s16
      %p228 = scmp.lt.s32.totalorder %s16, 3
      %p229 = pnand %p227, %p228
      %p230 = pneg %p229
      // Predicated region
      $region37: #{_lambda_.40} parent=5 // pred_check
        _
      $region38: #{_lambda_.40} parent=5 // pred_check_branch
        %232 = sbr.rel (%p229) target = $region40
      $region39: #{_lambda_.40} parent=5 // pred_region
        %s233 = ssub.s32 %s16, 1
        %s234 = sand.u32 %s29, 1
        %s235 = scalar_lea.sflag [#allocation3], %s234
        %s236 = sand.u32 %s29, 1
        %s237 = smul.addr %s236, 8
        %s238 = scalar_lea.vmem [#allocation2], %s237
        // Predicated region
        $region41: #{_lambda_.40} parent=39 // pred_check
          %p239 = pneg %p42
        $region42: #{_lambda_.40} parent=39 // pred_check_branch
          %241 = sbr.rel (%p239) target = $region44
        $region43: #{_lambda_.40} parent=39 // pred_region
          %242 = dma.done %s235, 128
        $region44: #{_lambda_.40} parent=39 // pred_fallthru
          _
        %s243 = sand.u32 %s29, 1
        %s244 = scalar_lea.sflag [#allocation3], %s243
        %s245 = sand.u32 %s29, 1
        %s246 = smul.addr %s245, 8
        %s247 = scalar_lea.vmem [#allocation2], %s246
        %p248 = pneg %p42
        %p249 = pneg %p39
        %p250 = pneg %p63
        %p251 = pneg %p60
        %p252 = pneg %p84
        %p253 = pneg %p81
        %p254 = pneg %p105
        %p255 = pneg %p102
        %p256 = pneg %p126
        %p257 = pneg %p123
        %p258 = pneg %p152
        %p259 = pneg %p149
        %p260 = scmp.lt.s32.totalorder %s21, 1
        %s261 = scalar_select %p260, %s21, 1
        %s262 = smul.addr %s261, 8
        %s263 = scalar_lea.vmem %s5, %s262
        %p264 = pneg %p178
        %p265 = pneg %p175
        %p266 = scmp.lt.s32.totalorder %s21, 1
        %s267 = scalar_select %p266, %s21, 1
        %s268 = smul.addr %s267, 8
        %s269 = scalar_lea.vmem %s6, %s268
        %p270 = scmp.lt.s32.totalorder %s21, 1
        %s271 = scalar_select %p270, %s21, 1
        %s272 = smul.addr %s271, 8
        %s273 = scalar_lea.vmem %s5, %s272
        %p274 = scmp.lt.s32.totalorder %s21, 1
        %s275 = scalar_select %p274, %s21, 1
        %s276 = smul.addr %s275, 8
        %s277 = scalar_lea.vmem %s6, %s276
        %v279 = vld [vmem:[%s238] sm:$0xff]
        %v280 = vld [vmem:[%s1] sm:$0x1]
        %v281 = vld [vmem:[%s2] sm:$0x1]
        %v282 = vld [vmem:[%s4] sm:$0x1]
        %vm283 = vcmask 261120
        %v284 = vsel %vm283, %v279, 0.0
        %285 = vadd.xlane.f32.xlu0 %v284
        %v286 = vpop.xlane.xlu0 %285
        %v287 = vrcp.pop 32.0
        %v288 = vmul.f32 %v286, %v287
        %v289 = vsub.f32 %v279, %v288
        %v290 = vmul.f32 %v289, %v289
        %v291 = vsel %vm283, %v290, 0.0
        %292 = vadd.xlane.f32.xlu0 %v291
        %v293 = vpop.xlane.xlu0 %292
        %v294 = vmul.f32 %v293, 0.032258064
        %v295 = vrsqrt.pop %v294
        %v296 = vmul.f32 %v294, %v295
        %vm297 = vcmp.eq.f32.partialorder %v294, inf
        %v298 = vsel %vm297, %v294, %v296
        %vm299 = vcmp.eq.f32.partialorder %v294, 0.0
        %v300 = vand.u32 %v294, 2147483648
        %v301 = vsel %vm299, %v300, %v298
        %v302 = vadd.f32 %v301, 1e-06
        %v303 = vrcp.pop %v302
        %v305 = vlaneseq
        %v306 = vshrl.u32 %v305, 7
        %v307 = vsub.s32 0, %v306
        %v308 = vrot.slane %v280, %v307
        %v310 = vmul.f32 %v308, %v303
        %v311 = vmul.f32 %v289, %v310
        %v313 = vlaneseq
        %v314 = vshrl.u32 %v313, 7
        %v315 = vsub.s32 0, %v314
        %v316 = vrot.slane %v281, %v315
        %v318 = vadd.f32 %v311, %v316
        %v319 = vpack.c.bf16 %v318, %v318
        %v320 = vld [vmem:[%s3] sm:$0xff]
        %v321 = vld [vmem:[%s3 + $0x8] sm:$0xff]
        %v322 = vld [vmem:[%s3 + $0x10] sm:$0xff]
        %v323 = vld [vmem:[%s3 + $0x18] sm:$0xff]
        %v324 = vpack.c.bf16 %v321, %v320
        %v325 = vpack.c.bf16 %v323, %v322
        %v327 = vlaneseq
        %v328 = vshrl.u32 %v327, 7
        %v329 = vsub.s32 0, %v328
        %v330 = vrot.slane %v282, %v329
        %v333 = vsel %vm283, %v319, 0
        %335 = vmatprep.subr.bf16.mxu0 0
        %336 = vmatpush1.bf16.msra.mxu0 0
        %337 = vmatprep.subr.bf16.mxu0 0
        %338 = vmatpush1.bf16.msra.mxu0 0
        %339 = vmatprep.subr.bf16.mxu0 0
        %340 = vmatpush1.bf16.msra.mxu0 0
        %341 = vmatprep.subr.bf16.mxu0 0
        %342 = vmatpush1.bf16.msra.mxu0 0
        %343 = vmatprep.subr.bf16.mxu0 0
        %344 = vmatpush1.bf16.msra.mxu0 0
        %345 = vmatprep.subr.bf16.mxu0 0
        %346 = vmatpush1.bf16.msra.mxu0 0
        %347 = vmatprep.subr.bf16.mxu0 0
        %348 = vmatpush1.bf16.msra.mxu0 %v325
        %349 = vmatprep.subr.bf16.mxu0 0
        %350 = vmatpush1.bf16.msra.mxu0 %v324
        %351 = vmatprep.subr.bf16.mxu0 0
        %352 = vmatpush2.bf16.msra.mxu0 0
        %353 = vmatprep.subr.bf16.mxu0 0
        %354 = vmatpush2.bf16.msra.mxu0 0
        %355 = vmatprep.subr.bf16.mxu0 0
        %356 = vmatpush2.bf16.msra.mxu0 0
        %357 = vmatprep.subr.bf16.mxu0 0
        %358 = vmatpush2.bf16.msra.mxu0 0
        %359 = vmatprep.subr.bf16.mxu0 0
        %360 = vmatpush2.bf16.msra.mxu0 0
        %361 = vmatprep.subr.bf16.mxu0 0
        %362 = vmatpush2.bf16.msra.mxu0 0
        %363 = vmatprep.subr.bf16.mxu0 0
        %364 = vmatpush2.bf16.msra.mxu0 0
        %365 = vmatprep.subr.bf16.mxu0 0
        %366 = vmatpush2.bf16.msra.mxu0 0
        %367 = vmatprep.mubr.bf16.mxu0 0
        %368 = vmatmul.mubr.bf16.gmra.mxu0 %v333
        %v369 = vpop.f32.mrf.mxu0
        %v370 = vadd.f32 %v330, %v369
        %v371 = vpop.f32.mrf.mxu0
        %v372 = vpop.f32.mrf.mxu0
        %v373 = vpop.f32.mrf.mxu0
        %374 = vdwg.mxu0
        %375 = vst.msk [vmem:[%s273] sm:$0xff] %vm283, %v370
        %377 = vrot.lane.b32.xlu0 %v370, 96
        %v378 = vpop.permute.xlu0 %377
        %vm380 = vcmask 523264
        %381 = vst.msk [vmem:[%s277] sm:$0xff] %vm380, %v378
        %p382 = scmp.lt.s32.totalorder %s21, 1
        %s383 = scalar_select %p382, %s21, 1
        %s384 = smul.addr %s383, 8
        %s385 = scalar_lea.vmem %s5, %s384
        %p386 = scmp.lt.s32.totalorder %s21, 1
        %s387 = scalar_select %p386, %s21, 1
        %s388 = smul.addr %s387, 8
        %s389 = scalar_lea.vmem %s6, %s388
        // Predicated region
        $region45: #{_lambda_.40} parent=39 // pred_check
          %p390 = pneg %p149
        $region46: #{_lambda_.40} parent=39 // pred_check_branch
          %392 = sbr.rel (%p390) target = $region48
        $region47: #{_lambda_.40} parent=39 // pred_region
          _
        $region48: #{_lambda_.40} parent=39 // pred_fallthru
          _
        // Predicated region
        $region49: #{_lambda_.40} parent=39 // pred_check
          %p393 = pneg %p175
        $region50: #{_lambda_.40} parent=39 // pred_check_branch
          %395 = sbr.rel (%p393) target = $region52
        $region51: #{_lambda_.40} parent=39 // pred_region
          _
        $region52: #{_lambda_.40} parent=39 // pred_fallthru
          _
      $region40: #{_lambda_.40} parent=5 // pred_fallthru
        _
      %p396 = scmp.le.s32.totalorder 2, %s16
      // Predicated region
      $region53: #{_lambda_.40} parent=5 // pred_check
        %p397 = pneg %p396
      $region54: #{_lambda_.40} parent=5 // pred_check_branch
        %399 = sbr.rel (%p397) target = $region56
      $region55: #{_lambda_.40} parent=5 // pred_region
        %s400 = ssub.s32 %s16, 2
        // Predicated region
        $region57: #{_lambda_.40} parent=55 // pred_check
          %p401 = pneg %p155
        $region58: #{_lambda_.40} parent=55 // pred_check_branch
          %403 = sbr.rel (%p401) target = $region60
        $region59: #{_lambda_.40} parent=55 // pred_region
          %p404 = scmp.lt.s32.totalorder %s22, 1
          %s405 = scalar_select %p404, %s22, 1
          %s406 = smul.addr %s405, 8
          %s407 = scalar_lea.vmem %s5, %s406
        $region60: #{_lambda_.40} parent=55 // pred_fallthru
          _
        // Predicated region
        $region61: #{_lambda_.40} parent=55 // pred_check
          %p408 = pneg %p181
        $region62: #{_lambda_.40} parent=55 // pred_check_branch
          %410 = sbr.rel (%p408) target = $region64
        $region63: #{_lambda_.40} parent=55 // pred_region
          %p411 = scmp.lt.s32.totalorder %s22, 1
          %s412 = scalar_select %p411, %s22, 1
          %s413 = smul.addr %s412, 8
          %s414 = scalar_lea.vmem %s6, %s413
        $region64: #{_lambda_.40} parent=55 // pred_fallthru
          _
      $region56: #{_lambda_.40} parent=5 // pred_fallthru
        _
    $region6: #{_lambda_.40} parent=1 // loop_footer
      %s20 = sadd.s32 1, %s16
    $region7: #{_lambda_.40} parent=1 // loop_footer_branch
      %15 = sbr.rel target = $region3
    $region8: #{_lambda_.40} parent=1 // loop_exit
      _
    %415 = vsyncpa [#allocation3], 1
    %s416 = scalar_lea.sflag [#allocation3], 1
    %417 = vsyncpa %s416, 1

// kernel: _lambda_.41
$region0: #{_lambda_.41}
  #allocation0 [shape = 'u32[]', space=smem, size = 0x4, offset = 0x4, fixed_abs, tag = 'smem constant byte address 0x4 - core index']
  #allocation1 [shape = 'u32[144,128]{1,0:T(1,128)}', space=vmem, size = 0x12000, scoped, tag = 'internal scratch']
  %s0 = inlined_call_operand.vmem [shape: f32[2,8,32], index: 0, kind: input, shape index: {}]
  %s1 = inlined_call_operand.vmem [shape: f32[2,8,64], index: 1, kind: input, shape index: {}]
  %s2 = inlined_call_operand.vmem [shape: f32[32,32], index: 2, kind: input, shape index: {}]
  %s3 = inlined_call_operand.vmem [shape: f32[1,32], index: 3, kind: input, shape index: {}]
  %s4 = inlined_call_operand.vmem [shape: f32[2,8,32], index: 4, kind: output, shape index: {}]
  %s5 = sld [smem:[#allocation0]]
  $region49: #{_lambda_.41} parent=0
    _
  %s7 = ssub.s32 1, %s5
  %s8 = scalar_select 0, %s7, %s5
  loop: start=0, step=1, limit=4
  $region2: #{_lambda_.41} parent=0 // loop_pre_header
    _
  $region3: #{_lambda_.41} parent=0 // loop_header
    %s10 = sphi 0, %s14
    %p11 = scmp.ge.s32.totalorder %s10, 4
    %s20 = sphi 0, %s22
    %s23 = sphi 0, %s20
    %s24 = sphi 0, %s23
    %s40 = sphi 0, %s24
    %s46 = sphi 0, %s48
    %s49 = sphi 0, %s46
    %s50 = sphi 0, %s49
    %s66 = sphi 0, %s50
    %s70 = sphi 0, %s70
    %s72 = sphi 0, %s70
    %s73 = sphi 0, %s72
    %s87 = sphi 0, %s73
    %s91 = sphi 0, %s91
    %s93 = sphi 0, %s91
    %s94 = sphi 0, %s93
    %s108 = sphi 0, %s94
    %s114 = sphi 0, %s116
    %s117 = sphi 0, %s114
    %s118 = sphi 0, %s117
    %s134 = sphi 0, %s118
  $region4: #{_lambda_.41} parent=0 // loop_header_branch
    %13 = sbr.rel (%p11) target = $region8
  $region5: #{_lambda_.41} parent=0 // loop_body
    %s15 = ssub.s32 %s10, 1
    %s16 = ssub.s32 %s10, 2
    %s17 = sadd.s32 %s10, 1
    %s18 = ssub.s32 %s10, %s17
    %p19 = scmp.eq.s32.totalorder %s18, 0
    %s21 = sadd.s32 %s20, 1
    %s22 = scalar_select %p19, %s20, %s21
    %p25 = pneg %p19
    %p26 = scmp.eq.s32.totalorder %s10, 1
    %p27 = por %p25, %p26
    %p28 = scmp.ne.s32.totalorder %s20, %s23
    %p29 = scmp.eq.s32.totalorder %s10, 0
    %p30 = por %p28, %p29
    %p31 = scmp.ne.s32.totalorder %s20, %s23
    %p32 = scmp.eq.s32.totalorder %s15, 1
    %p33 = por %p31, %p32
    %p34 = scmp.ne.s32.totalorder %s23, %s24
    %p35 = scmp.eq.s32.totalorder %s15, 0
    %p36 = por %p34, %p35
    %p37 = scmp.ne.s32.totalorder %s23, %s24
    %p38 = scmp.eq.s32.totalorder %s16, 1
    %p39 = por %p37, %p38
    %p41 = scmp.ne.s32.totalorder %s24, %s40
    %p42 = scmp.eq.s32.totalorder %s16, 0
    %p43 = por %p41, %p42
    %s44 = ssub.s32 %s10, %s17
    %p45 = scmp.eq.s32.totalorder %s44, 0
    %s47 = sadd.s32 %s46, 1
    %s48 = scalar_select %p45, %s46, %s47
    %p51 = pneg %p45
    %p52 = scmp.eq.s32.totalorder %s10, 1
    %p53 = por %p51, %p52
    %p54 = scmp.ne.s32.totalorder %s46, %s49
    %p55 = scmp.eq.s32.totalorder %s10, 0
    %p56 = por %p54, %p55
    %p57 = scmp.ne.s32.totalorder %s46, %s49
    %p58 = scmp.eq.s32.totalorder %s15, 1
    %p59 = por %p57, %p58
    %p60 = scmp.ne.s32.totalorder %s49, %s50
    %p61 = scmp.eq.s32.totalorder %s15, 0
    %p62 = por %p60, %p61
    %p63 = scmp.ne.s32.totalorder %s49, %s50
    %p64 = scmp.eq.s32.totalorder %s16, 1
    %p65 = por %p63, %p64
    %p67 = scmp.ne.s32.totalorder %s50, %s66
    %p68 = scmp.eq.s32.totalorder %s16, 0
    %p69 = por %p67, %p68
    %s71 = sadd.s32 %s70, 1
    %p74 = scmp.eq.s32.totalorder %s10, 1
    %p75 = scmp.ne.s32.totalorder %s70, %s72
    %p76 = scmp.eq.s32.totalorder %s10, 0
    %p77 = por %p75, %p76
    %p78 = scmp.ne.s32.totalorder %s70, %s72
    %p79 = scmp.eq.s32.totalorder %s15, 1
    %p80 = por %p78, %p79
    %p81 = scmp.ne.s32.totalorder %s72, %s73
    %p82 = scmp.eq.s32.totalorder %s15, 0
    %p83 = por %p81, %p82
    %p84 = scmp.ne.s32.totalorder %s72, %s73
    %p85 = scmp.eq.s32.totalorder %s16, 1
    %p86 = por %p84, %p85
    %p88 = scmp.ne.s32.totalorder %s73, %s87
    %p89 = scmp.eq.s32.totalorder %s16, 0
    %p90 = por %p88, %p89
    %s92 = sadd.s32 %s91, 1
    %p95 = scmp.eq.s32.totalorder %s10, 1
    %p96 = scmp.ne.s32.totalorder %s91, %s93
    %p97 = scmp.eq.s32.totalorder %s10, 0
    %p98 = por %p96, %p97
    %p99 = scmp.ne.s32.totalorder %s91, %s93
    %p100 = scmp.eq.s32.totalorder %s15, 1
    %p101 = por %p99, %p100
    %p102 = scmp.ne.s32.totalorder %s93, %s94
    %p103 = scmp.eq.s32.totalorder %s15, 0
    %p104 = por %p102, %p103
    %p105 = scmp.ne.s32.totalorder %s93, %s94
    %p106 = scmp.eq.s32.totalorder %s16, 1
    %p107 = por %p105, %p106
    %p109 = scmp.ne.s32.totalorder %s94, %s108
    %p110 = scmp.eq.s32.totalorder %s16, 0
    %p111 = por %p109, %p110
    %s112 = ssub.s32 %s10, %s17
    %p113 = scmp.eq.s32.totalorder %s112, 0
    %s115 = sadd.s32 %s114, 1
    %s116 = scalar_select %p113, %s114, %s115
    %p119 = pneg %p113
    %p120 = scmp.eq.s32.totalorder %s10, 1
    %p121 = por %p119, %p120
    %p122 = scmp.ne.s32.totalorder %s114, %s117
    %p123 = scmp.eq.s32.totalorder %s10, 0
    %p124 = por %p122, %p123
    %p125 = scmp.ne.s32.totalorder %s114, %s117
    %p126 = scmp.eq.s32.totalorder %s15, 1
    %p127 = por %p125, %p126
    %p128 = scmp.ne.s32.totalorder %s117, %s118
    %p129 = scmp.eq.s32.totalorder %s15, 0
    %p130 = por %p128, %p129
    %p131 = scmp.ne.s32.totalorder %s117, %s118
    %p132 = scmp.eq.s32.totalorder %s16, 1
    %p133 = por %p131, %p132
    %p135 = scmp.ne.s32.totalorder %s118, %s134
    %p136 = scmp.eq.s32.totalorder %s16, 0
    %p137 = por %p135, %p136
    %p138 = scmp.le.s32.totalorder 1, %s10
    %p139 = scmp.lt.s32.totalorder %s10, 3
    %p140 = pnand %p138, %p139
    %p141 = pneg %p140
    // Predicated region
    $region9: #{_lambda_.41} parent=5 // pred_check
      _
    $region10: #{_lambda_.41} parent=5 // pred_check_branch
      %143 = sbr.rel (%p140) target = $region12
    $region11: #{_lambda_.41} parent=5 // pred_region
      %s144 = ssub.s32 %s10, 1
      // Predicated region
      $region13: #{_lambda_.41} parent=11 // pred_check
        %p145 = pneg %p83
      $region14: #{_lambda_.41} parent=11 // pred_check_branch
        %147 = sbr.rel (%p145) target = $region16
      $region15: #{_lambda_.41} parent=11 // pred_region
        _
      $region16: #{_lambda_.41} parent=11 // pred_fallthru
        _
      // Predicated region
      $region17: #{_lambda_.41} parent=11 // pred_check
        %p148 = pneg %p104
      $region18: #{_lambda_.41} parent=11 // pred_check_branch
        %150 = sbr.rel (%p148) target = $region20
      $region19: #{_lambda_.41} parent=11 // pred_region
        _
      $region20: #{_lambda_.41} parent=11 // pred_fallthru
        _
    $region12: #{_lambda_.41} parent=5 // pred_fallthru
      _
    %p151 = scmp.lt.s32.totalorder %s10, 2
    // Predicated region
    $region21: #{_lambda_.41} parent=5 // pred_check
      %p152 = pneg %p151
    $region22: #{_lambda_.41} parent=5 // pred_check_branch
      %154 = sbr.rel (%p152) target = $region24
    $region23: #{_lambda_.41} parent=5 // pred_region
      // Predicated region
      $region25: #{_lambda_.41} parent=23 // pred_check
        %p155 = pneg %p30
      $region26: #{_lambda_.41} parent=23 // pred_check_branch
        %157 = sbr.rel (%p155) target = $region28
      $region27: #{_lambda_.41} parent=23 // pred_region
        %p158 = scmp.lt.s32.totalorder %s10, 1
        %s159 = scalar_select %p158, %s10, 1
        %s160 = smul.addr %s159, 8
        %s161 = scalar_lea.vmem %s0, %s160
      $region28: #{_lambda_.41} parent=23 // pred_fallthru
        _
      // Predicated region
      $region29: #{_lambda_.41} parent=23 // pred_check
        %p162 = pneg %p56
      $region30: #{_lambda_.41} parent=23 // pred_check_branch
        %164 = sbr.rel (%p162) target = $region32
      $region31: #{_lambda_.41} parent=23 // pred_region
        %p165 = scmp.lt.s32.totalorder %s10, 1
        %s166 = scalar_select %p165, %s10, 1
        %s167 = smul.addr %s166, 8
        %s168 = scalar_lea.vmem %s1, %s167
      $region32: #{_lambda_.41} parent=23 // pred_fallthru
        _
    $region24: #{_lambda_.41} parent=5 // pred_fallthru
      _
    %p169 = scmp.le.s32.totalorder 1, %s10
    %p170 = scmp.lt.s32.totalorder %s10, 3
    %p171 = pnand %p169, %p170
    %p172 = pneg %p171
    // Predicated region
    $region33: #{_lambda_.41} parent=5 // pred_check
      _
    $region34: #{_lambda_.41} parent=5 // pred_check_branch
      %174 = sbr.rel (%p171) target = $region36
    $region35: #{_lambda_.41} parent=5 // pred_region
      %s175 = ssub.s32 %s10, 1
      %p176 = scmp.lt.s32.totalorder %s15, 1
      %s177 = scalar_select %p176, %s15, 1
      %s178 = smul.addr %s177, 8
      %s179 = scalar_lea.vmem %s0, %s178
      %p180 = pneg %p36
      %p181 = pneg %p33
      %p182 = scmp.lt.s32.totalorder %s15, 1
      %s183 = scalar_select %p182, %s15, 1
      %s184 = smul.addr %s183, 8
      %s185 = scalar_lea.vmem %s1, %s184
      %p186 = pneg %p62
      %p187 = pneg %p59
      %p188 = pneg %p83
      %p189 = pneg %p80
      %p190 = pneg %p104
      %p191 = pneg %p101
      %p192 = pneg %p130
      %p193 = pneg %p127
      %p194 = scmp.lt.s32.totalorder %s15, 1
      %s195 = scalar_select %p194, %s15, 1
      %s196 = smul.addr %s195, 8
      %s197 = scalar_lea.vmem %s4, %s196
      %p198 = scmp.lt.s32.totalorder %s15, 1
      %s199 = scalar_select %p198, %s15, 1
      %s200 = smul.addr %s199, 8
      %s201 = scalar_lea.vmem %s0, %s200
      %p202 = scmp.lt.s32.totalorder %s15, 1
      %s203 = scalar_select %p202, %s15, 1
      %s204 = smul.addr %s203, 8
      %s205 = scalar_lea.vmem %s1, %s204
      %p206 = scmp.lt.s32.totalorder %s15, 1
      %s207 = scalar_select %p206, %s15, 1
      %s208 = smul.addr %s207, 8
      %s209 = scalar_lea.vmem %s4, %s208
      %v211 = vld [vmem:[%s201] sm:$0xff]
      %v212 = vld [vmem:[%s205] sm:$0xff]
      %v213 = vld [vmem:[%s2] sm:$0xff]
      %v214 = vld [vmem:[%s2 + $0x8] sm:$0xff]
      %v215 = vld [vmem:[%s2 + $0x10] sm:$0xff]
      %v216 = vld [vmem:[%s2 + $0x18] sm:$0xff]
      %v217 = vld [vmem:[%s3] sm:$0x1]
      %v218 = vpack.c.bf16 %v211, %v211
      %v219 = vpack.c.bf16 %v212, %v212
      %vm220 = vcmask 64512
      %v222 = vsel %vm220, %v218, 0
      %v225 = vsel %vm220, %v219, 0
      %227 = vmatprep.subr.bf16.mxu0 0
      %228 = vmatpush1.bf16.xpose.msra.mxu0 0
      %229 = vmatprep.subr.bf16.mxu0 0
      %230 = vmatpush1.bf16.xpose.msra.mxu0 0
      %231 = vmatprep.subr.bf16.mxu0 0
      %232 = vmatpush1.bf16.xpose.msra.mxu0 0
      %233 = vmatprep.subr.bf16.mxu0 0
      %234 = vmatpush1.bf16.xpose.msra.mxu0 0
      %235 = vmatprep.subr.bf16.mxu0 0
      %236 = vmatpush1.bf16.xpose.msra.mxu0 0
      %237 = vmatprep.subr.bf16.mxu0 0
      %238 = vmatpush1.bf16.xpose.msra.mxu0 0
      %239 = vmatprep.subr.bf16.mxu0 0
      %240 = vmatpush1.bf16.xpose.msra.mxu0 0
      %241 = vmatprep.subr.bf16.mxu0 0
      %242 = vmatpush1.bf16.xpose.msra.mxu0 %v225
      %243 = vmatprep.subr.bf16.mxu0 0
      %244 = vmatpush2.bf16.xpose.msra.mxu0 0
      %245 = vmatprep.subr.bf16.mxu0 0
      %246 = vmatpush2.bf16.xpose.msra.mxu0 0
      %247 = vmatprep.subr.bf16.mxu0 0
      %248 = vmatpush2.bf16.xpose.msra.mxu0 0
      %249 = vmatprep.subr.bf16.mxu0 0
      %250 = vmatpush2.bf16.xpose.msra.mxu0 0
      %251 = vmatprep.subr.bf16.mxu0 0
      %252 = vmatpush2.bf16.xpose.msra.mxu0 0
      %253 = vmatprep.subr.bf16.mxu0 0
      %254 = vmatpush2.bf16.xpose.msra.mxu0 0
      %255 = vmatprep.subr.bf16.mxu0 0
      %256 = vmatpush2.bf16.xpose.msra.mxu0 0
      %257 = vmatprep.subr.bf16.mxu0 0
      %258 = vmatpush2.bf16.xpose.msra.mxu0 0
      %259 = vmatprep.mubr.bf16.mxu0 0
      %260 = vmatmul.mubr.bf16.gmra.mxu0 %v222
      %v261 = vpop.f32.mrf.mxu0
      %v262 = vadd.f32 0.0, %v261
      %v263 = vpop.f32.mrf.mxu0
      %v264 = vpop.f32.mrf.mxu0
      %v265 = vpop.f32.mrf.mxu0
      %266 = vdwg.mxu0
      %v267 = vmul.f32 %v262, 0.35355338
      %v268 = vsel %vm220, %v267, -inf
      %269 = vmax.xlane.f32.xlu0 %v268
      %v270 = vpop.xlane.xlu0 %269
      %v271 = vsub.f32 %v267, %v270
      %v272 = vmul.f32 %v271, 1.442695
      %v273 = vpow.pop %v272
      %v274 = vsel %vm220, %v273, 0.0
      %275 = vadd.xlane.f32.xlu0 %v274
      %v276 = vpop.xlane.xlu0 %275
      %v277 = vrcp.pop %v276
      %v278 = vmul.f32 %v273, %v277
      %v279 = vpack.c.bf16 %v278, %v278
      %281 = vrot.lane.b32.xlu0 %v219, 96
      %v282 = vpop.permute.xlu0 %281
      %v284 = vsel %vm220, %v279, 0
      %vm286 = vcmask 1043456
      %v288 = vsel %vm286, %v282, 0
      %290 = vmatprep.subr.bf16.mxu0 0
      %291 = vmatpush1.bf16.msra.mxu0 0
      %292 = vmatprep.subr.bf16.mxu0 0
      %293 = vmatpush1.bf16.msra.mxu0 0
      %294 = vmatprep.subr.bf16.mxu0 0
      %295 = vmatpush1.bf16.msra.mxu0 0
      %296 = vmatprep.subr.bf16.mxu0 0
      %297 = vmatpush1.bf16.msra.mxu0 0
      %298 = vmatprep.subr.bf16.mxu0 0
      %299 = vmatpush1.bf16.msra.mxu0 0
      %300 = vmatprep.subr.bf16.mxu0 0
      %301 = vmatpush1.bf16.msra.mxu0 0
      %302 = vmatprep.subr.bf16.mxu0 0
      %303 = vmatpush1.bf16.msra.mxu0 0
      %304 = vmatprep.subr.bf16.mxu0 0
      %305 = vmatpush1.bf16.msra.mxu0 %v288
      %306 = vmatprep.subr.bf16.mxu0 0
      %307 = vmatpush2.bf16.msra.mxu0 0
      %308 = vmatprep.subr.bf16.mxu0 0
      %309 = vmatpush2.bf16.msra.mxu0 0
      %310 = vmatprep.subr.bf16.mxu0 0
      %311 = vmatpush2.bf16.msra.mxu0 0
      %312 = vmatprep.subr.bf16.mxu0 0
      %313 = vmatpush2.bf16.msra.mxu0 0
      %314 = vmatprep.subr.bf16.mxu0 0
      %315 = vmatpush2.bf16.msra.mxu0 0
      %316 = vmatprep.subr.bf16.mxu0 0
      %317 = vmatpush2.bf16.msra.mxu0 0
      %318 = vmatprep.subr.bf16.mxu0 0
      %319 = vmatpush2.bf16.msra.mxu0 0
      %320 = vmatprep.subr.bf16.mxu0 0
      %321 = vmatpush2.bf16.msra.mxu0 0
      %322 = vmatprep.mubr.bf16.mxu0 0
      %323 = vmatmul.mubr.bf16.gmra.mxu0 %v284
      %v324 = vpop.f32.mrf.mxu0
      %v325 = vadd.f32 0.0, %v324
      %v326 = vpop.f32.mrf.mxu0
      %v327 = vpop.f32.mrf.mxu0
      %v328 = vpop.f32.mrf.mxu0
      %329 = vdwg.mxu0
      %v330 = vpack.c.bf16 %v213, %v213
      %v331 = vpack.c.bf16 %v325, %v325
      %v333 = vsel %vm220, %v331, 0
      %v336 = vsel %vm286, %v330, 0
      %338 = vmatprep.subr.bf16.mxu0 0
      %339 = vmatpush1.bf16.msra.mxu0 0
      %340 = vmatprep.subr.bf16.mxu0 0
      %341 = vmatpush1.bf16.msra.mxu0 0
      %342 = vmatprep.subr.bf16.mxu0 0
      %343 = vmatpush1.bf16.msra.mxu0 0
      %344 = vmatprep.subr.bf16.mxu0 0
      %345 = vmatpush1.bf16.msra.mxu0 0
      %346 = vmatprep.subr.bf16.mxu0 0
      %347 = vmatpush1.bf16.msra.mxu0 0
      %348 = vmatprep.subr.bf16.mxu0 0
      %349 = vmatpush1.bf16.msra.mxu0 0
      %350 = vmatprep.subr.bf16.mxu0 0
      %351 = vmatpush1.bf16.msra.mxu0 0
      %352 = vmatprep.subr.bf16.mxu0 0
      %353 = vmatpush1.bf16.msra.mxu0 %v336
      %354 = vmatprep.subr.bf16.mxu0 0
      %355 = vmatpush2.bf16.msra.mxu0 0
      %356 = vmatprep.subr.bf16.mxu0 0
      %357 = vmatpush2.bf16.msra.mxu0 0
      %358 = vmatprep.subr.bf16.mxu0 0
      %359 = vmatpush2.bf16.msra.mxu0 0
      %360 = vmatprep.subr.bf16.mxu0 0
      %361 = vmatpush2.bf16.msra.mxu0 0
      %362 = vmatprep.subr.bf16.mxu0 0
      %363 = vmatpush2.bf16.msra.mxu0 0
      %364 = vmatprep.subr.bf16.mxu0 0
      %365 = vmatpush2.bf16.msra.mxu0 0
      %366 = vmatprep.subr.bf16.mxu0 0
      %367 = vmatpush2.bf16.msra.mxu0 0
      %368 = vmatprep.subr.bf16.mxu0 0
      %369 = vmatpush2.bf16.msra.mxu0 0
      %370 = vmatprep.mubr.bf16.mxu0 0
      %371 = vmatmul.mubr.bf16.gmra.mxu0 %v333
      %v372 = vpop.f32.mrf.mxu0
      %v373 = vadd.f32 0.0, %v372
      %v374 = vpop.f32.mrf.mxu0
      %v375 = vpop.f32.mrf.mxu0
      %v376 = vpop.f32.mrf.mxu0
      %377 = vdwg.mxu0
      %v379 = vlaneseq
      %v380 = vshrl.u32 %v379, 7
      %v381 = vsub.s32 0, %v380
      %v382 = vrot.slane %v217, %v381
      %v384 = vadd.f32 %v382, %v373
      %386 = vrot.lane.b32.xlu0 %v218, 120
      %v387 = vpop.permute.xlu0 %386
      %388 = vrot.lane.b32.xlu0 %v219, 120
      %v389 = vpop.permute.xlu0 %388
      %v391 = vsel %vm220, %v387, 0
      %v394 = vsel %vm220, %v389, 0
      %396 = vmatprep.subr.bf16.mxu0 0
      %397 = vmatpush1.bf16.xpose.msra.mxu0 0
      %398 = vmatprep.subr.bf16.mxu0 0
      %399 = vmatpush1.bf16.xpose.msra.mxu0 0
      %400 = vmatprep.subr.bf16.mxu0 0
      %401 = vmatpush1.bf16.xpose.msra.mxu0 0
      %402 = vmatprep.subr.bf16.mxu0 0
      %403 = vmatpush1.bf16.xpose.msra.mxu0 0
      %404 = vmatprep.subr.bf16.mxu0 0
      %405 = vmatpush1.bf16.xpose.msra.mxu0 0
      %406 = vmatprep.subr.bf16.mxu0 0
      %407 = vmatpush1.bf16.xpose.msra.mxu0 0
      %408 = vmatprep.subr.bf16.mxu0 0
      %409 = vmatpush1.bf16.xpose.msra.mxu0 0
      %410 = vmatprep.subr.bf16.mxu0 0
      %411 = vmatpush1.bf16.xpose.msra.mxu0 %v394
      %412 = vmatprep.subr.bf16.mxu0 0
      %413 = vmatpush2.bf16.xpose.msra.mxu0 0
      %414 = vmatprep.subr.bf16.mxu0 0
      %415 = vmatpush2.bf16.xpose.msra.mxu0 0
      %416 = vmatprep.subr.bf16.mxu0 0
      %417 = vmatpush2.bf16.xpose.msra.mxu0 0
      %418 = vmatprep.subr.bf16.mxu0 0
      %419 = vmatpush2.bf16.xpose.msra.mxu0 0
      %420 = vmatprep.subr.bf16.mxu0 0
      %421 = vmatpush2.bf16.xpose.msra.mxu0 0
      %422 = vmatprep.subr.bf16.mxu0 0
      %423 = vmatpush2.bf16.xpose.msra.mxu0 0
      %424 = vmatprep.subr.bf16.mxu0 0
      %425 = vmatpush2.bf16.xpose.msra.mxu0 0
      %426 = vmatprep.subr.bf16.mxu0 0
      %427 = vmatpush2.bf16.xpose.msra.mxu0 0
      %428 = vmatprep.mubr.bf16.mxu0 0
      %429 = vmatmul.mubr.bf16.gmra.mxu0 %v391
      %v430 = vpop.f32.mrf.mxu0
      %v431 = vadd.f32 0.0, %v430
      %v432 = vpop.f32.mrf.mxu0
      %v433 = vpop.f32.mrf.mxu0
      %v434 = vpop.f32.mrf.mxu0
      %435 = vdwg.mxu0
      %v436 = vmul.f32 %v431, 0.35355338
      %v437 = vsel %vm220, %v436, -inf
      %438 = vmax.xlane.f32.xlu0 %v437
      %v439 = vpop.xlane.xlu0 %438
      %v440 = vsub.f32 %v436, %v439
      %v441 = vmul.f32 %v440, 1.442695
      %v442 = vpow.pop %v441
      %v443 = vsel %vm220, %v442, 0.0
      %444 = vadd.xlane.f32.xlu0 %v443
      %v445 = vpop.xlane.xlu0 %444
      %v446 = vrcp.pop %v445
      %v447 = vmul.f32 %v442, %v446
      %v448 = vpack.c.bf16 %v447, %v447
      %449 = vrot.lane.b32.xlu0 %v219, 88
      %v450 = vpop.permute.xlu0 %449
      %v452 = vsel %vm220, %v448, 0
      %v455 = vsel %vm286, %v450, 0
      %457 = vmatprep.subr.bf16.mxu0 0
      %458 = vmatpush1.bf16.msra.mxu0 0
      %459 = vmatprep.subr.bf16.mxu0 0
      %460 = vmatpush1.bf16.msra.mxu0 0
      %461 = vmatprep.subr.bf16.mxu0 0
      %462 = vmatpush1.bf16.msra.mxu0 0
      %463 = vmatprep.subr.bf16.mxu0 0
      %464 = vmatpush1.bf16.msra.mxu0 0
      %465 = vmatprep.subr.bf16.mxu0 0
      %466 = vmatpush1.bf16.msra.mxu0 0
      %467 = vmatprep.subr.bf16.mxu0 0
      %468 = vmatpush1.bf16.msra.mxu0 0
      %469 = vmatprep.subr.bf16.mxu0 0
      %470 = vmatpush1.bf16.msra.mxu0 0
      %471 = vmatprep.subr.bf16.mxu0 0
      %472 = vmatpush1.bf16.msra.mxu0 %v455
      %473 = vmatprep.subr.bf16.mxu0 0
      %474 = vmatpush2.bf16.msra.mxu0 0
      %475 = vmatprep.subr.bf16.mxu0 0
      %476 = vmatpush2.bf16.msra.mxu0 0
      %477 = vmatprep.subr.bf16.mxu0 0
      %478 = vmatpush2.bf16.msra.mxu0 0
      %479 = vmatprep.subr.bf16.mxu0 0
      %480 = vmatpush2.bf16.msra.mxu0 0
      %481 = vmatprep.subr.bf16.mxu0 0
      %482 = vmatpush2.bf16.msra.mxu0 0
      %483 = vmatprep.subr.bf16.mxu0 0
      %484 = vmatpush2.bf16.msra.mxu0 0
      %485 = vmatprep.subr.bf16.mxu0 0
      %486 = vmatpush2.bf16.msra.mxu0 0
      %487 = vmatprep.subr.bf16.mxu0 0
      %488 = vmatpush2.bf16.msra.mxu0 0
      %489 = vmatprep.mubr.bf16.mxu0 0
      %490 = vmatmul.mubr.bf16.gmra.mxu0 %v452
      %v491 = vpop.f32.mrf.mxu0
      %v492 = vadd.f32 0.0, %v491
      %v493 = vpop.f32.mrf.mxu0
      %v494 = vpop.f32.mrf.mxu0
      %v495 = vpop.f32.mrf.mxu0
      %496 = vdwg.mxu0
      %v497 = vpack.c.bf16 %v214, %v214
      %v498 = vpack.c.bf16 %v492, %v492
      %v500 = vsel %vm220, %v498, 0
      %v503 = vsel %vm286, %v497, 0
      %505 = vmatprep.subr.bf16.mxu0 0
      %506 = vmatpush1.bf16.msra.mxu0 0
      %507 = vmatprep.subr.bf16.mxu0 0
      %508 = vmatpush1.bf16.msra.mxu0 0
      %509 = vmatprep.subr.bf16.mxu0 0
      %510 = vmatpush1.bf16.msra.mxu0 0
      %511 = vmatprep.subr.bf16.mxu0 0
      %512 = vmatpush1.bf16.msra.mxu0 0
      %513 = vmatprep.subr.bf16.mxu0 0
      %514 = vmatpush1.bf16.msra.mxu0 0
      %515 = vmatprep.subr.bf16.mxu0 0
      %516 = vmatpush1.bf16.msra.mxu0 0
      %517 = vmatprep.subr.bf16.mxu0 0
      %518 = vmatpush1.bf16.msra.mxu0 0
      %519 = vmatprep.subr.bf16.mxu0 0
      %520 = vmatpush1.bf16.msra.mxu0 %v503
      %521 = vmatprep.subr.bf16.mxu0 0
      %522 = vmatpush2.bf16.msra.mxu0 0
      %523 = vmatprep.subr.bf16.mxu0 0
      %524 = vmatpush2.bf16.msra.mxu0 0
      %525 = vmatprep.subr.bf16.mxu0 0
      %526 = vmatpush2.bf16.msra.mxu0 0
      %527 = vmatprep.subr.bf16.mxu0 0
      %528 = vmatpush2.bf16.msra.mxu0 0
      %529 = vmatprep.subr.bf16.mxu0 0
      %530 = vmatpush2.bf16.msra.mxu0 0
      %531 = vmatprep.subr.bf16.mxu0 0
      %532 = vmatpush2.bf16.msra.mxu0 0
      %533 = vmatprep.subr.bf16.mxu0 0
      %534 = vmatpush2.bf16.msra.mxu0 0
      %535 = vmatprep.subr.bf16.mxu0 0
      %536 = vmatpush2.bf16.msra.mxu0 0
      %537 = vmatprep.mubr.bf16.mxu0 0
      %538 = vmatmul.mubr.bf16.gmra.mxu0 %v500
      %v539 = vpop.f32.mrf.mxu0
      %v540 = vadd.f32 0.0, %v539
      %v541 = vpop.f32.mrf.mxu0
      %v542 = vpop.f32.mrf.mxu0
      %v543 = vpop.f32.mrf.mxu0
      %544 = vdwg.mxu0
      %v545 = vadd.f32 %v384, %v540
      %546 = vrot.lane.b32.xlu0 %v218, 112
      %v547 = vpop.permute.xlu0 %546
      %548 = vrot.lane.b32.xlu0 %v219, 112
      %v549 = vpop.permute.xlu0 %548
      %v551 = vsel %vm220, %v547, 0
      %v554 = vsel %vm220, %v549, 0
      %556 = vmatprep.subr.bf16.mxu0 0
      %557 = vmatpush1.bf16.xpose.msra.mxu0 0
      %558 = vmatprep.subr.bf16.mxu0 0
      %559 = vmatpush1.bf16.xpose.msra.mxu0 0
      %560 = vmatprep.subr.bf16.mxu0 0
      %561 = vmatpush1.bf16.xpose.msra.mxu0 0
      %562 = vmatprep.subr.bf16.mxu0 0
      %563 = vmatpush1.bf16.xpose.msra.mxu0 0
      %564 = vmatprep.subr.bf16.mxu0 0
      %565 = vmatpush1.bf16.xpose.msra.mxu0 0
      %566 = vmatprep.subr.bf16.mxu0 0
      %567 = vmatpush1.bf16.xpose.msra.mxu0 0
      %568 = vmatprep.subr.bf16.mxu0 0
      %569 = vmatpush1.bf16.xpose.msra.mxu0 0
      %570 = vmatprep.subr.bf16.mxu0 0
      %571 = vmatpush1.bf16.xpose.msra.mxu0 %v554
      %572 = vmatprep.subr.bf16.mxu0 0
      %573 = vmatpush2.bf16.xpose.msra.mxu0 0
      %574 = vmatprep.subr.bf16.mxu0 0
      %575 = vmatpush2.bf16.xpose.msra.mxu0 0
      %576 = vmatprep.subr.bf16.mxu0 0
      %577 = vmatpush2.bf16.xpose.msra.mxu0 0
      %578 = vmatprep.subr.bf16.mxu0 0
      %579 = vmatpush2.bf16.xpose.msra.mxu0 0
      %580 = vmatprep.subr.bf16.mxu0 0
      %581 = vmatpush2.bf16.xpose.msra.mxu0 0
      %582 = vmatprep.subr.bf16.mxu0 0
      %583 = vmatpush2.bf16.xpose.msra.mxu0 0
      %584 = vmatprep.subr.bf16.mxu0 0
      %585 = vmatpush2.bf16.xpose.msra.mxu0 0
      %586 = vmatprep.subr.bf16.mxu0 0
      %587 = vmatpush2.bf16.xpose.msra.mxu0 0
      %588 = vmatprep.mubr.bf16.mxu0 0
      %589 = vmatmul.mubr.bf16.gmra.mxu0 %v551
      %v590 = vpop.f32.mrf.mxu0
      %v591 = vadd.f32 0.0, %v590
      %v592 = vpop.f32.mrf.mxu0
      %v593 = vpop.f32.mrf.mxu0
      %v594 = vpop.f32.mrf.mxu0
      %595 = vdwg.mxu0
      %v596 = vmul.f32 %v591, 0.35355338
      %v597 = vsel %vm220, %v596, -inf
      %598 = vmax.xlane.f32.xlu0 %v597
      %v599 = vpop.xlane.xlu0 %598
      %v600 = vsub.f32 %v596, %v599
      %v601 = vmul.f32 %v600, 1.442695
      %v602 = vpow.pop %v601
      %v603 = vsel %vm220, %v602, 0.0
      %604 = vadd.xlane.f32.xlu0 %v603
      %v605 = vpop.xlane.xlu0 %604
      %v606 = vrcp.pop %v605
      %v607 = vmul.f32 %v602, %v606
      %v608 = vpack.c.bf16 %v607, %v607
      %609 = vrot.lane.b32.xlu0 %v219, 80
      %v610 = vpop.permute.xlu0 %609
      %v612 = vsel %vm220, %v608, 0
      %v615 = vsel %vm286, %v610, 0
      %617 = vmatprep.subr.bf16.mxu0 0
      %618 = vmatpush1.bf16.msra.mxu0 0
      %619 = vmatprep.subr.bf16.mxu0 0
      %620 = vmatpush1.bf16.msra.mxu0 0
      %621 = vmatprep.subr.bf16.mxu0 0
      %622 = vmatpush1.bf16.msra.mxu0 0
      %623 = vmatprep.subr.bf16.mxu0 0
      %624 = vmatpush1.bf16.msra.mxu0 0
      %625 = vmatprep.subr.bf16.mxu0 0
      %626 = vmatpush1.bf16.msra.mxu0 0
      %627 = vmatprep.subr.bf16.mxu0 0
      %628 = vmatpush1.bf16.msra.mxu0 0
      %629 = vmatprep.subr.bf16.mxu0 0
      %630 = vmatpush1.bf16.msra.mxu0 0
      %631 = vmatprep.subr.bf16.mxu0 0
      %632 = vmatpush1.bf16.msra.mxu0 %v615
      %633 = vmatprep.subr.bf16.mxu0 0
      %634 = vmatpush2.bf16.msra.mxu0 0
      %635 = vmatprep.subr.bf16.mxu0 0
      %636 = vmatpush2.bf16.msra.mxu0 0
      %637 = vmatprep.subr.bf16.mxu0 0
      %638 = vmatpush2.bf16.msra.mxu0 0
      %639 = vmatprep.subr.bf16.mxu0 0
      %640 = vmatpush2.bf16.msra.mxu0 0
      %641 = vmatprep.subr.bf16.mxu0 0
      %642 = vmatpush2.bf16.msra.mxu0 0
      %643 = vmatprep.subr.bf16.mxu0 0
      %644 = vmatpush2.bf16.msra.mxu0 0
      %645 = vmatprep.subr.bf16.mxu0 0
      %646 = vmatpush2.bf16.msra.mxu0 0
      %647 = vmatprep.subr.bf16.mxu0 0
      %648 = vmatpush2.bf16.msra.mxu0 0
      %649 = vmatprep.mubr.bf16.mxu0 0
      %650 = vmatmul.mubr.bf16.gmra.mxu0 %v612
      %v651 = vpop.f32.mrf.mxu0
      %v652 = vadd.f32 0.0, %v651
      %v653 = vpop.f32.mrf.mxu0
      %v654 = vpop.f32.mrf.mxu0
      %v655 = vpop.f32.mrf.mxu0
      %656 = vdwg.mxu0
      %v657 = vpack.c.bf16 %v215, %v215
      %v658 = vpack.c.bf16 %v652, %v652
      %v660 = vsel %vm220, %v658, 0
      %v663 = vsel %vm286, %v657, 0
      %665 = vmatprep.subr.bf16.mxu0 0
      %666 = vmatpush1.bf16.msra.mxu0 0
      %667 = vmatprep.subr.bf16.mxu0 0
      %668 = vmatpush1.bf16.msra.mxu0 0
      %669 = vmatprep.subr.bf16.mxu0 0
      %670 = vmatpush1.bf16.msra.mxu0 0
      %671 = vmatprep.subr.bf16.mxu0 0
      %672 = vmatpush1.bf16.msra.mxu0 0
      %673 = vmatprep.subr.bf16.mxu0 0
      %674 = vmatpush1.bf16.msra.mxu0 0
      %675 = vmatprep.subr.bf16.mxu0 0
      %676 = vmatpush1.bf16.msra.mxu0 0
      %677 = vmatprep.subr.bf16.mxu0 0
      %678 = vmatpush1.bf16.msra.mxu0 0
      %679 = vmatprep.subr.bf16.mxu0 0
      %680 = vmatpush1.bf16.msra.mxu0 %v663
      %681 = vmatprep.subr.bf16.mxu0 0
      %682 = vmatpush2.bf16.msra.mxu0 0
      %683 = vmatprep.subr.bf16.mxu0 0
      %684 = vmatpush2.bf16.msra.mxu0 0
      %685 = vmatprep.subr.bf16.mxu0 0
      %686 = vmatpush2.bf16.msra.mxu0 0
      %687 = vmatprep.subr.bf16.mxu0 0
      %688 = vmatpush2.bf16.msra.mxu0 0
      %689 = vmatprep.subr.bf16.mxu0 0
      %690 = vmatpush2.bf16.msra.mxu0 0
      %691 = vmatprep.subr.bf16.mxu0 0
      %692 = vmatpush2.bf16.msra.mxu0 0
      %693 = vmatprep.subr.bf16.mxu0 0
      %694 = vmatpush2.bf16.msra.mxu0 0
      %695 = vmatprep.subr.bf16.mxu0 0
      %696 = vmatpush2.bf16.msra.mxu0 0
      %697 = vmatprep.mubr.bf16.mxu0 0
      %698 = vmatmul.mubr.bf16.gmra.mxu0 %v660
      %v699 = vpop.f32.mrf.mxu0
      %v700 = vadd.f32 0.0, %v699
      %v701 = vpop.f32.mrf.mxu0
      %v702 = vpop.f32.mrf.mxu0
      %v703 = vpop.f32.mrf.mxu0
      %704 = vdwg.mxu0
      %v705 = vadd.f32 %v545, %v700
      %706 = vrot.lane.b32.xlu0 %v218, 104
      %v707 = vpop.permute.xlu0 %706
      %708 = vrot.lane.b32.xlu0 %v219, 104
      %v709 = vpop.permute.xlu0 %708
      %v711 = vsel %vm220, %v707, 0
      %v714 = vsel %vm220, %v709, 0
      %716 = vmatprep.subr.bf16.mxu0 0
      %717 = vmatpush1.bf16.xpose.msra.mxu0 0
      %718 = vmatprep.subr.bf16.mxu0 0
      %719 = vmatpush1.bf16.xpose.msra.mxu0 0
      %720 = vmatprep.subr.bf16.mxu0 0
      %721 = vmatpush1.bf16.xpose.msra.mxu0 0
      %722 = vmatprep.subr.bf16.mxu0 0
      %723 = vmatpush1.bf16.xpose.msra.mxu0 0
      %724 = vmatprep.subr.bf16.mxu0 0
      %725 = vmatpush1.bf16.xpose.msra.mxu0 0
      %726 = vmatprep.subr.bf16.mxu0 0
      %727 = vmatpush1.bf16.xpose.msra.mxu0 0
      %728 = vmatprep.subr.bf16.mxu0 0
      %729 = vmatpush1.bf16.xpose.msra.mxu0 0
      %730 = vmatprep.subr.bf16.mxu0 0
      %731 = vmatpush1.bf16.xpose.msra.mxu0 %v714
      %732 = vmatprep.subr.bf16.mxu0 0
      %733 = vmatpush2.bf16.xpose.msra.mxu0 0
      %734 = vmatprep.subr.bf16.mxu0 0
      %735 = vmatpush2.bf16.xpose.msra.mxu0 0
      %736 = vmatprep.subr.bf16.mxu0 0
      %737 = vmatpush2.bf16.xpose.msra.mxu0 0
      %738 = vmatprep.subr.bf16.mxu0 0
      %739 = vmatpush2.bf16.xpose.msra.mxu0 0
      %740 = vmatprep.subr.bf16.mxu0 0
      %741 = vmatpush2.bf16.xpose.msra.mxu0 0
      %742 = vmatprep.subr.bf16.mxu0 0
      %743 = vmatpush2.bf16.xpose.msra.mxu0 0
      %744 = vmatprep.subr.bf16.mxu0 0
      %745 = vmatpush2.bf16.xpose.msra.mxu0 0
      %746 = vmatprep.subr.bf16.mxu0 0
      %747 = vmatpush2.bf16.xpose.msra.mxu0 0
      %748 = vmatprep.mubr.bf16.mxu0 0
      %749 = vmatmul.mubr.bf16.gmra.mxu0 %v711
      %v750 = vpop.f32.mrf.mxu0
      %v751 = vadd.f32 0.0, %v750
      %v752 = vpop.f32.mrf.mxu0
      %v753 = vpop.f32.mrf.mxu0
      %v754 = vpop.f32.mrf.mxu0
      %755 = vdwg.mxu0
      %v756 = vmul.f32 %v751, 0.35355338
      %v757 = vsel %vm220, %v756, -inf
      %758 = vmax.xlane.f32.xlu0 %v757
      %v759 = vpop.xlane.xlu0 %758
      %v760 = vsub.f32 %v756, %v759
      %v761 = vmul.f32 %v760, 1.442695
      %v762 = vpow.pop %v761
      %v763 = vsel %vm220, %v762, 0.0
      %764 = vadd.xlane.f32.xlu0 %v763
      %v765 = vpop.xlane.xlu0 %764
      %v766 = vrcp.pop %v765
      %v767 = vmul.f32 %v762, %v766
      %v768 = vpack.c.bf16 %v767, %v767
      %769 = vrot.lane.b32.xlu0 %v219, 72
      %v770 = vpop.permute.xlu0 %769
      %v772 = vsel %vm220, %v768, 0
      %v775 = vsel %vm286, %v770, 0
      %777 = vmatprep.subr.bf16.mxu0 0
      %778 = vmatpush1.bf16.msra.mxu0 0
      %779 = vmatprep.subr.bf16.mxu0 0
      %780 = vmatpush1.bf16.msra.mxu0 0
      %781 = vmatprep.subr.bf16.mxu0 0
      %782 = vmatpush1.bf16.msra.mxu0 0
      %783 = vmatprep.subr.bf16.mxu0 0
      %784 = vmatpush1.bf16.msra.mxu0 0
      %785 = vmatprep.subr.bf16.mxu0 0
      %786 = vmatpush1.bf16.msra.mxu0 0
      %787 = vmatprep.subr.bf16.mxu0 0
      %788 = vmatpush1.bf16.msra.mxu0 0
      %789 = vmatprep.subr.bf16.mxu0 0
      %790 = vmatpush1.bf16.msra.mxu0 0
      %791 = vmatprep.subr.bf16.mxu0 0
      %792 = vmatpush1.bf16.msra.mxu0 %v775
      %793 = vmatprep.subr.bf16.mxu0 0
      %794 = vmatpush2.bf16.msra.mxu0 0
      %795 = vmatprep.subr.bf16.mxu0 0
      %796 = vmatpush2.bf16.msra.mxu0 0
      %797 = vmatprep.subr.bf16.mxu0 0
      %798 = vmatpush2.bf16.msra.mxu0 0
      %799 = vmatprep.subr.bf16.mxu0 0
      %800 = vmatpush2.bf16.msra.mxu0 0
      %801 = vmatprep.subr.bf16.mxu0 0
      %802 = vmatpush2.bf16.msra.mxu0 0
      %803 = vmatprep.subr.bf16.mxu0 0
      %804 = vmatpush2.bf16.msra.mxu0 0
      %805 = vmatprep.subr.bf16.mxu0 0
      %806 = vmatpush2.bf16.msra.mxu0 0
      %807 = vmatprep.subr.bf16.mxu0 0
      %808 = vmatpush2.bf16.msra.mxu0 0
      %809 = vmatprep.mubr.bf16.mxu0 0
      %810 = vmatmul.mubr.bf16.gmra.mxu0 %v772
      %v811 = vpop.f32.mrf.mxu0
      %v812 = vadd.f32 0.0, %v811
      %v813 = vpop.f32.mrf.mxu0
      %v814 = vpop.f32.mrf.mxu0
      %v815 = vpop.f32.mrf.mxu0
      %816 = vdwg.mxu0
      %v817 = vpack.c.bf16 %v216, %v216
      %v818 = vpack.c.bf16 %v812, %v812
      %v820 = vsel %vm220, %v818, 0
      %v823 = vsel %vm286, %v817, 0
      %825 = vmatprep.subr.bf16.mxu0 0
      %826 = vmatpush1.bf16.msra.mxu0 0
      %827 = vmatprep.subr.bf16.mxu0 0
      %828 = vmatpush1.bf16.msra.mxu0 0
      %829 = vmatprep.subr.bf16.mxu0 0
      %830 = vmatpush1.bf16.msra.mxu0 0
      %831 = vmatprep.subr.bf16.mxu0 0
      %832 = vmatpush1.bf16.msra.mxu0 0
      %833 = vmatprep.subr.bf16.mxu0 0
      %834 = vmatpush1.bf16.msra.mxu0 0
      %835 = vmatprep.subr.bf16.mxu0 0
      %836 = vmatpush1.bf16.msra.mxu0 0
      %837 = vmatprep.subr.bf16.mxu0 0
      %838 = vmatpush1.bf16.msra.mxu0 0
      %839 = vmatprep.subr.bf16.mxu0 0
      %840 = vmatpush1.bf16.msra.mxu0 %v823
      %841 = vmatprep.subr.bf16.mxu0 0
      %842 = vmatpush2.bf16.msra.mxu0 0
      %843 = vmatprep.subr.bf16.mxu0 0
      %844 = vmatpush2.bf16.msra.mxu0 0
      %845 = vmatprep.subr.bf16.mxu0 0
      %846 = vmatpush2.bf16.msra.mxu0 0
      %847 = vmatprep.subr.bf16.mxu0 0
      %848 = vmatpush2.bf16.msra.mxu0 0
      %849 = vmatprep.subr.bf16.mxu0 0
      %850 = vmatpush2.bf16.msra.mxu0 0
      %851 = vmatprep.subr.bf16.mxu0 0
      %852 = vmatpush2.bf16.msra.mxu0 0
      %853 = vmatprep.subr.bf16.mxu0 0
      %854 = vmatpush2.bf16.msra.mxu0 0
      %855 = vmatprep.subr.bf16.mxu0 0
      %856 = vmatpush2.bf16.msra.mxu0 0
      %857 = vmatprep.mubr.bf16.mxu0 0
      %858 = vmatmul.mubr.bf16.gmra.mxu0 %v820
      %v859 = vpop.f32.mrf.mxu0
      %v860 = vadd.f32 0.0, %v859
      %v861 = vpop.f32.mrf.mxu0
      %v862 = vpop.f32.mrf.mxu0
      %v863 = vpop.f32.mrf.mxu0
      %864 = vdwg.mxu0
      %v865 = vadd.f32 %v705, %v860
      %vm866 = vcmask 261120
      %867 = vst.msk [vmem:[%s209] sm:$0xff] %vm866, %v865
      %p868 = scmp.lt.s32.totalorder %s15, 1
      %s869 = scalar_select %p868, %s15, 1
      %s870 = smul.addr %s869, 8
      %s871 = scalar_lea.vmem %s4, %s870
      // Predicated region
      $region37: #{_lambda_.41} parent=35 // pred_check
        %p872 = pneg %p127
      $region38: #{_lambda_.41} parent=35 // pred_check_branch
        %874 = sbr.rel (%p872) target = $region40
      $region39: #{_lambda_.41} parent=35 // pred_region
        _
      $region40: #{_lambda_.41} parent=35 // pred_fallthru
        _
    $region36: #{_lambda_.41} parent=5 // pred_fallthru
      _
    %p875 = scmp.le.s32.totalorder 2, %s10
    // Predicated region
    $region41: #{_lambda_.41} parent=5 // pred_check
      %p876 = pneg %p875
    $region42: #{_lambda_.41} parent=5 // pred_check_branch
      %878 = sbr.rel (%p876) target = $region44
    $region43: #{_lambda_.41} parent=5 // pred_region
      %s879 = ssub.s32 %s10, 2
      // Predicated region
      $region45: #{_lambda_.41} parent=43 // pred_check
        %p880 = pneg %p133
      $region46: #{_lambda_.41} parent=43 // pred_check_branch
        %882 = sbr.rel (%p880) target = $region48
      $region47: #{_lambda_.41} parent=43 // pred_region
        %p883 = scmp.lt.s32.totalorder %s16, 1
        %s884 = scalar_select %p883, %s16, 1
        %s885 = smul.addr %s884, 8
        %s886 = scalar_lea.vmem %s4, %s885
      $region48: #{_lambda_.41} parent=43 // pred_fallthru
        _
    $region44: #{_lambda_.41} parent=5 // pred_fallthru
      _
  $region6: #{_lambda_.41} parent=0 // loop_footer
    %s14 = sadd.s32 1, %s10
  $region7: #{_lambda_.41} parent=0 // loop_footer_branch
    %9 = sbr.rel target = $region3
  $region8: #{_lambda_.41} parent=0 // loop_exit
    _

// kernel: _lambda_.43
$region0: #{_lambda_.43}
  #allocation0 [shape = 'u32[]', space=smem, size = 0x4, offset = 0x4, fixed_abs, tag = 'smem constant byte address 0x4 - core index']
  #allocation1 [shape = 'u32[144,128]{1,0:T(1,128)}', space=vmem, size = 0x12000, scoped, tag = 'internal scratch']
  %s0 = inlined_call_operand.vmem [shape: f32[2,8,32], index: 0, kind: input, shape index: {}]
  %s1 = inlined_call_operand.vmem [shape: f32[2,8,32], index: 1, kind: input, shape index: {}]
  %s2 = inlined_call_operand.vmem [shape: f32[1,32], index: 2, kind: input, shape index: {}]
  %s3 = inlined_call_operand.vmem [shape: f32[1,32], index: 3, kind: input, shape index: {}]
  %s4 = inlined_call_operand.vmem [shape: f32[32,96], index: 4, kind: input, shape index: {}]
  %s5 = inlined_call_operand.vmem [shape: f32[1,96], index: 5, kind: input, shape index: {}]
  %s6 = inlined_call_operand.vmem [shape: f32[2,8,32], index: 6, kind: output, shape index: {0}]
  %s7 = inlined_call_operand.vmem [shape: f32[2,8,32], index: 7, kind: output, shape index: {1}]
  %s8 = inlined_call_operand.vmem [shape: f32[2,8,64], index: 8, kind: output, shape index: {2}]
  %9 = xla_tuple %s6, %s7, %s8
  %s10 = sld [smem:[#allocation0]]
  $region73: #{_lambda_.43} parent=0
    _
  %s12 = ssub.s32 1, %s10
  %s13 = scalar_select 0, %s12, %s10
  loop: start=0, step=1, limit=4
  $region2: #{_lambda_.43} parent=0 // loop_pre_header
    _
  $region3: #{_lambda_.43} parent=0 // loop_header
    %s15 = sphi 0, %s19
    %p16 = scmp.ge.s32.totalorder %s15, 4
    %s25 = sphi 0, %s27
    %s28 = sphi 0, %s25
    %s29 = sphi 0, %s28
    %s45 = sphi 0, %s29
    %s51 = sphi 0, %s53
    %s54 = sphi 0, %s51
    %s55 = sphi 0, %s54
    %s71 = sphi 0, %s55
    %s75 = sphi 0, %s75
    %s77 = sphi 0, %s75
    %s78 = sphi 0, %s77
    %s92 = sphi 0, %s78
    %s96 = sphi 0, %s96
    %s98 = sphi 0, %s96
    %s99 = sphi 0, %s98
    %s113 = sphi 0, %s99
    %s117 = sphi 0, %s117
    %s119 = sphi 0, %s117
    %s120 = sphi 0, %s119
    %s134 = sphi 0, %s120
    %s138 = sphi 0, %s138
    %s140 = sphi 0, %s138
    %s141 = sphi 0, %s140
    %s155 = sphi 0, %s141
    %s161 = sphi 0, %s163
    %s164 = sphi 0, %s161
    %s165 = sphi 0, %s164
    %s181 = sphi 0, %s165
    %s187 = sphi 0, %s189
    %s190 = sphi 0, %s187
    %s191 = sphi 0, %s190
    %s207 = sphi 0, %s191
    %s213 = sphi 0, %s215
    %s216 = sphi 0, %s213
    %s217 = sphi 0, %s216
    %s233 = sphi 0, %s217
  $region4: #{_lambda_.43} parent=0 // loop_header_branch
    %18 = sbr.rel (%p16) target = $region8
  $region5: #{_lambda_.43} parent=0 // loop_body
    %s20 = ssub.s32 %s15, 1
    %s21 = ssub.s32 %s15, 2
    %s22 = sadd.s32 %s15, 1
    %s23 = ssub.s32 %s15, %s22
    %p24 = scmp.eq.s32.totalorder %s23, 0
    %s26 = sadd.s32 %s25, 1
    %s27 = scalar_select %p24, %s25, %s26
    %p30 = pneg %p24
    %p31 = scmp.eq.s32.totalorder %s15, 1
    %p32 = por %p30, %p31
    %p33 = scmp.ne.s32.totalorder %s25, %s28
    %p34 = scmp.eq.s32.totalorder %s15, 0
    %p35 = por %p33, %p34
    %p36 = scmp.ne.s32.totalorder %s25, %s28
    %p37 = scmp.eq.s32.totalorder %s20, 1
    %p38 = por %p36, %p37
    %p39 = scmp.ne.s32.totalorder %s28, %s29
    %p40 = scmp.eq.s32.totalorder %s20, 0
    %p41 = por %p39, %p40
    %p42 = scmp.ne.s32.totalorder %s28, %s29
    %p43 = scmp.eq.s32.totalorder %s21, 1
    %p44 = por %p42, %p43
    %p46 = scmp.ne.s32.totalorder %s29, %s45
    %p47 = scmp.eq.s32.totalorder %s21, 0
    %p48 = por %p46, %p47
    %s49 = ssub.s32 %s15, %s22
    %p50 = scmp.eq.s32.totalorder %s49, 0
    %s52 = sadd.s32 %s51, 1
    %s53 = scalar_select %p50, %s51, %s52
    %p56 = pneg %p50
    %p57 = scmp.eq.s32.totalorder %s15, 1
    %p58 = por %p56, %p57
    %p59 = scmp.ne.s32.totalorder %s51, %s54
    %p60 = scmp.eq.s32.totalorder %s15, 0
    %p61 = por %p59, %p60
    %p62 = scmp.ne.s32.totalorder %s51, %s54
    %p63 = scmp.eq.s32.totalorder %s20, 1
    %p64 = por %p62, %p63
    %p65 = scmp.ne.s32.totalorder %s54, %s55
    %p66 = scmp.eq.s32.totalorder %s20, 0
    %p67 = por %p65, %p66
    %p68 = scmp.ne.s32.totalorder %s54, %s55
    %p69 = scmp.eq.s32.totalorder %s21, 1
    %p70 = por %p68, %p69
    %p72 = scmp.ne.s32.totalorder %s55, %s71
    %p73 = scmp.eq.s32.totalorder %s21, 0
    %p74 = por %p72, %p73
    %s76 = sadd.s32 %s75, 1
    %p79 = scmp.eq.s32.totalorder %s15, 1
    %p80 = scmp.ne.s32.totalorder %s75, %s77
    %p81 = scmp.eq.s32.totalorder %s15, 0
    %p82 = por %p80, %p81
    %p83 = scmp.ne.s32.totalorder %s75, %s77
    %p84 = scmp.eq.s32.totalorder %s20, 1
    %p85 = por %p83, %p84
    %p86 = scmp.ne.s32.totalorder %s77, %s78
    %p87 = scmp.eq.s32.totalorder %s20, 0
    %p88 = por %p86, %p87
    %p89 = scmp.ne.s32.totalorder %s77, %s78
    %p90 = scmp.eq.s32.totalorder %s21, 1
    %p91 = por %p89, %p90
    %p93 = scmp.ne.s32.totalorder %s78, %s92
    %p94 = scmp.eq.s32.totalorder %s21, 0
    %p95 = por %p93, %p94
    %s97 = sadd.s32 %s96, 1
    %p100 = scmp.eq.s32.totalorder %s15, 1
    %p101 = scmp.ne.s32.totalorder %s96, %s98
    %p102 = scmp.eq.s32.totalorder %s15, 0
    %p103 = por %p101, %p102
    %p104 = scmp.ne.s32.totalorder %s96, %s98
    %p105 = scmp.eq.s32.totalorder %s20, 1
    %p106 = por %p104, %p105
    %p107 = scmp.ne.s32.totalorder %s98, %s99
    %p108 = scmp.eq.s32.totalorder %s20, 0
    %p109 = por %p107, %p108
    %p110 = scmp.ne.s32.totalorder %s98, %s99
    %p111 = scmp.eq.s32.totalorder %s21, 1
    %p112 = por %p110, %p111
    %p114 = scmp.ne.s32.totalorder %s99, %s113
    %p115 = scmp.eq.s32.totalorder %s21, 0
    %p116 = por %p114, %p115
    %s118 = sadd.s32 %s117, 1
    %p121 = scmp.eq.s32.totalorder %s15, 1
    %p122 = scmp.ne.s32.totalorder %s117, %s119
    %p123 = scmp.eq.s32.totalorder %s15, 0
    %p124 = por %p122, %p123
    %p125 = scmp.ne.s32.totalorder %s117, %s119
    %p126 = scmp.eq.s32.totalorder %s20, 1
    %p127 = por %p125, %p126
    %p128 = scmp.ne.s32.totalorder %s119, %s120
    %p129 = scmp.eq.s32.totalorder %s20, 0
    %p130 = por %p128, %p129
    %p131 = scmp.ne.s32.totalorder %s119, %s120
    %p132 = scmp.eq.s32.totalorder %s21, 1
    %p133 = por %p131, %p132
    %p135 = scmp.ne.s32.totalorder %s120, %s134
    %p136 = scmp.eq.s32.totalorder %s21, 0
    %p137 = por %p135, %p136
    %s139 = sadd.s32 %s138, 1
    %p142 = scmp.eq.s32.totalorder %s15, 1
    %p143 = scmp.ne.s32.totalorder %s138, %s140
    %p144 = scmp.eq.s32.totalorder %s15, 0
    %p145 = por %p143, %p144
    %p146 = scmp.ne.s32.totalorder %s138, %s140
    %p147 = scmp.eq.s32.totalorder %s20, 1
    %p148 = por %p146, %p147
    %p149 = scmp.ne.s32.totalorder %s140, %s141
    %p150 = scmp.eq.s32.totalorder %s20, 0
    %p151 = por %p149, %p150
    %p152 = scmp.ne.s32.totalorder %s140, %s141
    %p153 = scmp.eq.s32.totalorder %s21, 1
    %p154 = por %p152, %p153
    %p156 = scmp.ne.s32.totalorder %s141, %s155
    %p157 = scmp.eq.s32.totalorder %s21, 0
    %p158 = por %p156, %p157
    %s159 = ssub.s32 %s15, %s22
    %p160 = scmp.eq.s32.totalorder %s159, 0
    %s162 = sadd.s32 %s161, 1
    %s163 = scalar_select %p160, %s161, %s162
    %p166 = pneg %p160
    %p167 = scmp.eq.s32.totalorder %s15, 1
    %p168 = por %p166, %p167
    %p169 = scmp.ne.s32.totalorder %s161, %s164
    %p170 = scmp.eq.s32.totalorder %s15, 0
    %p171 = por %p169, %p170
    %p172 = scmp.ne.s32.totalorder %s161, %s164
    %p173 = scmp.eq.s32.totalorder %s20, 1
    %p174 = por %p172, %p173
    %p175 = scmp.ne.s32.totalorder %s164, %s165
    %p176 = scmp.eq.s32.totalorder %s20, 0
    %p177 = por %p175, %p176
    %p178 = scmp.ne.s32.totalorder %s164, %s165
    %p179 = scmp.eq.s32.totalorder %s21, 1
    %p180 = por %p178, %p179
    %p182 = scmp.ne.s32.totalorder %s165, %s181
    %p183 = scmp.eq.s32.totalorder %s21, 0
    %p184 = por %p182, %p183
    %s185 = ssub.s32 %s15, %s22
    %p186 = scmp.eq.s32.totalorder %s185, 0
    %s188 = sadd.s32 %s187, 1
    %s189 = scalar_select %p186, %s187, %s188
    %p192 = pneg %p186
    %p193 = scmp.eq.s32.totalorder %s15, 1
    %p194 = por %p192, %p193
    %p195 = scmp.ne.s32.totalorder %s187, %s190
    %p196 = scmp.eq.s32.totalorder %s15, 0
    %p197 = por %p195, %p196
    %p198 = scmp.ne.s32.totalorder %s187, %s190
    %p199 = scmp.eq.s32.totalorder %s20, 1
    %p200 = por %p198, %p199
    %p201 = scmp.ne.s32.totalorder %s190, %s191
    %p202 = scmp.eq.s32.totalorder %s20, 0
    %p203 = por %p201, %p202
    %p204 = scmp.ne.s32.totalorder %s190, %s191
    %p205 = scmp.eq.s32.totalorder %s21, 1
    %p206 = por %p204, %p205
    %p208 = scmp.ne.s32.totalorder %s191, %s207
    %p209 = scmp.eq.s32.totalorder %s21, 0
    %p210 = por %p208, %p209
    %s211 = ssub.s32 %s15, %s22
    %p212 = scmp.eq.s32.totalorder %s211, 0
    %s214 = sadd.s32 %s213, 1
    %s215 = scalar_select %p212, %s213, %s214
    %p218 = pneg %p212
    %p219 = scmp.eq.s32.totalorder %s15, 1
    %p220 = por %p218, %p219
    %p221 = scmp.ne.s32.totalorder %s213, %s216
    %p222 = scmp.eq.s32.totalorder %s15, 0
    %p223 = por %p221, %p222
    %p224 = scmp.ne.s32.totalorder %s213, %s216
    %p225 = scmp.eq.s32.totalorder %s20, 1
    %p226 = por %p224, %p225
    %p227 = scmp.ne.s32.totalorder %s216, %s217
    %p228 = scmp.eq.s32.totalorder %s20, 0
    %p229 = por %p227, %p228
    %p230 = scmp.ne.s32.totalorder %s216, %s217
    %p231 = scmp.eq.s32.totalorder %s21, 1
    %p232 = por %p230, %p231
    %p234 = scmp.ne.s32.totalorder %s217, %s233
    %p235 = scmp.eq.s32.totalorder %s21, 0
    %p236 = por %p234, %p235
    %p237 = scmp.le.s32.totalorder 1, %s15
    %p238 = scmp.lt.s32.totalorder %s15, 3
    %p239 = pnand %p237, %p238
    %p240 = pneg %p239
    // Predicated region
    $region9: #{_lambda_.43} parent=5 // pred_check
      _
    $region10: #{_lambda_.43} parent=5 // pred_check_branch
      %242 = sbr.rel (%p239) target = $region12
    $region11: #{_lambda_.43} parent=5 // pred_region
      %s243 = ssub.s32 %s15, 1
      // Predicated region
      $region13: #{_lambda_.43} parent=11 // pred_check
        %p244 = pneg %p88
      $region14: #{_lambda_.43} parent=11 // pred_check_branch
        %246 = sbr.rel (%p244) target = $region16
      $region15: #{_lambda_.43} parent=11 // pred_region
        _
      $region16: #{_lambda_.43} parent=11 // pred_fallthru
        _
      // Predicated region
      $region17: #{_lambda_.43} parent=11 // pred_check
        %p247 = pneg %p109
      $region18: #{_lambda_.43} parent=11 // pred_check_branch
        %249 = sbr.rel (%p247) target = $region20
      $region19: #{_lambda_.43} parent=11 // pred_region
        _
      $region20: #{_lambda_.43} parent=11 // pred_fallthru
        _
      // Predicated region
      $region21: #{_lambda_.43} parent=11 // pred_check
        %p250 = pneg %p130
      $region22: #{_lambda_.43} parent=11 // pred_check_branch
        %252 = sbr.rel (%p250) target = $region24
      $region23: #{_lambda_.43} parent=11 // pred_region
        _
      $region24: #{_lambda_.43} parent=11 // pred_fallthru
        _
      // Predicated region
      $region25: #{_lambda_.43} parent=11 // pred_check
        %p253 = pneg %p151
      $region26: #{_lambda_.43} parent=11 // pred_check_branch
        %255 = sbr.rel (%p253) target = $region28
      $region27: #{_lambda_.43} parent=11 // pred_region
        _
      $region28: #{_lambda_.43} parent=11 // pred_fallthru
        _
    $region12: #{_lambda_.43} parent=5 // pred_fallthru
      _
    %p256 = scmp.lt.s32.totalorder %s15, 2
    // Predicated region
    $region29: #{_lambda_.43} parent=5 // pred_check
      %p257 = pneg %p256
    $region30: #{_lambda_.43} parent=5 // pred_check_branch
      %259 = sbr.rel (%p257) target = $region32
    $region31: #{_lambda_.43} parent=5 // pred_region
      // Predicated region
      $region33: #{_lambda_.43} parent=31 // pred_check
        %p260 = pneg %p35
      $region34: #{_lambda_.43} parent=31 // pred_check_branch
        %262 = sbr.rel (%p260) target = $region36
      $region35: #{_lambda_.43} parent=31 // pred_region
        %p263 = scmp.lt.s32.totalorder %s15, 1
        %s264 = scalar_select %p263, %s15, 1
        %s265 = smul.addr %s264, 8
        %s266 = scalar_lea.vmem %s0, %s265
      $region36: #{_lambda_.43} parent=31 // pred_fallthru
        _
      // Predicated region
      $region37: #{_lambda_.43} parent=31 // pred_check
        %p267 = pneg %p61
      $region38: #{_lambda_.43} parent=31 // pred_check_branch
        %269 = sbr.rel (%p267) target = $region40
      $region39: #{_lambda_.43} parent=31 // pred_region
        %p270 = scmp.lt.s32.totalorder %s15, 1
        %s271 = scalar_select %p270, %s15, 1
        %s272 = smul.addr %s271, 8
        %s273 = scalar_lea.vmem %s1, %s272
      $region40: #{_lambda_.43} parent=31 // pred_fallthru
        _
    $region32: #{_lambda_.43} parent=5 // pred_fallthru
      _
    %p274 = scmp.le.s32.totalorder 1, %s15
    %p275 = scmp.lt.s32.totalorder %s15, 3
    %p276 = pnand %p274, %p275
    %p277 = pneg %p276
    // Predicated region
    $region41: #{_lambda_.43} parent=5 // pred_check
      _
    $region42: #{_lambda_.43} parent=5 // pred_check_branch
      %279 = sbr.rel (%p276) target = $region44
    $region43: #{_lambda_.43} parent=5 // pred_region
      %s280 = ssub.s32 %s15, 1
      %p281 = scmp.lt.s32.totalorder %s20, 1
      %s282 = scalar_select %p281, %s20, 1
      %s283 = smul.addr %s282, 8
      %s284 = scalar_lea.vmem %s0, %s283
      %p285 = pneg %p41
      %p286 = pneg %p38
      %p287 = scmp.lt.s32.totalorder %s20, 1
      %s288 = scalar_select %p287, %s20, 1
      %s289 = smul.addr %s288, 8
      %s290 = scalar_lea.vmem %s1, %s289
      %p291 = pneg %p67
      %p292 = pneg %p64
      %p293 = pneg %p88
      %p294 = pneg %p85
      %p295 = pneg %p109
      %p296 = pneg %p106
      %p297 = pneg %p130
      %p298 = pneg %p127
      %p299 = pneg %p151
      %p300 = pneg %p148
      %p301 = pneg %p177
      %p302 = pneg %p174
      %p303 = scmp.lt.s32.totalorder %s20, 1
      %s304 = scalar_select %p303, %s20, 1
      %s305 = smul.addr %s304, 8
      %s306 = scalar_lea.vmem %s6, %s305
      %p307 = pneg %p203
      %p308 = pneg %p200
      %p309 = scmp.lt.s32.totalorder %s20, 1
      %s310 = scalar_select %p309, %s20, 1
      %s311 = smul.addr %s310, 8
      %s312 = scalar_lea.vmem %s7, %s311
      %p313 = pneg %p229
      %p314 = pneg %p226
      %p315 = scmp.lt.s32.totalorder %s20, 1
      %s316 = scalar_select %p315, %s20, 1
      %s317 = smul.addr %s316, 8
      %s318 = scalar_lea.vmem %s8, %s317
      %p319 = scmp.lt.s32.totalorder %s20, 1
      %s320 = scalar_select %p319, %s20, 1
      %s321 = smul.addr %s320, 8
      %s322 = scalar_lea.vmem %s0, %s321
      %p323 = scmp.lt.s32.totalorder %s20, 1
      %s324 = scalar_select %p323, %s20, 1
      %s325 = smul.addr %s324, 8
      %s326 = scalar_lea.vmem %s1, %s325
      %p327 = scmp.lt.s32.totalorder %s20, 1
      %s328 = scalar_select %p327, %s20, 1
      %s329 = smul.addr %s328, 8
      %s330 = scalar_lea.vmem %s6, %s329
      %p331 = scmp.lt.s32.totalorder %s20, 1
      %s332 = scalar_select %p331, %s20, 1
      %s333 = smul.addr %s332, 8
      %s334 = scalar_lea.vmem %s7, %s333
      %p335 = scmp.lt.s32.totalorder %s20, 1
      %s336 = scalar_select %p335, %s20, 1
      %s337 = smul.addr %s336, 8
      %s338 = scalar_lea.vmem %s8, %s337
      %v340 = vld [vmem:[%s322] sm:$0xff]
      %v341 = vld [vmem:[%s326] sm:$0xff]
      %v342 = vadd.f32 %v340, %v341
      %v343 = vld [vmem:[%s2] sm:$0x1]
      %v344 = vld [vmem:[%s3] sm:$0x1]
      %v345 = vld [vmem:[%s5] sm:$0x1]
      %vm346 = vcmask 261120
      %347 = vst.msk [vmem:[%s330] sm:$0xff] %vm346, %v342
      %v348 = vsel %vm346, %v342, 0.0
      %349 = vadd.xlane.f32.xlu0 %v348
      %v350 = vpop.xlane.xlu0 %349
      %v351 = vrcp.pop 32.0
      %v352 = vmul.f32 %v350, %v351
      %v353 = vsub.f32 %v342, %v352
      %v354 = vmul.f32 %v353, %v353
      %v355 = vsel %vm346, %v354, 0.0
      %356 = vadd.xlane.f32.xlu0 %v355
      %v357 = vpop.xlane.xlu0 %356
      %v358 = vmul.f32 %v357, 0.032258064
      %v359 = vrsqrt.pop %v358
      %v360 = vmul.f32 %v358, %v359
      %vm361 = vcmp.eq.f32.partialorder %v358, inf
      %v362 = vsel %vm361, %v358, %v360
      %vm363 = vcmp.eq.f32.partialorder %v358, 0.0
      %v364 = vand.u32 %v358, 2147483648
      %v365 = vsel %vm363, %v364, %v362
      %v366 = vadd.f32 %v365, 1e-06
      %v367 = vrcp.pop %v366
      %v369 = vlaneseq
      %v370 = vshrl.u32 %v369, 7
      %v371 = vsub.s32 0, %v370
      %v372 = vrot.slane %v343, %v371
      %v374 = vmul.f32 %v372, %v367
      %v375 = vmul.f32 %v353, %v374
      %v377 = vlaneseq
      %v378 = vshrl.u32 %v377, 7
      %v379 = vsub.s32 0, %v378
      %v380 = vrot.slane %v344, %v379
      %v382 = vadd.f32 %v375, %v380
      %v383 = vpack.c.bf16 %v382, %v382
      %v384 = vld [vmem:[%s4] sm:$0xff]
      %v385 = vld [vmem:[%s4 + $0x8] sm:$0xff]
      %v386 = vld [vmem:[%s4 + $0x10] sm:$0xff]
      %v387 = vld [vmem:[%s4 + $0x18] sm:$0xff]
      %v388 = vpack.c.bf16 %v385, %v384
      %v389 = vpack.c.bf16 %v387, %v386
      %v391 = vlaneseq
      %v392 = vshrl.u32 %v391, 7
      %v393 = vsub.s32 0, %v392
      %v394 = vrot.slane %v345, %v393
      %v397 = vsel %vm346, %v383, 0
      %399 = vmatprep.subr.bf16.mxu0 0
      %400 = vmatpush1.bf16.msra.mxu0 0
      %401 = vmatprep.subr.bf16.mxu0 0
      %402 = vmatpush1.bf16.msra.mxu0 0
      %403 = vmatprep.subr.bf16.mxu0 0
      %404 = vmatpush1.bf16.msra.mxu0 0
      %405 = vmatprep.subr.bf16.mxu0 0
      %406 = vmatpush1.bf16.msra.mxu0 0
      %407 = vmatprep.subr.bf16.mxu0 0
      %408 = vmatpush1.bf16.msra.mxu0 0
      %409 = vmatprep.subr.bf16.mxu0 0
      %410 = vmatpush1.bf16.msra.mxu0 0
      %411 = vmatprep.subr.bf16.mxu0 0
      %412 = vmatpush1.bf16.msra.mxu0 %v389
      %413 = vmatprep.subr.bf16.mxu0 0
      %414 = vmatpush1.bf16.msra.mxu0 %v388
      %415 = vmatprep.subr.bf16.mxu0 0
      %416 = vmatpush2.bf16.msra.mxu0 0
      %417 = vmatprep.subr.bf16.mxu0 0
      %418 = vmatpush2.bf16.msra.mxu0 0
      %419 = vmatprep.subr.bf16.mxu0 0
      %420 = vmatpush2.bf16.msra.mxu0 0
      %421 = vmatprep.subr.bf16.mxu0 0
      %422 = vmatpush2.bf16.msra.mxu0 0
      %423 = vmatprep.subr.bf16.mxu0 0
      %424 = vmatpush2.bf16.msra.mxu0 0
      %425 = vmatprep.subr.bf16.mxu0 0
      %426 = vmatpush2.bf16.msra.mxu0 0
      %427 = vmatprep.subr.bf16.mxu0 0
      %428 = vmatpush2.bf16.msra.mxu0 0
      %429 = vmatprep.subr.bf16.mxu0 0
      %430 = vmatpush2.bf16.msra.mxu0 0
      %431 = vmatprep.mubr.bf16.mxu0 0
      %432 = vmatmul.mubr.bf16.gmra.mxu0 %v397
      %v433 = vpop.f32.mrf.mxu0
      %v434 = vadd.f32 %v394, %v433
      %v435 = vpop.f32.mrf.mxu0
      %v436 = vpop.f32.mrf.mxu0
      %v437 = vpop.f32.mrf.mxu0
      %438 = vdwg.mxu0
      %439 = vst.msk [vmem:[%s334] sm:$0xff] %vm346, %v434
      %441 = vrot.lane.b32.xlu0 %v434, 96
      %v442 = vpop.permute.xlu0 %441
      %vm444 = vcmask 523264
      %445 = vst.msk [vmem:[%s338] sm:$0xff] %vm444, %v442
      %p446 = scmp.lt.s32.totalorder %s20, 1
      %s447 = scalar_select %p446, %s20, 1
      %s448 = smul.addr %s447, 8
      %s449 = scalar_lea.vmem %s6, %s448
      %p450 = scmp.lt.s32.totalorder %s20, 1
      %s451 = scalar_select %p450, %s20, 1
      %s452 = smul.addr %s451, 8
      %s453 = scalar_lea.vmem %s7, %s452
      %p454 = scmp.lt.s32.totalorder %s20, 1
      %s455 = scalar_select %p454, %s20, 1
      %s456 = smul.addr %s455, 8
      %s457 = scalar_lea.vmem %s8, %s456
      // Predicated region
      $region45: #{_lambda_.43} parent=43 // pred_check
        %p458 = pneg %p174
      $region46: #{_lambda_.43} parent=43 // pred_check_branch
        %460 = sbr.rel (%p458) target = $region48
      $region47: #{_lambda_.43} parent=43 // pred_region
        _
      $region48: #{_lambda_.43} parent=43 // pred_fallthru
        _
      // Predicated region
      $region49: #{_lambda_.43} parent=43 // pred_check
        %p461 = pneg %p200
      $region50: #{_lambda_.43} parent=43 // pred_check_branch
        %463 = sbr.rel (%p461) target = $region52
      $region51: #{_lambda_.43} parent=43 // pred_region
        _
      $region52: #{_lambda_.43} parent=43 // pred_fallthru
        _
      // Predicated region
      $region53: #{_lambda_.43} parent=43 // pred_check
        %p464 = pneg %p226
      $region54: #{_lambda_.43} parent=43 // pred_check_branch
        %466 = sbr.rel (%p464) target = $region56
      $region55: #{_lambda_.43} parent=43 // pred_region
        _
      $region56: #{_lambda_.43} parent=43 // pred_fallthru
        _
    $region44: #{_lambda_.43} parent=5 // pred_fallthru
      _
    %p467 = scmp.le.s32.totalorder 2, %s15
    // Predicated region
    $region57: #{_lambda_.43} parent=5 // pred_check
      %p468 = pneg %p467
    $region58: #{_lambda_.43} parent=5 // pred_check_branch
      %470 = sbr.rel (%p468) target = $region60
    $region59: #{_lambda_.43} parent=5 // pred_region
      %s471 = ssub.s32 %s15, 2
      // Predicated region
      $region61: #{_lambda_.43} parent=59 // pred_check
        %p472 = pneg %p180
      $region62: #{_lambda_.43} parent=59 // pred_check_branch
        %474 = sbr.rel (%p472) target = $region64
      $region63: #{_lambda_.43} parent=59 // pred_region
        %p475 = scmp.lt.s32.totalorder %s21, 1
        %s476 = scalar_select %p475, %s21, 1
        %s477 = smul.addr %s476, 8
        %s478 = scalar_lea.vmem %s6, %s477
      $region64: #{_lambda_.43} parent=59 // pred_fallthru
        _
      // Predicated region
      $region65: #{_lambda_.43} parent=59 // pred_check
        %p479 = pneg %p206
      $region66: #{_lambda_.43} parent=59 // pred_check_branch
        %481 = sbr.rel (%p479) target = $region68
      $region67: #{_lambda_.43} parent=59 // pred_region
        %p482 = scmp.lt.s32.totalorder %s21, 1
        %s483 = scalar_select %p482, %s21, 1
        %s484 = smul.addr %s483, 8
        %s485 = scalar_lea.vmem %s7, %s484
      $region68: #{_lambda_.43} parent=59 // pred_fallthru
        _
      // Predicated region
      $region69: #{_lambda_.43} parent=59 // pred_check
        %p486 = pneg %p232
      $region70: #{_lambda_.43} parent=59 // pred_check_branch
        %488 = sbr.rel (%p486) target = $region72
      $region71: #{_lambda_.43} parent=59 // pred_region
        %p489 = scmp.lt.s32.totalorder %s21, 1
        %s490 = scalar_select %p489, %s21, 1
        %s491 = smul.addr %s490, 8
        %s492 = scalar_lea.vmem %s8, %s491
      $region72: #{_lambda_.43} parent=59 // pred_fallthru
        _
    $region60: #{_lambda_.43} parent=5 // pred_fallthru
      _
  $region6: #{_lambda_.43} parent=0 // loop_footer
    %s19 = sadd.s32 1, %s15
  $region7: #{_lambda_.43} parent=0 // loop_footer_branch
    %14 = sbr.rel target = $region3
  $region8: #{_lambda_.43} parent=0 // loop_exit
    _

// kernel: _lambda_.56
$region0: #{_lambda_.56}
  #allocation0 [shape = 'u32[]', space=smem, size = 0x4, offset = 0x4, fixed_abs, tag = 'smem constant byte address 0x4 - core index']
  #allocation1 [shape = 'u32[144,128]{1,0:T(1,128)}', space=vmem, size = 0x12000, scoped, tag = 'internal scratch']
  %s0 = inlined_call_operand.vmem [shape: f32[2,8,32], index: 0, kind: input, shape index: {}]
  %s1 = inlined_call_operand.vmem [shape: f32[32,64], index: 1, kind: input, shape index: {}]
  %s2 = inlined_call_operand.vmem [shape: f32[1,64], index: 2, kind: input, shape index: {}]
  %s3 = inlined_call_operand.vmem [shape: f32[2,8,64], index: 3, kind: output, shape index: {}]
  %s4 = sld [smem:[#allocation0]]
  $region45: #{_lambda_.56} parent=0
    _
  %s6 = ssub.s32 1, %s4
  %s7 = scalar_select 0, %s6, %s4
  loop: start=0, step=1, limit=4
  $region2: #{_lambda_.56} parent=0 // loop_pre_header
    _
  $region3: #{_lambda_.56} parent=0 // loop_header
    %s9 = sphi 0, %s13
    %p10 = scmp.ge.s32.totalorder %s9, 4
    %s19 = sphi 0, %s21
    %s22 = sphi 0, %s19
    %s23 = sphi 0, %s22
    %s39 = sphi 0, %s23
    %s43 = sphi 0, %s43
    %s45 = sphi 0, %s43
    %s46 = sphi 0, %s45
    %s60 = sphi 0, %s46
    %s64 = sphi 0, %s64
    %s66 = sphi 0, %s64
    %s67 = sphi 0, %s66
    %s81 = sphi 0, %s67
    %s87 = sphi 0, %s89
    %s90 = sphi 0, %s87
    %s91 = sphi 0, %s90
    %s107 = sphi 0, %s91
  $region4: #{_lambda_.56} parent=0 // loop_header_branch
    %12 = sbr.rel (%p10) target = $region8
  $region5: #{_lambda_.56} parent=0 // loop_body
    %s14 = ssub.s32 %s9, 1
    %s15 = ssub.s32 %s9, 2
    %s16 = sadd.s32 %s9, 1
    %s17 = ssub.s32 %s9, %s16
    %p18 = scmp.eq.s32.totalorder %s17, 0
    %s20 = sadd.s32 %s19, 1
    %s21 = scalar_select %p18, %s19, %s20
    %p24 = pneg %p18
    %p25 = scmp.eq.s32.totalorder %s9, 1
    %p26 = por %p24, %p25
    %p27 = scmp.ne.s32.totalorder %s19, %s22
    %p28 = scmp.eq.s32.totalorder %s9, 0
    %p29 = por %p27, %p28
    %p30 = scmp.ne.s32.totalorder %s19, %s22
    %p31 = scmp.eq.s32.totalorder %s14, 1
    %p32 = por %p30, %p31
    %p33 = scmp.ne.s32.totalorder %s22, %s23
    %p34 = scmp.eq.s32.totalorder %s14, 0
    %p35 = por %p33, %p34
    %p36 = scmp.ne.s32.totalorder %s22, %s23
    %p37 = scmp.eq.s32.totalorder %s15, 1
    %p38 = por %p36, %p37
    %p40 = scmp.ne.s32.totalorder %s23, %s39
    %p41 = scmp.eq.s32.totalorder %s15, 0
    %p42 = por %p40, %p41
    %s44 = sadd.s32 %s43, 1
    %p47 = scmp.eq.s32.totalorder %s9, 1
    %p48 = scmp.ne.s32.totalorder %s43, %s45
    %p49 = scmp.eq.s32.totalorder %s9, 0
    %p50 = por %p48, %p49
    %p51 = scmp.ne.s32.totalorder %s43, %s45
    %p52 = scmp.eq.s32.totalorder %s14, 1
    %p53 = por %p51, %p52
    %p54 = scmp.ne.s32.totalorder %s45, %s46
    %p55 = scmp.eq.s32.totalorder %s14, 0
    %p56 = por %p54, %p55
    %p57 = scmp.ne.s32.totalorder %s45, %s46
    %p58 = scmp.eq.s32.totalorder %s15, 1
    %p59 = por %p57, %p58
    %p61 = scmp.ne.s32.totalorder %s46, %s60
    %p62 = scmp.eq.s32.totalorder %s15, 0
    %p63 = por %p61, %p62
    %s65 = sadd.s32 %s64, 1
    %p68 = scmp.eq.s32.totalorder %s9, 1
    %p69 = scmp.ne.s32.totalorder %s64, %s66
    %p70 = scmp.eq.s32.totalorder %s9, 0
    %p71 = por %p69, %p70
    %p72 = scmp.ne.s32.totalorder %s64, %s66
    %p73 = scmp.eq.s32.totalorder %s14, 1
    %p74 = por %p72, %p73
    %p75 = scmp.ne.s32.totalorder %s66, %s67
    %p76 = scmp.eq.s32.totalorder %s14, 0
    %p77 = por %p75, %p76
    %p78 = scmp.ne.s32.totalorder %s66, %s67
    %p79 = scmp.eq.s32.totalorder %s15, 1
    %p80 = por %p78, %p79
    %p82 = scmp.ne.s32.totalorder %s67, %s81
    %p83 = scmp.eq.s32.totalorder %s15, 0
    %p84 = por %p82, %p83
    %s85 = ssub.s32 %s9, %s16
    %p86 = scmp.eq.s32.totalorder %s85, 0
    %s88 = sadd.s32 %s87, 1
    %s89 = scalar_select %p86, %s87, %s88
    %p92 = pneg %p86
    %p93 = scmp.eq.s32.totalorder %s9, 1
    %p94 = por %p92, %p93
    %p95 = scmp.ne.s32.totalorder %s87, %s90
    %p96 = scmp.eq.s32.totalorder %s9, 0
    %p97 = por %p95, %p96
    %p98 = scmp.ne.s32.totalorder %s87, %s90
    %p99 = scmp.eq.s32.totalorder %s14, 1
    %p100 = por %p98, %p99
    %p101 = scmp.ne.s32.totalorder %s90, %s91
    %p102 = scmp.eq.s32.totalorder %s14, 0
    %p103 = por %p101, %p102
    %p104 = scmp.ne.s32.totalorder %s90, %s91
    %p105 = scmp.eq.s32.totalorder %s15, 1
    %p106 = por %p104, %p105
    %p108 = scmp.ne.s32.totalorder %s91, %s107
    %p109 = scmp.eq.s32.totalorder %s15, 0
    %p110 = por %p108, %p109
    %p111 = scmp.le.s32.totalorder 1, %s9
    %p112 = scmp.lt.s32.totalorder %s9, 3
    %p113 = pnand %p111, %p112
    %p114 = pneg %p113
    // Predicated region
    $region9: #{_lambda_.56} parent=5 // pred_check
      _
    $region10: #{_lambda_.56} parent=5 // pred_check_branch
      %116 = sbr.rel (%p113) target = $region12
    $region11: #{_lambda_.56} parent=5 // pred_region
      %s117 = ssub.s32 %s9, 1
      // Predicated region
      $region13: #{_lambda_.56} parent=11 // pred_check
        %p118 = pneg %p56
      $region14: #{_lambda_.56} parent=11 // pred_check_branch
        %120 = sbr.rel (%p118) target = $region16
      $region15: #{_lambda_.56} parent=11 // pred_region
        _
      $region16: #{_lambda_.56} parent=11 // pred_fallthru
        _
      // Predicated region
      $region17: #{_lambda_.56} parent=11 // pred_check
        %p121 = pneg %p77
      $region18: #{_lambda_.56} parent=11 // pred_check_branch
        %123 = sbr.rel (%p121) target = $region20
      $region19: #{_lambda_.56} parent=11 // pred_region
        _
      $region20: #{_lambda_.56} parent=11 // pred_fallthru
        _
    $region12: #{_lambda_.56} parent=5 // pred_fallthru
      _
    %p124 = scmp.lt.s32.totalorder %s9, 2
    // Predicated region
    $region21: #{_lambda_.56} parent=5 // pred_check
      %p125 = pneg %p124
    $region22: #{_lambda_.56} parent=5 // pred_check_branch
      %127 = sbr.rel (%p125) target = $region24
    $region23: #{_lambda_.56} parent=5 // pred_region
      // Predicated region
      $region25: #{_lambda_.56} parent=23 // pred_check
        %p128 = pneg %p29
      $region26: #{_lambda_.56} parent=23 // pred_check_branch
        %130 = sbr.rel (%p128) target = $region28
      $region27: #{_lambda_.56} parent=23 // pred_region
        %p131 = scmp.lt.s32.totalorder %s9, 1
        %s132 = scalar_select %p131, %s9, 1
        %s133 = smul.addr %s132, 8
        %s134 = scalar_lea.vmem %s0, %s133
      $region28: #{_lambda_.56} parent=23 // pred_fallthru
        _
    $region24: #{_lambda_.56} parent=5 // pred_fallthru
      _
    %p135 = scmp.le.s32.totalorder 1, %s9
    %p136 = scmp.lt.s32.totalorder %s9, 3
    %p137 = pnand %p135, %p136
    %p138 = pneg %p137
    // Predicated region
    $region29: #{_lambda_.56} parent=5 // pred_check
      _
    $region30: #{_lambda_.56} parent=5 // pred_check_branch
      %140 = sbr.rel (%p137) target = $region32
    $region31: #{_lambda_.56} parent=5 // pred_region
      %s141 = ssub.s32 %s9, 1
      %p142 = scmp.lt.s32.totalorder %s14, 1
      %s143 = scalar_select %p142, %s14, 1
      %s144 = smul.addr %s143, 8
      %s145 = scalar_lea.vmem %s0, %s144
      %p146 = pneg %p35
      %p147 = pneg %p32
      %p148 = pneg %p56
      %p149 = pneg %p53
      %p150 = pneg %p77
      %p151 = pneg %p74
      %p152 = pneg %p103
      %p153 = pneg %p100
      %p154 = scmp.lt.s32.totalorder %s14, 1
      %s155 = scalar_select %p154, %s14, 1
      %s156 = smul.addr %s155, 8
      %s157 = scalar_lea.vmem %s3, %s156
      %p158 = scmp.lt.s32.totalorder %s14, 1
      %s159 = scalar_select %p158, %s14, 1
      %s160 = smul.addr %s159, 8
      %s161 = scalar_lea.vmem %s0, %s160
      %p162 = scmp.lt.s32.totalorder %s14, 1
      %s163 = scalar_select %p162, %s14, 1
      %s164 = smul.addr %s163, 8
      %s165 = scalar_lea.vmem %s3, %s164
      %v167 = vld [vmem:[%s161] sm:$0xff]
      %v168 = vld [vmem:[%s2] sm:$0x1]
      %v169 = vpack.c.bf16 %v167, %v167
      %v170 = vld [vmem:[%s1] sm:$0xff]
      %v171 = vld [vmem:[%s1 + $0x8] sm:$0xff]
      %v172 = vld [vmem:[%s1 + $0x10] sm:$0xff]
      %v173 = vld [vmem:[%s1 + $0x18] sm:$0xff]
      %v174 = vpack.c.bf16 %v171, %v170
      %v175 = vpack.c.bf16 %v173, %v172
      %v177 = vlaneseq
      %v178 = vshrl.u32 %v177, 7
      %v179 = vsub.s32 0, %v178
      %v180 = vrot.slane %v168, %v179
      %vm182 = vcmask 261120
      %v184 = vsel %vm182, %v169, 0
      %186 = vmatprep.subr.bf16.mxu0 0
      %187 = vmatpush1.bf16.msra.mxu0 0
      %188 = vmatprep.subr.bf16.mxu0 0
      %189 = vmatpush1.bf16.msra.mxu0 0
      %190 = vmatprep.subr.bf16.mxu0 0
      %191 = vmatpush1.bf16.msra.mxu0 0
      %192 = vmatprep.subr.bf16.mxu0 0
      %193 = vmatpush1.bf16.msra.mxu0 0
      %194 = vmatprep.subr.bf16.mxu0 0
      %195 = vmatpush1.bf16.msra.mxu0 0
      %196 = vmatprep.subr.bf16.mxu0 0
      %197 = vmatpush1.bf16.msra.mxu0 0
      %198 = vmatprep.subr.bf16.mxu0 0
      %199 = vmatpush1.bf16.msra.mxu0 %v175
      %200 = vmatprep.subr.bf16.mxu0 0
      %201 = vmatpush1.bf16.msra.mxu0 %v174
      %202 = vmatprep.subr.bf16.mxu0 0
      %203 = vmatpush2.bf16.msra.mxu0 0
      %204 = vmatprep.subr.bf16.mxu0 0
      %205 = vmatpush2.bf16.msra.mxu0 0
      %206 = vmatprep.subr.bf16.mxu0 0
      %207 = vmatpush2.bf16.msra.mxu0 0
      %208 = vmatprep.subr.bf16.mxu0 0
      %209 = vmatpush2.bf16.msra.mxu0 0
      %210 = vmatprep.subr.bf16.mxu0 0
      %211 = vmatpush2.bf16.msra.mxu0 0
      %212 = vmatprep.subr.bf16.mxu0 0
      %213 = vmatpush2.bf16.msra.mxu0 0
      %214 = vmatprep.subr.bf16.mxu0 0
      %215 = vmatpush2.bf16.msra.mxu0 0
      %216 = vmatprep.subr.bf16.mxu0 0
      %217 = vmatpush2.bf16.msra.mxu0 0
      %218 = vmatprep.mubr.bf16.mxu0 0
      %219 = vmatmul.mubr.bf16.gmra.mxu0 %v184
      %v220 = vpop.f32.mrf.mxu0
      %v221 = vadd.f32 %v180, %v220
      %v222 = vpop.f32.mrf.mxu0
      %v223 = vpop.f32.mrf.mxu0
      %v224 = vpop.f32.mrf.mxu0
      %225 = vdwg.mxu0
      %vm226 = vcmask 523264
      %227 = vst.msk [vmem:[%s165] sm:$0xff] %vm226, %v221
      %p228 = scmp.lt.s32.totalorder %s14, 1
      %s229 = scalar_select %p228, %s14, 1
      %s230 = smul.addr %s229, 8
      %s231 = scalar_lea.vmem %s3, %s230
      // Predicated region
      $region33: #{_lambda_.56} parent=31 // pred_check
        %p232 = pneg %p100
      $region34: #{_lambda_.56} parent=31 // pred_check_branch
        %234 = sbr.rel (%p232) target = $region36
      $region35: #{_lambda_.56} parent=31 // pred_region
        _
      $region36: #{_lambda_.56} parent=31 // pred_fallthru
        _
    $region32: #{_lambda_.56} parent=5 // pred_fallthru
      _
    %p235 = scmp.le.s32.totalorder 2, %s9
    // Predicated region
    $region37: #{_lambda_.56} parent=5 // pred_check
      %p236 = pneg %p235
    $region38: #{_lambda_.56} parent=5 // pred_check_branch
      %238 = sbr.rel (%p236) target = $region40
    $region39: #{_lambda_.56} parent=5 // pred_region
      %s239 = ssub.s32 %s9, 2
      // Predicated region
      $region41: #{_lambda_.56} parent=39 // pred_check
        %p240 = pneg %p106
      $region42: #{_lambda_.56} parent=39 // pred_check_branch
        %242 = sbr.rel (%p240) target = $region44
      $region43: #{_lambda_.56} parent=39 // pred_region
        %p243 = scmp.lt.s32.totalorder %s15, 1
        %s244 = scalar_select %p243, %s15, 1
        %s245 = smul.addr %s244, 8
        %s246 = scalar_lea.vmem %s3, %s245
      $region44: #{_lambda_.56} parent=39 // pred_fallthru
        _
    $region40: #{_lambda_.56} parent=5 // pred_fallthru
      _
  $region6: #{_lambda_.56} parent=0 // loop_footer
    %s13 = sadd.s32 1, %s9
  $region7: #{_lambda_.56} parent=0 // loop_footer_branch
    %8 = sbr.rel target = $region3
  $region8: #{_lambda_.56} parent=0 // loop_exit
    _

// kernel: _lambda_.46
$region0: #{_lambda_.46}
  #allocation0 [shape = 'u32[]', space=smem, size = 0x4, offset = 0x4, fixed_abs, tag = 'smem constant byte address 0x4 - core index']
  #allocation1 [shape = 'u32[144,128]{1,0:T(1,128)}', space=vmem, size = 0x12000, scoped, tag = 'internal scratch']
  %s0 = inlined_call_operand.vmem [shape: f32[2,8,32], index: 0, kind: input, shape index: {}]
  %s1 = inlined_call_operand.vmem [shape: f32[2,8,32], index: 1, kind: input, shape index: {}]
  %s2 = inlined_call_operand.vmem [shape: f32[1,32], index: 2, kind: input, shape index: {}]
  %s3 = inlined_call_operand.vmem [shape: f32[1,32], index: 3, kind: input, shape index: {}]
  %s4 = inlined_call_operand.vmem [shape: f32[2,8,32], index: 4, kind: output, shape index: {}]
  %s5 = sld [smem:[#allocation0]]
  $region49: #{_lambda_.46} parent=0
    _
  %s7 = ssub.s32 1, %s5
  %s8 = scalar_select 0, %s7, %s5
  loop: start=0, step=1, limit=4
  $region2: #{_lambda_.46} parent=0 // loop_pre_header
    _
  $region3: #{_lambda_.46} parent=0 // loop_header
    %s10 = sphi 0, %s14
    %p11 = scmp.ge.s32.totalorder %s10, 4
    %s20 = sphi 0, %s22
    %s23 = sphi 0, %s20
    %s24 = sphi 0, %s23
    %s40 = sphi 0, %s24
    %s46 = sphi 0, %s48
    %s49 = sphi 0, %s46
    %s50 = sphi 0, %s49
    %s66 = sphi 0, %s50
    %s70 = sphi 0, %s70
    %s72 = sphi 0, %s70
    %s73 = sphi 0, %s72
    %s87 = sphi 0, %s73
    %s91 = sphi 0, %s91
    %s93 = sphi 0, %s91
    %s94 = sphi 0, %s93
    %s108 = sphi 0, %s94
    %s114 = sphi 0, %s116
    %s117 = sphi 0, %s114
    %s118 = sphi 0, %s117
    %s134 = sphi 0, %s118
  $region4: #{_lambda_.46} parent=0 // loop_header_branch
    %13 = sbr.rel (%p11) target = $region8
  $region5: #{_lambda_.46} parent=0 // loop_body
    %s15 = ssub.s32 %s10, 1
    %s16 = ssub.s32 %s10, 2
    %s17 = sadd.s32 %s10, 1
    %s18 = ssub.s32 %s10, %s17
    %p19 = scmp.eq.s32.totalorder %s18, 0
    %s21 = sadd.s32 %s20, 1
    %s22 = scalar_select %p19, %s20, %s21
    %p25 = pneg %p19
    %p26 = scmp.eq.s32.totalorder %s10, 1
    %p27 = por %p25, %p26
    %p28 = scmp.ne.s32.totalorder %s20, %s23
    %p29 = scmp.eq.s32.totalorder %s10, 0
    %p30 = por %p28, %p29
    %p31 = scmp.ne.s32.totalorder %s20, %s23
    %p32 = scmp.eq.s32.totalorder %s15, 1
    %p33 = por %p31, %p32
    %p34 = scmp.ne.s32.totalorder %s23, %s24
    %p35 = scmp.eq.s32.totalorder %s15, 0
    %p36 = por %p34, %p35
    %p37 = scmp.ne.s32.totalorder %s23, %s24
    %p38 = scmp.eq.s32.totalorder %s16, 1
    %p39 = por %p37, %p38
    %p41 = scmp.ne.s32.totalorder %s24, %s40
    %p42 = scmp.eq.s32.totalorder %s16, 0
    %p43 = por %p41, %p42
    %s44 = ssub.s32 %s10, %s17
    %p45 = scmp.eq.s32.totalorder %s44, 0
    %s47 = sadd.s32 %s46, 1
    %s48 = scalar_select %p45, %s46, %s47
    %p51 = pneg %p45
    %p52 = scmp.eq.s32.totalorder %s10, 1
    %p53 = por %p51, %p52
    %p54 = scmp.ne.s32.totalorder %s46, %s49
    %p55 = scmp.eq.s32.totalorder %s10, 0
    %p56 = por %p54, %p55
    %p57 = scmp.ne.s32.totalorder %s46, %s49
    %p58 = scmp.eq.s32.totalorder %s15, 1
    %p59 = por %p57, %p58
    %p60 = scmp.ne.s32.totalorder %s49, %s50
    %p61 = scmp.eq.s32.totalorder %s15, 0
    %p62 = por %p60, %p61
    %p63 = scmp.ne.s32.totalorder %s49, %s50
    %p64 = scmp.eq.s32.totalorder %s16, 1
    %p65 = por %p63, %p64
    %p67 = scmp.ne.s32.totalorder %s50, %s66
    %p68 = scmp.eq.s32.totalorder %s16, 0
    %p69 = por %p67, %p68
    %s71 = sadd.s32 %s70, 1
    %p74 = scmp.eq.s32.totalorder %s10, 1
    %p75 = scmp.ne.s32.totalorder %s70, %s72
    %p76 = scmp.eq.s32.totalorder %s10, 0
    %p77 = por %p75, %p76
    %p78 = scmp.ne.s32.totalorder %s70, %s72
    %p79 = scmp.eq.s32.totalorder %s15, 1
    %p80 = por %p78, %p79
    %p81 = scmp.ne.s32.totalorder %s72, %s73
    %p82 = scmp.eq.s32.totalorder %s15, 0
    %p83 = por %p81, %p82
    %p84 = scmp.ne.s32.totalorder %s72, %s73
    %p85 = scmp.eq.s32.totalorder %s16, 1
    %p86 = por %p84, %p85
    %p88 = scmp.ne.s32.totalorder %s73, %s87
    %p89 = scmp.eq.s32.totalorder %s16, 0
    %p90 = por %p88, %p89
    %s92 = sadd.s32 %s91, 1
    %p95 = scmp.eq.s32.totalorder %s10, 1
    %p96 = scmp.ne.s32.totalorder %s91, %s93
    %p97 = scmp.eq.s32.totalorder %s10, 0
    %p98 = por %p96, %p97
    %p99 = scmp.ne.s32.totalorder %s91, %s93
    %p100 = scmp.eq.s32.totalorder %s15, 1
    %p101 = por %p99, %p100
    %p102 = scmp.ne.s32.totalorder %s93, %s94
    %p103 = scmp.eq.s32.totalorder %s15, 0
    %p104 = por %p102, %p103
    %p105 = scmp.ne.s32.totalorder %s93, %s94
    %p106 = scmp.eq.s32.totalorder %s16, 1
    %p107 = por %p105, %p106
    %p109 = scmp.ne.s32.totalorder %s94, %s108
    %p110 = scmp.eq.s32.totalorder %s16, 0
    %p111 = por %p109, %p110
    %s112 = ssub.s32 %s10, %s17
    %p113 = scmp.eq.s32.totalorder %s112, 0
    %s115 = sadd.s32 %s114, 1
    %s116 = scalar_select %p113, %s114, %s115
    %p119 = pneg %p113
    %p120 = scmp.eq.s32.totalorder %s10, 1
    %p121 = por %p119, %p120
    %p122 = scmp.ne.s32.totalorder %s114, %s117
    %p123 = scmp.eq.s32.totalorder %s10, 0
    %p124 = por %p122, %p123
    %p125 = scmp.ne.s32.totalorder %s114, %s117
    %p126 = scmp.eq.s32.totalorder %s15, 1
    %p127 = por %p125, %p126
    %p128 = scmp.ne.s32.totalorder %s117, %s118
    %p129 = scmp.eq.s32.totalorder %s15, 0
    %p130 = por %p128, %p129
    %p131 = scmp.ne.s32.totalorder %s117, %s118
    %p132 = scmp.eq.s32.totalorder %s16, 1
    %p133 = por %p131, %p132
    %p135 = scmp.ne.s32.totalorder %s118, %s134
    %p136 = scmp.eq.s32.totalorder %s16, 0
    %p137 = por %p135, %p136
    %p138 = scmp.le.s32.totalorder 1, %s10
    %p139 = scmp.lt.s32.totalorder %s10, 3
    %p140 = pnand %p138, %p139
    %p141 = pneg %p140
    // Predicated region
    $region9: #{_lambda_.46} parent=5 // pred_check
      _
    $region10: #{_lambda_.46} parent=5 // pred_check_branch
      %143 = sbr.rel (%p140) target = $region12
    $region11: #{_lambda_.46} parent=5 // pred_region
      %s144 = ssub.s32 %s10, 1
      // Predicated region
      $region13: #{_lambda_.46} parent=11 // pred_check
        %p145 = pneg %p83
      $region14: #{_lambda_.46} parent=11 // pred_check_branch
        %147 = sbr.rel (%p145) target = $region16
      $region15: #{_lambda_.46} parent=11 // pred_region
        _
      $region16: #{_lambda_.46} parent=11 // pred_fallthru
        _
      // Predicated region
      $region17: #{_lambda_.46} parent=11 // pred_check
        %p148 = pneg %p104
      $region18: #{_lambda_.46} parent=11 // pred_check_branch
        %150 = sbr.rel (%p148) target = $region20
      $region19: #{_lambda_.46} parent=11 // pred_region
        _
      $region20: #{_lambda_.46} parent=11 // pred_fallthru
        _
    $region12: #{_lambda_.46} parent=5 // pred_fallthru
      _
    %p151 = scmp.lt.s32.totalorder %s10, 2
    // Predicated region
    $region21: #{_lambda_.46} parent=5 // pred_check
      %p152 = pneg %p151
    $region22: #{_lambda_.46} parent=5 // pred_check_branch
      %154 = sbr.rel (%p152) target = $region24
    $region23: #{_lambda_.46} parent=5 // pred_region
      // Predicated region
      $region25: #{_lambda_.46} parent=23 // pred_check
        %p155 = pneg %p30
      $region26: #{_lambda_.46} parent=23 // pred_check_branch
        %157 = sbr.rel (%p155) target = $region28
      $region27: #{_lambda_.46} parent=23 // pred_region
        %p158 = scmp.lt.s32.totalorder %s10, 1
        %s159 = scalar_select %p158, %s10, 1
        %s160 = smul.addr %s159, 8
        %s161 = scalar_lea.vmem %s0, %s160
      $region28: #{_lambda_.46} parent=23 // pred_fallthru
        _
      // Predicated region
      $region29: #{_lambda_.46} parent=23 // pred_check
        %p162 = pneg %p56
      $region30: #{_lambda_.46} parent=23 // pred_check_branch
        %164 = sbr.rel (%p162) target = $region32
      $region31: #{_lambda_.46} parent=23 // pred_region
        %p165 = scmp.lt.s32.totalorder %s10, 1
        %s166 = scalar_select %p165, %s10, 1
        %s167 = smul.addr %s166, 8
        %s168 = scalar_lea.vmem %s1, %s167
      $region32: #{_lambda_.46} parent=23 // pred_fallthru
        _
    $region24: #{_lambda_.46} parent=5 // pred_fallthru
      _
    %p169 = scmp.le.s32.totalorder 1, %s10
    %p170 = scmp.lt.s32.totalorder %s10, 3
    %p171 = pnand %p169, %p170
    %p172 = pneg %p171
    // Predicated region
    $region33: #{_lambda_.46} parent=5 // pred_check
      _
    $region34: #{_lambda_.46} parent=5 // pred_check_branch
      %174 = sbr.rel (%p171) target = $region36
    $region35: #{_lambda_.46} parent=5 // pred_region
      %s175 = ssub.s32 %s10, 1
      %p176 = scmp.lt.s32.totalorder %s15, 1
      %s177 = scalar_select %p176, %s15, 1
      %s178 = smul.addr %s177, 8
      %s179 = scalar_lea.vmem %s0, %s178
      %p180 = pneg %p36
      %p181 = pneg %p33
      %p182 = scmp.lt.s32.totalorder %s15, 1
      %s183 = scalar_select %p182, %s15, 1
      %s184 = smul.addr %s183, 8
      %s185 = scalar_lea.vmem %s1, %s184
      %p186 = pneg %p62
      %p187 = pneg %p59
      %p188 = pneg %p83
      %p189 = pneg %p80
      %p190 = pneg %p104
      %p191 = pneg %p101
      %p192 = pneg %p130
      %p193 = pneg %p127
      %p194 = scmp.lt.s32.totalorder %s15, 1
      %s195 = scalar_select %p194, %s15, 1
      %s196 = smul.addr %s195, 8
      %s197 = scalar_lea.vmem %s4, %s196
      %p198 = scmp.lt.s32.totalorder %s15, 1
      %s199 = scalar_select %p198, %s15, 1
      %s200 = smul.addr %s199, 8
      %s201 = scalar_lea.vmem %s0, %s200
      %p202 = scmp.lt.s32.totalorder %s15, 1
      %s203 = scalar_select %p202, %s15, 1
      %s204 = smul.addr %s203, 8
      %s205 = scalar_lea.vmem %s1, %s204
      %p206 = scmp.lt.s32.totalorder %s15, 1
      %s207 = scalar_select %p206, %s15, 1
      %s208 = smul.addr %s207, 8
      %s209 = scalar_lea.vmem %s4, %s208
      %v210 = vld [vmem:[%s201] sm:$0xff]
      %v211 = vld [vmem:[%s205] sm:$0xff]
      %v212 = vadd.f32 %v210, %v211
      %v213 = vld [vmem:[%s2] sm:$0x1]
      %v214 = vld [vmem:[%s3] sm:$0x1]
      %vm215 = vcmask 261120
      %v216 = vsel %vm215, %v212, 0.0
      %217 = vadd.xlane.f32.xlu0 %v216
      %v218 = vpop.xlane.xlu0 %217
      %v219 = vrcp.pop 32.0
      %v220 = vmul.f32 %v218, %v219
      %v221 = vsub.f32 %v212, %v220
      %v222 = vmul.f32 %v221, %v221
      %v223 = vsel %vm215, %v222, 0.0
      %224 = vadd.xlane.f32.xlu0 %v223
      %v225 = vpop.xlane.xlu0 %224
      %v226 = vmul.f32 %v225, 0.032258064
      %v227 = vrsqrt.pop %v226
      %v228 = vmul.f32 %v226, %v227
      %vm229 = vcmp.eq.f32.partialorder %v226, inf
      %v230 = vsel %vm229, %v226, %v228
      %vm231 = vcmp.eq.f32.partialorder %v226, 0.0
      %v232 = vand.u32 %v226, 2147483648
      %v233 = vsel %vm231, %v232, %v230
      %v234 = vadd.f32 %v233, 1e-06
      %v235 = vrcp.pop %v234
      %v237 = vlaneseq
      %v238 = vshrl.u32 %v237, 7
      %v239 = vsub.s32 0, %v238
      %v240 = vrot.slane %v213, %v239
      %v242 = vmul.f32 %v240, %v235
      %v243 = vmul.f32 %v221, %v242
      %v245 = vlaneseq
      %v246 = vshrl.u32 %v245, 7
      %v247 = vsub.s32 0, %v246
      %v248 = vrot.slane %v214, %v247
      %v250 = vadd.f32 %v243, %v248
      %251 = vst.msk [vmem:[%s209] sm:$0xff] %vm215, %v250
      %p252 = scmp.lt.s32.totalorder %s15, 1
      %s253 = scalar_select %p252, %s15, 1
      %s254 = smul.addr %s253, 8
      %s255 = scalar_lea.vmem %s4, %s254
      // Predicated region
      $region37: #{_lambda_.46} parent=35 // pred_check
        %p256 = pneg %p127
      $region38: #{_lambda_.46} parent=35 // pred_check_branch
        %258 = sbr.rel (%p256) target = $region40
      $region39: #{_lambda_.46} parent=35 // pred_region
        _
      $region40: #{_lambda_.46} parent=35 // pred_fallthru
        _
    $region36: #{_lambda_.46} parent=5 // pred_fallthru
      _
    %p259 = scmp.le.s32.totalorder 2, %s10
    // Predicated region
    $region41: #{_lambda_.46} parent=5 // pred_check
      %p260 = pneg %p259
    $region42: #{_lambda_.46} parent=5 // pred_check_branch
      %262 = sbr.rel (%p260) target = $region44
    $region43: #{_lambda_.46} parent=5 // pred_region
      %s263 = ssub.s32 %s10, 2
      // Predicated region
      $region45: #{_lambda_.46} parent=43 // pred_check
        %p264 = pneg %p133
      $region46: #{_lambda_.46} parent=43 // pred_check_branch
        %266 = sbr.rel (%p264) target = $region48
      $region47: #{_lambda_.46} parent=43 // pred_region
        %p267 = scmp.lt.s32.totalorder %s16, 1
        %s268 = scalar_select %p267, %s16, 1
        %s269 = smul.addr %s268, 8
        %s270 = scalar_lea.vmem %s4, %s269
      $region48: #{_lambda_.46} parent=43 // pred_fallthru
        _
    $region44: #{_lambda_.46} parent=5 // pred_fallthru
      _
  $region6: #{_lambda_.46} parent=0 // loop_footer
    %s14 = sadd.s32 1, %s10
  $region7: #{_lambda_.46} parent=0 // loop_footer_branch
    %9 = sbr.rel target = $region3
  $region8: #{_lambda_.46} parent=0 // loop_exit
    _

// kernel: _lambda_.47
$region0: #{_lambda_.47}
  #allocation0 [shape = 'u32[]', space=smem, size = 0x4, offset = 0x4, fixed_abs, tag = 'smem constant byte address 0x4 - core index']
  #allocation1 [shape = 'u32[144,128]{1,0:T(1,128)}', space=vmem, size = 0x12000, scoped, tag = 'internal scratch']
  %s0 = inlined_call_operand.vmem [shape: f32[2,8,32], index: 0, kind: input, shape index: {}]
  %s1 = inlined_call_operand.vmem [shape: f32[1,32], index: 1, kind: input, shape index: {}]
  %s2 = inlined_call_operand.vmem [shape: f32[1,32], index: 2, kind: input, shape index: {}]
  %s3 = inlined_call_operand.vmem [shape: f32[32,96], index: 3, kind: input, shape index: {}]
  %s4 = inlined_call_operand.vmem [shape: f32[1,96], index: 4, kind: input, shape index: {}]
  %s5 = inlined_call_operand.vmem [shape: f32[2,8,32], index: 5, kind: output, shape index: {0}]
  %s6 = inlined_call_operand.vmem [shape: f32[2,8,64], index: 6, kind: output, shape index: {1}]
  %7 = xla_tuple %s5, %s6
  %s8 = sld [smem:[#allocation0]]
  $region61: #{_lambda_.47} parent=0
    _
  %s10 = ssub.s32 1, %s8
  %s11 = scalar_select 0, %s10, %s8
  loop: start=0, step=1, limit=4
  $region2: #{_lambda_.47} parent=0 // loop_pre_header
    _
  $region3: #{_lambda_.47} parent=0 // loop_header
    %s13 = sphi 0, %s17
    %p14 = scmp.ge.s32.totalorder %s13, 4
    %s23 = sphi 0, %s25
    %s26 = sphi 0, %s23
    %s27 = sphi 0, %s26
    %s43 = sphi 0, %s27
    %s47 = sphi 0, %s47
    %s49 = sphi 0, %s47
    %s50 = sphi 0, %s49
    %s64 = sphi 0, %s50
    %s68 = sphi 0, %s68
    %s70 = sphi 0, %s68
    %s71 = sphi 0, %s70
    %s85 = sphi 0, %s71
    %s89 = sphi 0, %s89
    %s91 = sphi 0, %s89
    %s92 = sphi 0, %s91
    %s106 = sphi 0, %s92
    %s110 = sphi 0, %s110
    %s112 = sphi 0, %s110
    %s113 = sphi 0, %s112
    %s127 = sphi 0, %s113
    %s133 = sphi 0, %s135
    %s136 = sphi 0, %s133
    %s137 = sphi 0, %s136
    %s153 = sphi 0, %s137
    %s159 = sphi 0, %s161
    %s162 = sphi 0, %s159
    %s163 = sphi 0, %s162
    %s179 = sphi 0, %s163
  $region4: #{_lambda_.47} parent=0 // loop_header_branch
    %16 = sbr.rel (%p14) target = $region8
  $region5: #{_lambda_.47} parent=0 // loop_body
    %s18 = ssub.s32 %s13, 1
    %s19 = ssub.s32 %s13, 2
    %s20 = sadd.s32 %s13, 1
    %s21 = ssub.s32 %s13, %s20
    %p22 = scmp.eq.s32.totalorder %s21, 0
    %s24 = sadd.s32 %s23, 1
    %s25 = scalar_select %p22, %s23, %s24
    %p28 = pneg %p22
    %p29 = scmp.eq.s32.totalorder %s13, 1
    %p30 = por %p28, %p29
    %p31 = scmp.ne.s32.totalorder %s23, %s26
    %p32 = scmp.eq.s32.totalorder %s13, 0
    %p33 = por %p31, %p32
    %p34 = scmp.ne.s32.totalorder %s23, %s26
    %p35 = scmp.eq.s32.totalorder %s18, 1
    %p36 = por %p34, %p35
    %p37 = scmp.ne.s32.totalorder %s26, %s27
    %p38 = scmp.eq.s32.totalorder %s18, 0
    %p39 = por %p37, %p38
    %p40 = scmp.ne.s32.totalorder %s26, %s27
    %p41 = scmp.eq.s32.totalorder %s19, 1
    %p42 = por %p40, %p41
    %p44 = scmp.ne.s32.totalorder %s27, %s43
    %p45 = scmp.eq.s32.totalorder %s19, 0
    %p46 = por %p44, %p45
    %s48 = sadd.s32 %s47, 1
    %p51 = scmp.eq.s32.totalorder %s13, 1
    %p52 = scmp.ne.s32.totalorder %s47, %s49
    %p53 = scmp.eq.s32.totalorder %s13, 0
    %p54 = por %p52, %p53
    %p55 = scmp.ne.s32.totalorder %s47, %s49
    %p56 = scmp.eq.s32.totalorder %s18, 1
    %p57 = por %p55, %p56
    %p58 = scmp.ne.s32.totalorder %s49, %s50
    %p59 = scmp.eq.s32.totalorder %s18, 0
    %p60 = por %p58, %p59
    %p61 = scmp.ne.s32.totalorder %s49, %s50
    %p62 = scmp.eq.s32.totalorder %s19, 1
    %p63 = por %p61, %p62
    %p65 = scmp.ne.s32.totalorder %s50, %s64
    %p66 = scmp.eq.s32.totalorder %s19, 0
    %p67 = por %p65, %p66
    %s69 = sadd.s32 %s68, 1
    %p72 = scmp.eq.s32.totalorder %s13, 1
    %p73 = scmp.ne.s32.totalorder %s68, %s70
    %p74 = scmp.eq.s32.totalorder %s13, 0
    %p75 = por %p73, %p74
    %p76 = scmp.ne.s32.totalorder %s68, %s70
    %p77 = scmp.eq.s32.totalorder %s18, 1
    %p78 = por %p76, %p77
    %p79 = scmp.ne.s32.totalorder %s70, %s71
    %p80 = scmp.eq.s32.totalorder %s18, 0
    %p81 = por %p79, %p80
    %p82 = scmp.ne.s32.totalorder %s70, %s71
    %p83 = scmp.eq.s32.totalorder %s19, 1
    %p84 = por %p82, %p83
    %p86 = scmp.ne.s32.totalorder %s71, %s85
    %p87 = scmp.eq.s32.totalorder %s19, 0
    %p88 = por %p86, %p87
    %s90 = sadd.s32 %s89, 1
    %p93 = scmp.eq.s32.totalorder %s13, 1
    %p94 = scmp.ne.s32.totalorder %s89, %s91
    %p95 = scmp.eq.s32.totalorder %s13, 0
    %p96 = por %p94, %p95
    %p97 = scmp.ne.s32.totalorder %s89, %s91
    %p98 = scmp.eq.s32.totalorder %s18, 1
    %p99 = por %p97, %p98
    %p100 = scmp.ne.s32.totalorder %s91, %s92
    %p101 = scmp.eq.s32.totalorder %s18, 0
    %p102 = por %p100, %p101
    %p103 = scmp.ne.s32.totalorder %s91, %s92
    %p104 = scmp.eq.s32.totalorder %s19, 1
    %p105 = por %p103, %p104
    %p107 = scmp.ne.s32.totalorder %s92, %s106
    %p108 = scmp.eq.s32.totalorder %s19, 0
    %p109 = por %p107, %p108
    %s111 = sadd.s32 %s110, 1
    %p114 = scmp.eq.s32.totalorder %s13, 1
    %p115 = scmp.ne.s32.totalorder %s110, %s112
    %p116 = scmp.eq.s32.totalorder %s13, 0
    %p117 = por %p115, %p116
    %p118 = scmp.ne.s32.totalorder %s110, %s112
    %p119 = scmp.eq.s32.totalorder %s18, 1
    %p120 = por %p118, %p119
    %p121 = scmp.ne.s32.totalorder %s112, %s113
    %p122 = scmp.eq.s32.totalorder %s18, 0
    %p123 = por %p121, %p122
    %p124 = scmp.ne.s32.totalorder %s112, %s113
    %p125 = scmp.eq.s32.totalorder %s19, 1
    %p126 = por %p124, %p125
    %p128 = scmp.ne.s32.totalorder %s113, %s127
    %p129 = scmp.eq.s32.totalorder %s19, 0
    %p130 = por %p128, %p129
    %s131 = ssub.s32 %s13, %s20
    %p132 = scmp.eq.s32.totalorder %s131, 0
    %s134 = sadd.s32 %s133, 1
    %s135 = scalar_select %p132, %s133, %s134
    %p138 = pneg %p132
    %p139 = scmp.eq.s32.totalorder %s13, 1
    %p140 = por %p138, %p139
    %p141 = scmp.ne.s32.totalorder %s133, %s136
    %p142 = scmp.eq.s32.totalorder %s13, 0
    %p143 = por %p141, %p142
    %p144 = scmp.ne.s32.totalorder %s133, %s136
    %p145 = scmp.eq.s32.totalorder %s18, 1
    %p146 = por %p144, %p145
    %p147 = scmp.ne.s32.totalorder %s136, %s137
    %p148 = scmp.eq.s32.totalorder %s18, 0
    %p149 = por %p147, %p148
    %p150 = scmp.ne.s32.totalorder %s136, %s137
    %p151 = scmp.eq.s32.totalorder %s19, 1
    %p152 = por %p150, %p151
    %p154 = scmp.ne.s32.totalorder %s137, %s153
    %p155 = scmp.eq.s32.totalorder %s19, 0
    %p156 = por %p154, %p155
    %s157 = ssub.s32 %s13, %s20
    %p158 = scmp.eq.s32.totalorder %s157, 0
    %s160 = sadd.s32 %s159, 1
    %s161 = scalar_select %p158, %s159, %s160
    %p164 = pneg %p158
    %p165 = scmp.eq.s32.totalorder %s13, 1
    %p166 = por %p164, %p165
    %p167 = scmp.ne.s32.totalorder %s159, %s162
    %p168 = scmp.eq.s32.totalorder %s13, 0
    %p169 = por %p167, %p168
    %p170 = scmp.ne.s32.totalorder %s159, %s162
    %p171 = scmp.eq.s32.totalorder %s18, 1
    %p172 = por %p170, %p171
    %p173 = scmp.ne.s32.totalorder %s162, %s163
    %p174 = scmp.eq.s32.totalorder %s18, 0
    %p175 = por %p173, %p174
    %p176 = scmp.ne.s32.totalorder %s162, %s163
    %p177 = scmp.eq.s32.totalorder %s19, 1
    %p178 = por %p176, %p177
    %p180 = scmp.ne.s32.totalorder %s163, %s179
    %p181 = scmp.eq.s32.totalorder %s19, 0
    %p182 = por %p180, %p181
    %p183 = scmp.le.s32.totalorder 1, %s13
    %p184 = scmp.lt.s32.totalorder %s13, 3
    %p185 = pnand %p183, %p184
    %p186 = pneg %p185
    // Predicated region
    $region9: #{_lambda_.47} parent=5 // pred_check
      _
    $region10: #{_lambda_.47} parent=5 // pred_check_branch
      %188 = sbr.rel (%p185) target = $region12
    $region11: #{_lambda_.47} parent=5 // pred_region
      %s189 = ssub.s32 %s13, 1
      // Predicated region
      $region13: #{_lambda_.47} parent=11 // pred_check
        %p190 = pneg %p60
      $region14: #{_lambda_.47} parent=11 // pred_check_branch
        %192 = sbr.rel (%p190) target = $region16
      $region15: #{_lambda_.47} parent=11 // pred_region
        _
      $region16: #{_lambda_.47} parent=11 // pred_fallthru
        _
      // Predicated region
      $region17: #{_lambda_.47} parent=11 // pred_check
        %p193 = pneg %p81
      $region18: #{_lambda_.47} parent=11 // pred_check_branch
        %195 = sbr.rel (%p193) target = $region20
      $region19: #{_lambda_.47} parent=11 // pred_region
        _
      $region20: #{_lambda_.47} parent=11 // pred_fallthru
        _
      // Predicated region
      $region21: #{_lambda_.47} parent=11 // pred_check
        %p196 = pneg %p102
      $region22: #{_lambda_.47} parent=11 // pred_check_branch
        %198 = sbr.rel (%p196) target = $region24
      $region23: #{_lambda_.47} parent=11 // pred_region
        _
      $region24: #{_lambda_.47} parent=11 // pred_fallthru
        _
      // Predicated region
      $region25: #{_lambda_.47} parent=11 // pred_check
        %p199 = pneg %p123
      $region26: #{_lambda_.47} parent=11 // pred_check_branch
        %201 = sbr.rel (%p199) target = $region28
      $region27: #{_lambda_.47} parent=11 // pred_region
        _
      $region28: #{_lambda_.47} parent=11 // pred_fallthru
        _
    $region12: #{_lambda_.47} parent=5 // pred_fallthru
      _
    %p202 = scmp.lt.s32.totalorder %s13, 2
    // Predicated region
    $region29: #{_lambda_.47} parent=5 // pred_check
      %p203 = pneg %p202
    $region30: #{_lambda_.47} parent=5 // pred_check_branch
      %205 = sbr.rel (%p203) target = $region32
    $region31: #{_lambda_.47} parent=5 // pred_region
      // Predicated region
      $region33: #{_lambda_.47} parent=31 // pred_check
        %p206 = pneg %p33
      $region34: #{_lambda_.47} parent=31 // pred_check_branch
        %208 = sbr.rel (%p206) target = $region36
      $region35: #{_lambda_.47} parent=31 // pred_region
        %p209 = scmp.lt.s32.totalorder %s13, 1
        %s210 = scalar_select %p209, %s13, 1
        %s211 = smul.addr %s210, 8
        %s212 = scalar_lea.vmem %s0, %s211
      $region36: #{_lambda_.47} parent=31 // pred_fallthru
        _
    $region32: #{_lambda_.47} parent=5 // pred_fallthru
      _
    %p213 = scmp.le.s32.totalorder 1, %s13
    %p214 = scmp.lt.s32.totalorder %s13, 3
    %p215 = pnand %p213, %p214
    %p216 = pneg %p215
    // Predicated region
    $region37: #{_lambda_.47} parent=5 // pred_check
      _
    $region38: #{_lambda_.47} parent=5 // pred_check_branch
      %218 = sbr.rel (%p215) target = $region40
    $region39: #{_lambda_.47} parent=5 // pred_region
      %s219 = ssub.s32 %s13, 1
      %p220 = scmp.lt.s32.totalorder %s18, 1
      %s221 = scalar_select %p220, %s18, 1
      %s222 = smul.addr %s221, 8
      %s223 = scalar_lea.vmem %s0, %s222
      %p224 = pneg %p39
      %p225 = pneg %p36
      %p226 = pneg %p60
      %p227 = pneg %p57
      %p228 = pneg %p81
      %p229 = pneg %p78
      %p230 = pneg %p102
      %p231 = pneg %p99
      %p232 = pneg %p123
      %p233 = pneg %p120
      %p234 = pneg %p149
      %p235 = pneg %p146
      %p236 = scmp.lt.s32.totalorder %s18, 1
      %s237 = scalar_select %p236, %s18, 1
      %s238 = smul.addr %s237, 8
      %s239 = scalar_lea.vmem %s5, %s238
      %p240 = pneg %p175
      %p241 = pneg %p172
      %p242 = scmp.lt.s32.totalorder %s18, 1
      %s243 = scalar_select %p242, %s18, 1
      %s244 = smul.addr %s243, 8
      %s245 = scalar_lea.vmem %s6, %s244
      %p246 = scmp.lt.s32.totalorder %s18, 1
      %s247 = scalar_select %p246, %s18, 1
      %s248 = smul.addr %s247, 8
      %s249 = scalar_lea.vmem %s0, %s248
      %p250 = scmp.lt.s32.totalorder %s18, 1
      %s251 = scalar_select %p250, %s18, 1
      %s252 = smul.addr %s251, 8
      %s253 = scalar_lea.vmem %s5, %s252
      %p254 = scmp.lt.s32.totalorder %s18, 1
      %s255 = scalar_select %p254, %s18, 1
      %s256 = smul.addr %s255, 8
      %s257 = scalar_lea.vmem %s6, %s256
      %v259 = vld [vmem:[%s249] sm:$0xff]
      %v260 = vld [vmem:[%s1] sm:$0x1]
      %v261 = vld [vmem:[%s2] sm:$0x1]
      %v262 = vld [vmem:[%s4] sm:$0x1]
      %vm263 = vcmask 261120
      %v264 = vsel %vm263, %v259, 0.0
      %265 = vadd.xlane.f32.xlu0 %v264
      %v266 = vpop.xlane.xlu0 %265
      %v267 = vrcp.pop 32.0
      %v268 = vmul.f32 %v266, %v267
      %v269 = vsub.f32 %v259, %v268
      %v270 = vmul.f32 %v269, %v269
      %v271 = vsel %vm263, %v270, 0.0
      %272 = vadd.xlane.f32.xlu0 %v271
      %v273 = vpop.xlane.xlu0 %272
      %v274 = vmul.f32 %v273, 0.032258064
      %v275 = vrsqrt.pop %v274
      %v276 = vmul.f32 %v274, %v275
      %vm277 = vcmp.eq.f32.partialorder %v274, inf
      %v278 = vsel %vm277, %v274, %v276
      %vm279 = vcmp.eq.f32.partialorder %v274, 0.0
      %v280 = vand.u32 %v274, 2147483648
      %v281 = vsel %vm279, %v280, %v278
      %v282 = vadd.f32 %v281, 1e-06
      %v283 = vrcp.pop %v282
      %v285 = vlaneseq
      %v286 = vshrl.u32 %v285, 7
      %v287 = vsub.s32 0, %v286
      %v288 = vrot.slane %v260, %v287
      %v290 = vmul.f32 %v288, %v283
      %v291 = vmul.f32 %v269, %v290
      %v293 = vlaneseq
      %v294 = vshrl.u32 %v293, 7
      %v295 = vsub.s32 0, %v294
      %v296 = vrot.slane %v261, %v295
      %v298 = vadd.f32 %v291, %v296
      %v299 = vpack.c.bf16 %v298, %v298
      %v300 = vld [vmem:[%s3] sm:$0xff]
      %v301 = vld [vmem:[%s3 + $0x8] sm:$0xff]
      %v302 = vld [vmem:[%s3 + $0x10] sm:$0xff]
      %v303 = vld [vmem:[%s3 + $0x18] sm:$0xff]
      %v304 = vpack.c.bf16 %v301, %v300
      %v305 = vpack.c.bf16 %v303, %v302
      %v307 = vlaneseq
      %v308 = vshrl.u32 %v307, 7
      %v309 = vsub.s32 0, %v308
      %v310 = vrot.slane %v262, %v309
      %v313 = vsel %vm263, %v299, 0
      %315 = vmatprep.subr.bf16.mxu0 0
      %316 = vmatpush1.bf16.msra.mxu0 0
      %317 = vmatprep.subr.bf16.mxu0 0
      %318 = vmatpush1.bf16.msra.mxu0 0
      %319 = vmatprep.subr.bf16.mxu0 0
      %320 = vmatpush1.bf16.msra.mxu0 0
      %321 = vmatprep.subr.bf16.mxu0 0
      %322 = vmatpush1.bf16.msra.mxu0 0
      %323 = vmatprep.subr.bf16.mxu0 0
      %324 = vmatpush1.bf16.msra.mxu0 0
      %325 = vmatprep.subr.bf16.mxu0 0
      %326 = vmatpush1.bf16.msra.mxu0 0
      %327 = vmatprep.subr.bf16.mxu0 0
      %328 = vmatpush1.bf16.msra.mxu0 %v305
      %329 = vmatprep.subr.bf16.mxu0 0
      %330 = vmatpush1.bf16.msra.mxu0 %v304
      %331 = vmatprep.subr.bf16.mxu0 0
      %332 = vmatpush2.bf16.msra.mxu0 0
      %333 = vmatprep.subr.bf16.mxu0 0
      %334 = vmatpush2.bf16.msra.mxu0 0
      %335 = vmatprep.subr.bf16.mxu0 0
      %336 = vmatpush2.bf16.msra.mxu0 0
      %337 = vmatprep.subr.bf16.mxu0 0
      %338 = vmatpush2.bf16.msra.mxu0 0
      %339 = vmatprep.subr.bf16.mxu0 0
      %340 = vmatpush2.bf16.msra.mxu0 0
      %341 = vmatprep.subr.bf16.mxu0 0
      %342 = vmatpush2.bf16.msra.mxu0 0
      %343 = vmatprep.subr.bf16.mxu0 0
      %344 = vmatpush2.bf16.msra.mxu0 0
      %345 = vmatprep.subr.bf16.mxu0 0
      %346 = vmatpush2.bf16.msra.mxu0 0
      %347 = vmatprep.mubr.bf16.mxu0 0
      %348 = vmatmul.mubr.bf16.gmra.mxu0 %v313
      %v349 = vpop.f32.mrf.mxu0
      %v350 = vadd.f32 %v310, %v349
      %v351 = vpop.f32.mrf.mxu0
      %v352 = vpop.f32.mrf.mxu0
      %v353 = vpop.f32.mrf.mxu0
      %354 = vdwg.mxu0
      %355 = vst.msk [vmem:[%s253] sm:$0xff] %vm263, %v350
      %357 = vrot.lane.b32.xlu0 %v350, 96
      %v358 = vpop.permute.xlu0 %357
      %vm360 = vcmask 523264
      %361 = vst.msk [vmem:[%s257] sm:$0xff] %vm360, %v358
      %p362 = scmp.lt.s32.totalorder %s18, 1
      %s363 = scalar_select %p362, %s18, 1
      %s364 = smul.addr %s363, 8
      %s365 = scalar_lea.vmem %s5, %s364
      %p366 = scmp.lt.s32.totalorder %s18, 1
      %s367 = scalar_select %p366, %s18, 1
      %s368 = smul.addr %s367, 8
      %s369 = scalar_lea.vmem %s6, %s368
      // Predicated region
      $region41: #{_lambda_.47} parent=39 // pred_check
        %p370 = pneg %p146
      $region42: #{_lambda_.47} parent=39 // pred_check_branch
        %372 = sbr.rel (%p370) target = $region44
      $region43: #{_lambda_.47} parent=39 // pred_region
        _
      $region44: #{_lambda_.47} parent=39 // pred_fallthru
        _
      // Predicated region
      $region45: #{_lambda_.47} parent=39 // pred_check
        %p373 = pneg %p172
      $region46: #{_lambda_.47} parent=39 // pred_check_branch
        %375 = sbr.rel (%p373) target = $region48
      $region47: #{_lambda_.47} parent=39 // pred_region
        _
      $region48: #{_lambda_.47} parent=39 // pred_fallthru
        _
    $region40: #{_lambda_.47} parent=5 // pred_fallthru
      _
    %p376 = scmp.le.s32.totalorder 2, %s13
    // Predicated region
    $region49: #{_lambda_.47} parent=5 // pred_check
      %p377 = pneg %p376
    $region50: #{_lambda_.47} parent=5 // pred_check_branch
      %379 = sbr.rel (%p377) target = $region52
    $region51: #{_lambda_.47} parent=5 // pred_region
      %s380 = ssub.s32 %s13, 2
      // Predicated region
      $region53: #{_lambda_.47} parent=51 // pred_check
        %p381 = pneg %p152
      $region54: #{_lambda_.47} parent=51 // pred_check_branch
        %383 = sbr.rel (%p381) target = $region56
      $region55: #{_lambda_.47} parent=51 // pred_region
        %p384 = scmp.lt.s32.totalorder %s19, 1
        %s385 = scalar_select %p384, %s19, 1
        %s386 = smul.addr %s385, 8
        %s387 = scalar_lea.vmem %s5, %s386
      $region56: #{_lambda_.47} parent=51 // pred_fallthru
        _
      // Predicated region
      $region57: #{_lambda_.47} parent=51 // pred_check
        %p388 = pneg %p178
      $region58: #{_lambda_.47} parent=51 // pred_check_branch
        %390 = sbr.rel (%p388) target = $region60
      $region59: #{_lambda_.47} parent=51 // pred_region
        %p391 = scmp.lt.s32.totalorder %s19, 1
        %s392 = scalar_select %p391, %s19, 1
        %s393 = smul.addr %s392, 8
        %s394 = scalar_lea.vmem %s6, %s393
      $region60: #{_lambda_.47} parent=51 // pred_fallthru
        _
    $region52: #{_lambda_.47} parent=5 // pred_fallthru
      _
  $region6: #{_lambda_.47} parent=0 // loop_footer
    %s17 = sadd.s32 1, %s13
  $region7: #{_lambda_.47} parent=0 // loop_footer_branch
    %12 = sbr.rel target = $region3
  $region8: #{_lambda_.47} parent=0 // loop_exit
    _

// kernel: _lambda_.49
$region0: #{_lambda_.49}
  #allocation0 [shape = 'u32[]', space=smem, size = 0x4, offset = 0x4, fixed_abs, tag = 'smem constant byte address 0x4 - core index']
  #allocation1 [shape = 'u32[144,128]{1,0:T(1,128)}', space=vmem, size = 0x12000, scoped, tag = 'internal scratch']
  %s0 = inlined_call_operand.vmem [shape: f32[2,8,32], index: 0, kind: input, shape index: {}]
  %s1 = inlined_call_operand.vmem [shape: f32[2,8,32], index: 1, kind: input, shape index: {}]
  %s2 = inlined_call_operand.vmem [shape: f32[1,32], index: 2, kind: input, shape index: {}]
  %s3 = inlined_call_operand.vmem [shape: f32[1,32], index: 3, kind: input, shape index: {}]
  %s4 = inlined_call_operand.vmem [shape: f32[32,32], index: 4, kind: input, shape index: {}]
  %s5 = inlined_call_operand.vmem [shape: f32[1,32], index: 5, kind: input, shape index: {}]
  %s6 = inlined_call_operand.vmem [shape: f32[2,8,32], index: 6, kind: output, shape index: {0}]
  %s7 = inlined_call_operand.vmem [shape: f32[2,8,32], index: 7, kind: output, shape index: {1}]
  %8 = xla_tuple %s6, %s7
  %s9 = sld [smem:[#allocation0]]
  $region65: #{_lambda_.49} parent=0
    _
  %s11 = ssub.s32 1, %s9
  %s12 = scalar_select 0, %s11, %s9
  loop: start=0, step=1, limit=4
  $region2: #{_lambda_.49} parent=0 // loop_pre_header
    _
  $region3: #{_lambda_.49} parent=0 // loop_header
    %s14 = sphi 0, %s18
    %p15 = scmp.ge.s32.totalorder %s14, 4
    %s24 = sphi 0, %s26
    %s27 = sphi 0, %s24
    %s28 = sphi 0, %s27
    %s44 = sphi 0, %s28
    %s50 = sphi 0, %s52
    %s53 = sphi 0, %s50
    %s54 = sphi 0, %s53
    %s70 = sphi 0, %s54
    %s74 = sphi 0, %s74
    %s76 = sphi 0, %s74
    %s77 = sphi 0, %s76
    %s91 = sphi 0, %s77
    %s95 = sphi 0, %s95
    %s97 = sphi 0, %s95
    %s98 = sphi 0, %s97
    %s112 = sphi 0, %s98
    %s116 = sphi 0, %s116
    %s118 = sphi 0, %s116
    %s119 = sphi 0, %s118
    %s133 = sphi 0, %s119
    %s137 = sphi 0, %s137
    %s139 = sphi 0, %s137
    %s140 = sphi 0, %s139
    %s154 = sphi 0, %s140
    %s160 = sphi 0, %s162
    %s163 = sphi 0, %s160
    %s164 = sphi 0, %s163
    %s180 = sphi 0, %s164
    %s186 = sphi 0, %s188
    %s189 = sphi 0, %s186
    %s190 = sphi 0, %s189
    %s206 = sphi 0, %s190
  $region4: #{_lambda_.49} parent=0 // loop_header_branch
    %17 = sbr.rel (%p15) target = $region8
  $region5: #{_lambda_.49} parent=0 // loop_body
    %s19 = ssub.s32 %s14, 1
    %s20 = ssub.s32 %s14, 2
    %s21 = sadd.s32 %s14, 1
    %s22 = ssub.s32 %s14, %s21
    %p23 = scmp.eq.s32.totalorder %s22, 0
    %s25 = sadd.s32 %s24, 1
    %s26 = scalar_select %p23, %s24, %s25
    %p29 = pneg %p23
    %p30 = scmp.eq.s32.totalorder %s14, 1
    %p31 = por %p29, %p30
    %p32 = scmp.ne.s32.totalorder %s24, %s27
    %p33 = scmp.eq.s32.totalorder %s14, 0
    %p34 = por %p32, %p33
    %p35 = scmp.ne.s32.totalorder %s24, %s27
    %p36 = scmp.eq.s32.totalorder %s19, 1
    %p37 = por %p35, %p36
    %p38 = scmp.ne.s32.totalorder %s27, %s28
    %p39 = scmp.eq.s32.totalorder %s19, 0
    %p40 = por %p38, %p39
    %p41 = scmp.ne.s32.totalorder %s27, %s28
    %p42 = scmp.eq.s32.totalorder %s20, 1
    %p43 = por %p41, %p42
    %p45 = scmp.ne.s32.totalorder %s28, %s44
    %p46 = scmp.eq.s32.totalorder %s20, 0
    %p47 = por %p45, %p46
    %s48 = ssub.s32 %s14, %s21
    %p49 = scmp.eq.s32.totalorder %s48, 0
    %s51 = sadd.s32 %s50, 1
    %s52 = scalar_select %p49, %s50, %s51
    %p55 = pneg %p49
    %p56 = scmp.eq.s32.totalorder %s14, 1
    %p57 = por %p55, %p56
    %p58 = scmp.ne.s32.totalorder %s50, %s53
    %p59 = scmp.eq.s32.totalorder %s14, 0
    %p60 = por %p58, %p59
    %p61 = scmp.ne.s32.totalorder %s50, %s53
    %p62 = scmp.eq.s32.totalorder %s19, 1
    %p63 = por %p61, %p62
    %p64 = scmp.ne.s32.totalorder %s53, %s54
    %p65 = scmp.eq.s32.totalorder %s19, 0
    %p66 = por %p64, %p65
    %p67 = scmp.ne.s32.totalorder %s53, %s54
    %p68 = scmp.eq.s32.totalorder %s20, 1
    %p69 = por %p67, %p68
    %p71 = scmp.ne.s32.totalorder %s54, %s70
    %p72 = scmp.eq.s32.totalorder %s20, 0
    %p73 = por %p71, %p72
    %s75 = sadd.s32 %s74, 1
    %p78 = scmp.eq.s32.totalorder %s14, 1
    %p79 = scmp.ne.s32.totalorder %s74, %s76
    %p80 = scmp.eq.s32.totalorder %s14, 0
    %p81 = por %p79, %p80
    %p82 = scmp.ne.s32.totalorder %s74, %s76
    %p83 = scmp.eq.s32.totalorder %s19, 1
    %p84 = por %p82, %p83
    %p85 = scmp.ne.s32.totalorder %s76, %s77
    %p86 = scmp.eq.s32.totalorder %s19, 0
    %p87 = por %p85, %p86
    %p88 = scmp.ne.s32.totalorder %s76, %s77
    %p89 = scmp.eq.s32.totalorder %s20, 1
    %p90 = por %p88, %p89
    %p92 = scmp.ne.s32.totalorder %s77, %s91
    %p93 = scmp.eq.s32.totalorder %s20, 0
    %p94 = por %p92, %p93
    %s96 = sadd.s32 %s95, 1
    %p99 = scmp.eq.s32.totalorder %s14, 1
    %p100 = scmp.ne.s32.totalorder %s95, %s97
    %p101 = scmp.eq.s32.totalorder %s14, 0
    %p102 = por %p100, %p101
    %p103 = scmp.ne.s32.totalorder %s95, %s97
    %p104 = scmp.eq.s32.totalorder %s19, 1
    %p105 = por %p103, %p104
    %p106 = scmp.ne.s32.totalorder %s97, %s98
    %p107 = scmp.eq.s32.totalorder %s19, 0
    %p108 = por %p106, %p107
    %p109 = scmp.ne.s32.totalorder %s97, %s98
    %p110 = scmp.eq.s32.totalorder %s20, 1
    %p111 = por %p109, %p110
    %p113 = scmp.ne.s32.totalorder %s98, %s112
    %p114 = scmp.eq.s32.totalorder %s20, 0
    %p115 = por %p113, %p114
    %s117 = sadd.s32 %s116, 1
    %p120 = scmp.eq.s32.totalorder %s14, 1
    %p121 = scmp.ne.s32.totalorder %s116, %s118
    %p122 = scmp.eq.s32.totalorder %s14, 0
    %p123 = por %p121, %p122
    %p124 = scmp.ne.s32.totalorder %s116, %s118
    %p125 = scmp.eq.s32.totalorder %s19, 1
    %p126 = por %p124, %p125
    %p127 = scmp.ne.s32.totalorder %s118, %s119
    %p128 = scmp.eq.s32.totalorder %s19, 0
    %p129 = por %p127, %p128
    %p130 = scmp.ne.s32.totalorder %s118, %s119
    %p131 = scmp.eq.s32.totalorder %s20, 1
    %p132 = por %p130, %p131
    %p134 = scmp.ne.s32.totalorder %s119, %s133
    %p135 = scmp.eq.s32.totalorder %s20, 0
    %p136 = por %p134, %p135
    %s138 = sadd.s32 %s137, 1
    %p141 = scmp.eq.s32.totalorder %s14, 1
    %p142 = scmp.ne.s32.totalorder %s137, %s139
    %p143 = scmp.eq.s32.totalorder %s14, 0
    %p144 = por %p142, %p143
    %p145 = scmp.ne.s32.totalorder %s137, %s139
    %p146 = scmp.eq.s32.totalorder %s19, 1
    %p147 = por %p145, %p146
    %p148 = scmp.ne.s32.totalorder %s139, %s140
    %p149 = scmp.eq.s32.totalorder %s19, 0
    %p150 = por %p148, %p149
    %p151 = scmp.ne.s32.totalorder %s139, %s140
    %p152 = scmp.eq.s32.totalorder %s20, 1
    %p153 = por %p151, %p152
    %p155 = scmp.ne.s32.totalorder %s140, %s154
    %p156 = scmp.eq.s32.totalorder %s20, 0
    %p157 = por %p155, %p156
    %s158 = ssub.s32 %s14, %s21
    %p159 = scmp.eq.s32.totalorder %s158, 0
    %s161 = sadd.s32 %s160, 1
    %s162 = scalar_select %p159, %s160, %s161
    %p165 = pneg %p159
    %p166 = scmp.eq.s32.totalorder %s14, 1
    %p167 = por %p165, %p166
    %p168 = scmp.ne.s32.totalorder %s160, %s163
    %p169 = scmp.eq.s32.totalorder %s14, 0
    %p170 = por %p168, %p169
    %p171 = scmp.ne.s32.totalorder %s160, %s163
    %p172 = scmp.eq.s32.totalorder %s19, 1
    %p173 = por %p171, %p172
    %p174 = scmp.ne.s32.totalorder %s163, %s164
    %p175 = scmp.eq.s32.totalorder %s19, 0
    %p176 = por %p174, %p175
    %p177 = scmp.ne.s32.totalorder %s163, %s164
    %p178 = scmp.eq.s32.totalorder %s20, 1
    %p179 = por %p177, %p178
    %p181 = scmp.ne.s32.totalorder %s164, %s180
    %p182 = scmp.eq.s32.totalorder %s20, 0
    %p183 = por %p181, %p182
    %s184 = ssub.s32 %s14, %s21
    %p185 = scmp.eq.s32.totalorder %s184, 0
    %s187 = sadd.s32 %s186, 1
    %s188 = scalar_select %p185, %s186, %s187
    %p191 = pneg %p185
    %p192 = scmp.eq.s32.totalorder %s14, 1
    %p193 = por %p191, %p192
    %p194 = scmp.ne.s32.totalorder %s186, %s189
    %p195 = scmp.eq.s32.totalorder %s14, 0
    %p196 = por %p194, %p195
    %p197 = scmp.ne.s32.totalorder %s186, %s189
    %p198 = scmp.eq.s32.totalorder %s19, 1
    %p199 = por %p197, %p198
    %p200 = scmp.ne.s32.totalorder %s189, %s190
    %p201 = scmp.eq.s32.totalorder %s19, 0
    %p202 = por %p200, %p201
    %p203 = scmp.ne.s32.totalorder %s189, %s190
    %p204 = scmp.eq.s32.totalorder %s20, 1
    %p205 = por %p203, %p204
    %p207 = scmp.ne.s32.totalorder %s190, %s206
    %p208 = scmp.eq.s32.totalorder %s20, 0
    %p209 = por %p207, %p208
    %p210 = scmp.le.s32.totalorder 1, %s14
    %p211 = scmp.lt.s32.totalorder %s14, 3
    %p212 = pnand %p210, %p211
    %p213 = pneg %p212
    // Predicated region
    $region9: #{_lambda_.49} parent=5 // pred_check
      _
    $region10: #{_lambda_.49} parent=5 // pred_check_branch
      %215 = sbr.rel (%p212) target = $region12
    $region11: #{_lambda_.49} parent=5 // pred_region
      %s216 = ssub.s32 %s14, 1
      // Predicated region
      $region13: #{_lambda_.49} parent=11 // pred_check
        %p217 = pneg %p87
      $region14: #{_lambda_.49} parent=11 // pred_check_branch
        %219 = sbr.rel (%p217) target = $region16
      $region15: #{_lambda_.49} parent=11 // pred_region
        _
      $region16: #{_lambda_.49} parent=11 // pred_fallthru
        _
      // Predicated region
      $region17: #{_lambda_.49} parent=11 // pred_check
        %p220 = pneg %p108
      $region18: #{_lambda_.49} parent=11 // pred_check_branch
        %222 = sbr.rel (%p220) target = $region20
      $region19: #{_lambda_.49} parent=11 // pred_region
        _
      $region20: #{_lambda_.49} parent=11 // pred_fallthru
        _
      // Predicated region
      $region21: #{_lambda_.49} parent=11 // pred_check
        %p223 = pneg %p129
      $region22: #{_lambda_.49} parent=11 // pred_check_branch
        %225 = sbr.rel (%p223) target = $region24
      $region23: #{_lambda_.49} parent=11 // pred_region
        _
      $region24: #{_lambda_.49} parent=11 // pred_fallthru
        _
      // Predicated region
      $region25: #{_lambda_.49} parent=11 // pred_check
        %p226 = pneg %p150
      $region26: #{_lambda_.49} parent=11 // pred_check_branch
        %228 = sbr.rel (%p226) target = $region28
      $region27: #{_lambda_.49} parent=11 // pred_region
        _
      $region28: #{_lambda_.49} parent=11 // pred_fallthru
        _
    $region12: #{_lambda_.49} parent=5 // pred_fallthru
      _
    %p229 = scmp.lt.s32.totalorder %s14, 2
    // Predicated region
    $region29: #{_lambda_.49} parent=5 // pred_check
      %p230 = pneg %p229
    $region30: #{_lambda_.49} parent=5 // pred_check_branch
      %232 = sbr.rel (%p230) target = $region32
    $region31: #{_lambda_.49} parent=5 // pred_region
      // Predicated region
      $region33: #{_lambda_.49} parent=31 // pred_check
        %p233 = pneg %p34
      $region34: #{_lambda_.49} parent=31 // pred_check_branch
        %235 = sbr.rel (%p233) target = $region36
      $region35: #{_lambda_.49} parent=31 // pred_region
        %p236 = scmp.lt.s32.totalorder %s14, 1
        %s237 = scalar_select %p236, %s14, 1
        %s238 = smul.addr %s237, 8
        %s239 = scalar_lea.vmem %s0, %s238
      $region36: #{_lambda_.49} parent=31 // pred_fallthru
        _
      // Predicated region
      $region37: #{_lambda_.49} parent=31 // pred_check
        %p240 = pneg %p60
      $region38: #{_lambda_.49} parent=31 // pred_check_branch
        %242 = sbr.rel (%p240) target = $region40
      $region39: #{_lambda_.49} parent=31 // pred_region
        %p243 = scmp.lt.s32.totalorder %s14, 1
        %s244 = scalar_select %p243, %s14, 1
        %s245 = smul.addr %s244, 8
        %s246 = scalar_lea.vmem %s1, %s245
      $region40: #{_lambda_.49} parent=31 // pred_fallthru
        _
    $region32: #{_lambda_.49} parent=5 // pred_fallthru
      _
    %p247 = scmp.le.s32.totalorder 1, %s14
    %p248 = scmp.lt.s32.totalorder %s14, 3
    %p249 = pnand %p247, %p248
    %p250 = pneg %p249
    // Predicated region
    $region41: #{_lambda_.49} parent=5 // pred_check
      _
    $region42: #{_lambda_.49} parent=5 // pred_check_branch
      %252 = sbr.rel (%p249) target = $region44
    $region43: #{_lambda_.49} parent=5 // pred_region
      %s253 = ssub.s32 %s14, 1
      %p254 = scmp.lt.s32.totalorder %s19, 1
      %s255 = scalar_select %p254, %s19, 1
      %s256 = smul.addr %s255, 8
      %s257 = scalar_lea.vmem %s0, %s256
      %p258 = pneg %p40
      %p259 = pneg %p37
      %p260 = scmp.lt.s32.totalorder %s19, 1
      %s261 = scalar_select %p260, %s19, 1
      %s262 = smul.addr %s261, 8
      %s263 = scalar_lea.vmem %s1, %s262
      %p264 = pneg %p66
      %p265 = pneg %p63
      %p266 = pneg %p87
      %p267 = pneg %p84
      %p268 = pneg %p108
      %p269 = pneg %p105
      %p270 = pneg %p129
      %p271 = pneg %p126
      %p272 = pneg %p150
      %p273 = pneg %p147
      %p274 = pneg %p176
      %p275 = pneg %p173
      %p276 = scmp.lt.s32.totalorder %s19, 1
      %s277 = scalar_select %p276, %s19, 1
      %s278 = smul.addr %s277, 8
      %s279 = scalar_lea.vmem %s6, %s278
      %p280 = pneg %p202
      %p281 = pneg %p199
      %p282 = scmp.lt.s32.totalorder %s19, 1
      %s283 = scalar_select %p282, %s19, 1
      %s284 = smul.addr %s283, 8
      %s285 = scalar_lea.vmem %s7, %s284
      %p286 = scmp.lt.s32.totalorder %s19, 1
      %s287 = scalar_select %p286, %s19, 1
      %s288 = smul.addr %s287, 8
      %s289 = scalar_lea.vmem %s0, %s288
      %p290 = scmp.lt.s32.totalorder %s19, 1
      %s291 = scalar_select %p290, %s19, 1
      %s292 = smul.addr %s291, 8
      %s293 = scalar_lea.vmem %s1, %s292
      %p294 = scmp.lt.s32.totalorder %s19, 1
      %s295 = scalar_select %p294, %s19, 1
      %s296 = smul.addr %s295, 8
      %s297 = scalar_lea.vmem %s6, %s296
      %p298 = scmp.lt.s32.totalorder %s19, 1
      %s299 = scalar_select %p298, %s19, 1
      %s300 = smul.addr %s299, 8
      %s301 = scalar_lea.vmem %s7, %s300
      %v303 = vld [vmem:[%s289] sm:$0xff]
      %v304 = vld [vmem:[%s293] sm:$0xff]
      %v305 = vadd.f32 %v303, %v304
      %v306 = vld [vmem:[%s2] sm:$0x1]
      %v307 = vld [vmem:[%s3] sm:$0x1]
      %v308 = vld [vmem:[%s5] sm:$0x1]
      %vm309 = vcmask 261120
      %310 = vst.msk [vmem:[%s297] sm:$0xff] %vm309, %v305
      %v311 = vsel %vm309, %v305, 0.0
      %312 = vadd.xlane.f32.xlu0 %v311
      %v313 = vpop.xlane.xlu0 %312
      %v314 = vrcp.pop 32.0
      %v315 = vmul.f32 %v313, %v314
      %v316 = vsub.f32 %v305, %v315
      %v317 = vmul.f32 %v316, %v316
      %v318 = vsel %vm309, %v317, 0.0
      %319 = vadd.xlane.f32.xlu0 %v318
      %v320 = vpop.xlane.xlu0 %319
      %v321 = vmul.f32 %v320, 0.032258064
      %v322 = vrsqrt.pop %v321
      %v323 = vmul.f32 %v321, %v322
      %vm324 = vcmp.eq.f32.partialorder %v321, inf
      %v325 = vsel %vm324, %v321, %v323
      %vm326 = vcmp.eq.f32.partialorder %v321, 0.0
      %v327 = vand.u32 %v321, 2147483648
      %v328 = vsel %vm326, %v327, %v325
      %v329 = vadd.f32 %v328, 1e-06
      %v330 = vrcp.pop %v329
      %v332 = vlaneseq
      %v333 = vshrl.u32 %v332, 7
      %v334 = vsub.s32 0, %v333
      %v335 = vrot.slane %v306, %v334
      %v337 = vmul.f32 %v335, %v330
      %v338 = vmul.f32 %v316, %v337
      %v340 = vlaneseq
      %v341 = vshrl.u32 %v340, 7
      %v342 = vsub.s32 0, %v341
      %v343 = vrot.slane %v307, %v342
      %v345 = vadd.f32 %v338, %v343
      %v346 = vpack.c.bf16 %v345, %v345
      %v347 = vld [vmem:[%s4] sm:$0xff]
      %v348 = vld [vmem:[%s4 + $0x8] sm:$0xff]
      %v349 = vld [vmem:[%s4 + $0x10] sm:$0xff]
      %v350 = vld [vmem:[%s4 + $0x18] sm:$0xff]
      %v351 = vpack.c.bf16 %v348, %v347
      %v352 = vpack.c.bf16 %v350, %v349
      %v354 = vlaneseq
      %v355 = vshrl.u32 %v354, 7
      %v356 = vsub.s32 0, %v355
      %v357 = vrot.slane %v308, %v356
      %v360 = vsel %vm309, %v346, 0
      %362 = vmatprep.subr.bf16.mxu0 0
      %363 = vmatpush1.bf16.msra.mxu0 0
      %364 = vmatprep.subr.bf16.mxu0 0
      %365 = vmatpush1.bf16.msra.mxu0 0
      %366 = vmatprep.subr.bf16.mxu0 0
      %367 = vmatpush1.bf16.msra.mxu0 0
      %368 = vmatprep.subr.bf16.mxu0 0
      %369 = vmatpush1.bf16.msra.mxu0 0
      %370 = vmatprep.subr.bf16.mxu0 0
      %371 = vmatpush1.bf16.msra.mxu0 0
      %372 = vmatprep.subr.bf16.mxu0 0
      %373 = vmatpush1.bf16.msra.mxu0 0
      %374 = vmatprep.subr.bf16.mxu0 0
      %375 = vmatpush1.bf16.msra.mxu0 %v352
      %376 = vmatprep.subr.bf16.mxu0 0
      %377 = vmatpush1.bf16.msra.mxu0 %v351
      %378 = vmatprep.subr.bf16.mxu0 0
      %379 = vmatpush2.bf16.msra.mxu0 0
      %380 = vmatprep.subr.bf16.mxu0 0
      %381 = vmatpush2.bf16.msra.mxu0 0
      %382 = vmatprep.subr.bf16.mxu0 0
      %383 = vmatpush2.bf16.msra.mxu0 0
      %384 = vmatprep.subr.bf16.mxu0 0
      %385 = vmatpush2.bf16.msra.mxu0 0
      %386 = vmatprep.subr.bf16.mxu0 0
      %387 = vmatpush2.bf16.msra.mxu0 0
      %388 = vmatprep.subr.bf16.mxu0 0
      %389 = vmatpush2.bf16.msra.mxu0 0
      %390 = vmatprep.subr.bf16.mxu0 0
      %391 = vmatpush2.bf16.msra.mxu0 0
      %392 = vmatprep.subr.bf16.mxu0 0
      %393 = vmatpush2.bf16.msra.mxu0 0
      %394 = vmatprep.mubr.bf16.mxu0 0
      %395 = vmatmul.mubr.bf16.gmra.mxu0 %v360
      %v396 = vpop.f32.mrf.mxu0
      %v397 = vadd.f32 %v357, %v396
      %v398 = vpop.f32.mrf.mxu0
      %v399 = vpop.f32.mrf.mxu0
      %v400 = vpop.f32.mrf.mxu0
      %401 = vdwg.mxu0
      %402 = vst.msk [vmem:[%s301] sm:$0xff] %vm309, %v397
      %p403 = scmp.lt.s32.totalorder %s19, 1
      %s404 = scalar_select %p403, %s19, 1
      %s405 = smul.addr %s404, 8
      %s406 = scalar_lea.vmem %s6, %s405
      %p407 = scmp.lt.s32.totalorder %s19, 1
      %s408 = scalar_select %p407, %s19, 1
      %s409 = smul.addr %s408, 8
      %s410 = scalar_lea.vmem %s7, %s409
      // Predicated region
      $region45: #{_lambda_.49} parent=43 // pred_check
        %p411 = pneg %p173
      $region46: #{_lambda_.49} parent=43 // pred_check_branch
        %413 = sbr.rel (%p411) target = $region48
      $region47: #{_lambda_.49} parent=43 // pred_region
        _
      $region48: #{_lambda_.49} parent=43 // pred_fallthru
        _
      // Predicated region
      $region49: #{_lambda_.49} parent=43 // pred_check
        %p414 = pneg %p199
      $region50: #{_lambda_.49} parent=43 // pred_check_branch
        %416 = sbr.rel (%p414) target = $region52
      $region51: #{_lambda_.49} parent=43 // pred_region
        _
      $region52: #{_lambda_.49} parent=43 // pred_fallthru
        _
    $region44: #{_lambda_.49} parent=5 // pred_fallthru
      _
    %p417 = scmp.le.s32.totalorder 2, %s14
    // Predicated region
    $region53: #{_lambda_.49} parent=5 // pred_check
      %p418 = pneg %p417
    $region54: #{_lambda_.49} parent=5 // pred_check_branch
      %420 = sbr.rel (%p418) target = $region56
    $region55: #{_lambda_.49} parent=5 // pred_region
      %s421 = ssub.s32 %s14, 2
      // Predicated region
      $region57: #{_lambda_.49} parent=55 // pred_check
        %p422 = pneg %p179
      $region58: #{_lambda_.49} parent=55 // pred_check_branch
        %424 = sbr.rel (%p422) target = $region60
      $region59: #{_lambda_.49} parent=55 // pred_region
        %p425 = scmp.lt.s32.totalorder %s20, 1
        %s426 = scalar_select %p425, %s20, 1
        %s427 = smul.addr %s426, 8
        %s428 = scalar_lea.vmem %s6, %s427
      $region60: #{_lambda_.49} parent=55 // pred_fallthru
        _
      // Predicated region
      $region61: #{_lambda_.49} parent=55 // pred_check
        %p429 = pneg %p205
      $region62: #{_lambda_.49} parent=55 // pred_check_branch
        %431 = sbr.rel (%p429) target = $region64
      $region63: #{_lambda_.49} parent=55 // pred_region
        %p432 = scmp.lt.s32.totalorder %s20, 1
        %s433 = scalar_select %p432, %s20, 1
        %s434 = smul.addr %s433, 8
        %s435 = scalar_lea.vmem %s7, %s434
      $region64: #{_lambda_.49} parent=55 // pred_fallthru
        _
    $region56: #{_lambda_.49} parent=5 // pred_fallthru
      _
  $region6: #{_lambda_.49} parent=0 // loop_footer
    %s18 = sadd.s32 1, %s14
  $region7: #{_lambda_.49} parent=0 // loop_footer_branch
    %13 = sbr.rel target = $region3
  $region8: #{_lambda_.49} parent=0 // loop_exit
    _

// kernel: _lambda_.59
$region0: #{_lambda_.59}
  #allocation0 [shape = 'u32[]', space=smem, size = 0x4, offset = 0x4, fixed_abs, tag = 'smem constant byte address 0x4 - core index']
  #allocation1 [shape = 'u32[144,128]{1,0:T(1,128)}', space=vmem, size = 0x12000, scoped, tag = 'internal scratch']
  %s0 = inlined_call_operand.vmem [shape: f32[2,8,32], index: 0, kind: input, shape index: {}]
  %s1 = inlined_call_operand.vmem [shape: f32[2,8,32], index: 1, kind: input, shape index: {}]
  %s2 = inlined_call_operand.vmem [shape: f32[1,32], index: 2, kind: input, shape index: {}]
  %s3 = inlined_call_operand.vmem [shape: f32[1,32], index: 3, kind: input, shape index: {}]
  %s4 = inlined_call_operand.hbm [shape: f32[2,8,32], index: 4, kind: output, shape index: {}]
  %s5 = sld [smem:[#allocation0]]
  $region49: #{_lambda_.59} parent=0
    _
  %s7 = ssub.s32 1, %s5
  %s8 = scalar_select 0, %s7, %s5
  $region1: #{_lambda_.59} parent=0
    #allocation2 [shape = 'u8[8192]{0}', space=vmem, size = 0x2000, scoped, tag = 'output window, operand 0']
    #allocation3 [shape = 's32[2]{0}', space=sflag, size = 0x8, scoped, tag = 'scoped memory for _lambda_.59']
    %9 = vsyncpa [#allocation3], 0
    %s10 = scalar_lea.sflag [#allocation3], 1
    %11 = vsyncpa %s10, 0
    loop: start=0, step=1, limit=4
    $region2: #{_lambda_.59} parent=1 // loop_pre_header
      _
    $region3: #{_lambda_.59} parent=1 // loop_header
      %s13 = sphi 0, %s17
      %p14 = scmp.ge.s32.totalorder %s13, 4
      %s23 = sphi 0, %s25
      %s26 = sphi 0, %s23
      %s27 = sphi 0, %s26
      %s43 = sphi 0, %s27
      %s49 = sphi 0, %s51
      %s52 = sphi 0, %s49
      %s53 = sphi 0, %s52
      %s69 = sphi 0, %s53
      %s73 = sphi 0, %s73
      %s75 = sphi 0, %s73
      %s76 = sphi 0, %s75
      %s90 = sphi 0, %s76
      %s94 = sphi 0, %s94
      %s96 = sphi 0, %s94
      %s97 = sphi 0, %s96
      %s111 = sphi 0, %s97
      %s117 = sphi 0, %s119
      %s120 = sphi 0, %s117
      %s121 = sphi 0, %s120
      %s137 = sphi 0, %s121
    $region4: #{_lambda_.59} parent=1 // loop_header_branch
      %16 = sbr.rel (%p14) target = $region8
    $region5: #{_lambda_.59} parent=1 // loop_body
      %s18 = ssub.s32 %s13, 1
      %s19 = ssub.s32 %s13, 2
      %s20 = sadd.s32 %s13, 1
      %s21 = ssub.s32 %s13, %s20
      %p22 = scmp.eq.s32.totalorder %s21, 0
      %s24 = sadd.s32 %s23, 1
      %s25 = scalar_select %p22, %s23, %s24
      %p28 = pneg %p22
      %p29 = scmp.eq.s32.totalorder %s13, 1
      %p30 = por %p28, %p29
      %p31 = scmp.ne.s32.totalorder %s23, %s26
      %p32 = scmp.eq.s32.totalorder %s13, 0
      %p33 = por %p31, %p32
      %p34 = scmp.ne.s32.totalorder %s23, %s26
      %p35 = scmp.eq.s32.totalorder %s18, 1
      %p36 = por %p34, %p35
      %p37 = scmp.ne.s32.totalorder %s26, %s27
      %p38 = scmp.eq.s32.totalorder %s18, 0
      %p39 = por %p37, %p38
      %p40 = scmp.ne.s32.totalorder %s26, %s27
      %p41 = scmp.eq.s32.totalorder %s19, 1
      %p42 = por %p40, %p41
      %p44 = scmp.ne.s32.totalorder %s27, %s43
      %p45 = scmp.eq.s32.totalorder %s19, 0
      %p46 = por %p44, %p45
      %s47 = ssub.s32 %s13, %s20
      %p48 = scmp.eq.s32.totalorder %s47, 0
      %s50 = sadd.s32 %s49, 1
      %s51 = scalar_select %p48, %s49, %s50
      %p54 = pneg %p48
      %p55 = scmp.eq.s32.totalorder %s13, 1
      %p56 = por %p54, %p55
      %p57 = scmp.ne.s32.totalorder %s49, %s52
      %p58 = scmp.eq.s32.totalorder %s13, 0
      %p59 = por %p57, %p58
      %p60 = scmp.ne.s32.totalorder %s49, %s52
      %p61 = scmp.eq.s32.totalorder %s18, 1
      %p62 = por %p60, %p61
      %p63 = scmp.ne.s32.totalorder %s52, %s53
      %p64 = scmp.eq.s32.totalorder %s18, 0
      %p65 = por %p63, %p64
      %p66 = scmp.ne.s32.totalorder %s52, %s53
      %p67 = scmp.eq.s32.totalorder %s19, 1
      %p68 = por %p66, %p67
      %p70 = scmp.ne.s32.totalorder %s53, %s69
      %p71 = scmp.eq.s32.totalorder %s19, 0
      %p72 = por %p70, %p71
      %s74 = sadd.s32 %s73, 1
      %p77 = scmp.eq.s32.totalorder %s13, 1
      %p78 = scmp.ne.s32.totalorder %s73, %s75
      %p79 = scmp.eq.s32.totalorder %s13, 0
      %p80 = por %p78, %p79
      %p81 = scmp.ne.s32.totalorder %s73, %s75
      %p82 = scmp.eq.s32.totalorder %s18, 1
      %p83 = por %p81, %p82
      %p84 = scmp.ne.s32.totalorder %s75, %s76
      %p85 = scmp.eq.s32.totalorder %s18, 0
      %p86 = por %p84, %p85
      %p87 = scmp.ne.s32.totalorder %s75, %s76
      %p88 = scmp.eq.s32.totalorder %s19, 1
      %p89 = por %p87, %p88
      %p91 = scmp.ne.s32.totalorder %s76, %s90
      %p92 = scmp.eq.s32.totalorder %s19, 0
      %p93 = por %p91, %p92
      %s95 = sadd.s32 %s94, 1
      %p98 = scmp.eq.s32.totalorder %s13, 1
      %p99 = scmp.ne.s32.totalorder %s94, %s96
      %p100 = scmp.eq.s32.totalorder %s13, 0
      %p101 = por %p99, %p100
      %p102 = scmp.ne.s32.totalorder %s94, %s96
      %p103 = scmp.eq.s32.totalorder %s18, 1
      %p104 = por %p102, %p103
      %p105 = scmp.ne.s32.totalorder %s96, %s97
      %p106 = scmp.eq.s32.totalorder %s18, 0
      %p107 = por %p105, %p106
      %p108 = scmp.ne.s32.totalorder %s96, %s97
      %p109 = scmp.eq.s32.totalorder %s19, 1
      %p110 = por %p108, %p109
      %p112 = scmp.ne.s32.totalorder %s97, %s111
      %p113 = scmp.eq.s32.totalorder %s19, 0
      %p114 = por %p112, %p113
      %s115 = ssub.s32 %s13, %s20
      %p116 = scmp.eq.s32.totalorder %s115, 0
      %s118 = sadd.s32 %s117, 1
      %s119 = scalar_select %p116, %s117, %s118
      %p122 = pneg %p116
      %p123 = scmp.eq.s32.totalorder %s13, 1
      %p124 = por %p122, %p123
      %p125 = scmp.ne.s32.totalorder %s117, %s120
      %p126 = scmp.eq.s32.totalorder %s13, 0
      %p127 = por %p125, %p126
      %p128 = scmp.ne.s32.totalorder %s117, %s120
      %p129 = scmp.eq.s32.totalorder %s18, 1
      %p130 = por %p128, %p129
      %p131 = scmp.ne.s32.totalorder %s120, %s121
      %p132 = scmp.eq.s32.totalorder %s18, 0
      %p133 = por %p131, %p132
      %p134 = scmp.ne.s32.totalorder %s120, %s121
      %p135 = scmp.eq.s32.totalorder %s19, 1
      %p136 = por %p134, %p135
      %p138 = scmp.ne.s32.totalorder %s121, %s137
      %p139 = scmp.eq.s32.totalorder %s19, 0
      %p140 = por %p138, %p139
      %p141 = scmp.le.s32.totalorder 1, %s13
      %p142 = scmp.lt.s32.totalorder %s13, 3
      %p143 = pnand %p141, %p142
      %p144 = pneg %p143
      // Predicated region
      $region9: #{_lambda_.59} parent=5 // pred_check
        _
      $region10: #{_lambda_.59} parent=5 // pred_check_branch
        %146 = sbr.rel (%p143) target = $region12
      $region11: #{_lambda_.59} parent=5 // pred_region
        %s147 = ssub.s32 %s13, 1
        // Predicated region
        $region13: #{_lambda_.59} parent=11 // pred_check
          %p148 = pneg %p86
        $region14: #{_lambda_.59} parent=11 // pred_check_branch
          %150 = sbr.rel (%p148) target = $region16
        $region15: #{_lambda_.59} parent=11 // pred_region
          _
        $region16: #{_lambda_.59} parent=11 // pred_fallthru
          _
        // Predicated region
        $region17: #{_lambda_.59} parent=11 // pred_check
          %p151 = pneg %p107
        $region18: #{_lambda_.59} parent=11 // pred_check_branch
          %153 = sbr.rel (%p151) target = $region20
        $region19: #{_lambda_.59} parent=11 // pred_region
          _
        $region20: #{_lambda_.59} parent=11 // pred_fallthru
          _
      $region12: #{_lambda_.59} parent=5 // pred_fallthru
        _
      %p154 = scmp.lt.s32.totalorder %s13, 2
      // Predicated region
      $region21: #{_lambda_.59} parent=5 // pred_check
        %p155 = pneg %p154
      $region22: #{_lambda_.59} parent=5 // pred_check_branch
        %157 = sbr.rel (%p155) target = $region24
      $region23: #{_lambda_.59} parent=5 // pred_region
        // Predicated region
        $region25: #{_lambda_.59} parent=23 // pred_check
          %p158 = pneg %p33
        $region26: #{_lambda_.59} parent=23 // pred_check_branch
          %160 = sbr.rel (%p158) target = $region28
        $region27: #{_lambda_.59} parent=23 // pred_region
          %p161 = scmp.lt.s32.totalorder %s13, 1
          %s162 = scalar_select %p161, %s13, 1
          %s163 = smul.addr %s162, 8
          %s164 = scalar_lea.vmem %s0, %s163
        $region28: #{_lambda_.59} parent=23 // pred_fallthru
          _
        // Predicated region
        $region29: #{_lambda_.59} parent=23 // pred_check
          %p165 = pneg %p59
        $region30: #{_lambda_.59} parent=23 // pred_check_branch
          %167 = sbr.rel (%p165) target = $region32
        $region31: #{_lambda_.59} parent=23 // pred_region
          %p168 = scmp.lt.s32.totalorder %s13, 1
          %s169 = scalar_select %p168, %s13, 1
          %s170 = smul.addr %s169, 8
          %s171 = scalar_lea.vmem %s1, %s170
        $region32: #{_lambda_.59} parent=23 // pred_fallthru
          _
      $region24: #{_lambda_.59} parent=5 // pred_fallthru
        _
      %p172 = scmp.le.s32.totalorder 1, %s13
      %p173 = scmp.lt.s32.totalorder %s13, 3
      %p174 = pnand %p172, %p173
      %p175 = pneg %p174
      // Predicated region
      $region33: #{_lambda_.59} parent=5 // pred_check
        _
      $region34: #{_lambda_.59} parent=5 // pred_check_branch
        %177 = sbr.rel (%p174) target = $region36
      $region35: #{_lambda_.59} parent=5 // pred_region
        %s178 = ssub.s32 %s13, 1
        %p179 = scmp.lt.s32.totalorder %s18, 1
        %s180 = scalar_select %p179, %s18, 1
        %s181 = smul.addr %s180, 8
        %s182 = scalar_lea.vmem %s0, %s181
        %p183 = pneg %p39
        %p184 = pneg %p36
        %p185 = scmp.lt.s32.totalorder %s18, 1
        %s186 = scalar_select %p185, %s18, 1
        %s187 = smul.addr %s186, 8
        %s188 = scalar_lea.vmem %s1, %s187
        %p189 = pneg %p65
        %p190 = pneg %p62
        %p191 = pneg %p86
        %p192 = pneg %p83
        %p193 = pneg %p107
        %p194 = pneg %p104
        %p195 = pneg %p133
        %p196 = pneg %p130
        %s197 = sand.u32 %s120, 1
        %s198 = scalar_lea.sflag [#allocation3], %s197
        %s199 = sand.u32 %s120, 1
        %s200 = smul.addr %s199, 8
        %s201 = scalar_lea.vmem [#allocation2], %s200
        %p202 = scmp.lt.s32.totalorder %s18, 1
        %s203 = scalar_select %p202, %s18, 1
        %s204 = smul.addr %s203, 8
        %s205 = scalar_lea.vmem %s0, %s204
        %p206 = scmp.lt.s32.totalorder %s18, 1
        %s207 = scalar_select %p206, %s18, 1
        %s208 = smul.addr %s207, 8
        %s209 = scalar_lea.vmem %s1, %s208
        %v210 = vld [vmem:[%s205] sm:$0xff]
        %v211 = vld [vmem:[%s209] sm:$0xff]
        %v212 = vadd.f32 %v210, %v211
        %v213 = vld [vmem:[%s2] sm:$0x1]
        %v214 = vld [vmem:[%s3] sm:$0x1]
        %vm215 = vcmask 261120
        %v216 = vsel %vm215, %v212, 0.0
        %217 = vadd.xlane.f32.xlu0 %v216
        %v218 = vpop.xlane.xlu0 %217
        %v219 = vrcp.pop 32.0
        %v220 = vmul.f32 %v218, %v219
        %v221 = vsub.f32 %v212, %v220
        %v222 = vmul.f32 %v221, %v221
        %v223 = vsel %vm215, %v222, 0.0
        %224 = vadd.xlane.f32.xlu0 %v223
        %v225 = vpop.xlane.xlu0 %224
        %v226 = vmul.f32 %v225, 0.032258064
        %v227 = vrsqrt.pop %v226
        %v228 = vmul.f32 %v226, %v227
        %vm229 = vcmp.eq.f32.partialorder %v226, inf
        %v230 = vsel %vm229, %v226, %v228
        %vm231 = vcmp.eq.f32.partialorder %v226, 0.0
        %v232 = vand.u32 %v226, 2147483648
        %v233 = vsel %vm231, %v232, %v230
        %v234 = vadd.f32 %v233, 1e-06
        %v235 = vrcp.pop %v234
        %v237 = vlaneseq
        %v238 = vshrl.u32 %v237, 7
        %v239 = vsub.s32 0, %v238
        %v240 = vrot.slane %v213, %v239
        %v242 = vmul.f32 %v240, %v235
        %v243 = vmul.f32 %v221, %v242
        %v245 = vlaneseq
        %v246 = vshrl.u32 %v245, 7
        %v247 = vsub.s32 0, %v246
        %v248 = vrot.slane %v214, %v247
        %v250 = vadd.f32 %v243, %v248
        %251 = vst.msk [vmem:[%s201] sm:$0xff] %vm215, %v250
        %s252 = sand.u32 %s120, 1
        %s253 = scalar_lea.sflag [#allocation3], %s252
        %s254 = sand.u32 %s120, 1
        %s255 = smul.addr %s254, 8
        %s256 = scalar_lea.vmem [#allocation2], %s255
        // Predicated region
        $region37: #{_lambda_.59} parent=35 // pred_check
          %p257 = pneg %p130
        $region38: #{_lambda_.59} parent=35 // pred_check_branch
          %259 = sbr.rel (%p257) target = $region40
        $region39: #{_lambda_.59} parent=35 // pred_region
          %s261 = ssub.s32 128, 128
          %262 = vsyncadd %s253, %s261
          %s263 = smul.addr %s18, 128
          %s264 = scalar_lea.hbm %s4, %s263
          %s266 = sshll.u32 %s256, 4
          %s267 = int_to_ptr.vmem [resolvable:$true] %s266
          %269 = dma.vmem_to_hbm [thread:$0]  %s267, 128, %s264, %s253
        $region40: #{_lambda_.59} parent=35 // pred_fallthru
          _
      $region36: #{_lambda_.59} parent=5 // pred_fallthru
        _
      %p270 = scmp.le.s32.totalorder 2, %s13
      // Predicated region
      $region41: #{_lambda_.59} parent=5 // pred_check
        %p271 = pneg %p270
      $region42: #{_lambda_.59} parent=5 // pred_check_branch
        %273 = sbr.rel (%p271) target = $region44
      $region43: #{_lambda_.59} parent=5 // pred_region
        %s274 = ssub.s32 %s13, 2
        // Predicated region
        $region45: #{_lambda_.59} parent=43 // pred_check
          %p275 = pneg %p136
        $region46: #{_lambda_.59} parent=43 // pred_check_branch
          %277 = sbr.rel (%p275) target = $region48
        $region47: #{_lambda_.59} parent=43 // pred_region
          %s278 = sand.u32 %s121, 1
          %s279 = scalar_lea.sflag [#allocation3], %s278
          %s280 = sand.u32 %s121, 1
          %s281 = smul.addr %s280, 8
          %s282 = scalar_lea.vmem [#allocation2], %s281
          %283 = dma.done %s279, 128
        $region48: #{_lambda_.59} parent=43 // pred_fallthru
          _
      $region44: #{_lambda_.59} parent=5 // pred_fallthru
        _
    $region6: #{_lambda_.59} parent=1 // loop_footer
      %s17 = sadd.s32 1, %s13
    $region7: #{_lambda_.59} parent=1 // loop_footer_branch
      %12 = sbr.rel target = $region3
    $region8: #{_lambda_.59} parent=1 // loop_exit
      _
    %284 = vsyncpa [#allocation3], 1
    %s285 = scalar_lea.sflag [#allocation3], 1
    %286 = vsyncpa %s285, 1

</llo_original>
